<compile_context>
chip_gen: v5e
topology: v5e:2x2
jax: 0.10.0
libtpu: 0.0.40
codegen_flags: <defaults>
</compile_context>

<pallas_src>
import jax
import jax.numpy as jnp
from jax.experimental import pallas as pl
from jax.experimental.pallas import tpu as pltpu

LAYER_NORM_EPS = 1e-5


def _layernorm(x, gamma, beta):
    # x: (N, D) f32. var = E[x^2] - E[x]^2 -> both lane reductions from one pass.
    mu = jnp.mean(x, axis=-1, keepdims=True)
    ms = jnp.mean(x * x, axis=-1, keepdims=True)
    var = jnp.maximum(ms - mu * mu, 0.0)
    return (x - mu) * jax.lax.rsqrt(var + LAYER_NORM_EPS) * gamma + beta


def _gelu(x):
    # TODO(synk): tanh-approx GELU; PyTorch nn.GELU defaults to the exact erf form.
    return 0.5 * x * (1.0 + jnp.tanh(0.7978845608028654 * (x + 0.044715 * x * x * x)))


def _make_kernel(pre_ln: bool, post_ln: bool, Bt: int, T: int, D: int, F: int,
                 H: int, ew_dtype):
    def kernel(x_ref, mask_ref,
               mw1_ref, mb1_ref, mw2_ref, mb2_ref,      # mixer token-mixing params
               g1_ref, be1_ref,                         # norm1
               fw1t_ref, fb1_ref, fw2t_ref, fb2_ref,    # FFN params (pre-transposed, bf16)
               g2_ref, be2_ref,                         # norm2
               o_ref):
        # Flattened (Bt*T, D) f32 view for LayerNorm / FFN / residuals.
        x2 = x_ref[...].reshape(Bt * T, D).astype(jnp.float32)
        g1, be1 = g1_ref[...], be1_ref[...]   # (1, D)
        g2, be2 = g2_ref[...], be2_ref[...]   # (1, D)

        # ------------- attention (MIXER token mixing, batched MXU) -------------
        residual = x2
        t2 = _layernorm(x2, g1, be1) if pre_ln else x2
        t3 = t2.astype(jnp.bfloat16).reshape(Bt, T, D)                 # (Bt, T, D)

        # ONE batched contraction per mixer matmul (no Python row loop).
        w1b = jnp.broadcast_to(mw1_ref[...][None, :, :], (Bt, H, T))   # bf16
        h = jnp.einsum('bht,btd->bhd', w1b, t3,
                       preferred_element_type=jnp.float32)             # (Bt, H, D) f32
        h = _gelu((h + mb1_ref[...]).astype(ew_dtype)).astype(jnp.bfloat16)

        w2b = jnp.broadcast_to(mw2_ref[...][None, :, :], (Bt, T, H))   # bf16
        mixed = jnp.einsum('bth,bhd->btd', w2b, h,
                           preferred_element_type=jnp.float32) + mb2_ref[...]  # (Bt,T,D)

        t2 = residual + mixed.reshape(Bt * T, D)        # dropout(p=0) == identity
        if post_ln:
            t2 = _layernorm(t2, g1, be1)

        # ------------- feed-forward (flattened, bf16 MXU, f32 acc) -------------
        residual = t2
        f_in = _layernorm(t2, g2, be2) if pre_ln else t2
        hf = jnp.dot(f_in.astype(jnp.bfloat16), fw1t_ref[...],
                     preferred_element_type=jnp.float32) + fb1_ref[...]   # (Bt*T, F)
        hf = jnp.maximum(hf.astype(ew_dtype), 0.0).astype(jnp.bfloat16)   # activation='relu'
        f = jnp.dot(hf, fw2t_ref[...],
                    preferred_element_type=jnp.float32) + fb2_ref[...]    # (Bt*T, D)
        t2 = residual + f                                # dropout(p=0) == identity
        if post_ln:
            t2 = _layernorm(t2, g2, be2)

        # ------------- mask out padded positions & store ------------------------
        t2 = t2 * mask_ref[...].reshape(Bt * T, 1)
        o_ref[...] = t2.reshape(Bt, T, D).astype(o_ref.dtype)

    return kernel


def _vmem_capacity_bytes():
    try:
        return int(pltpu.get_tpu_info().vmem_capacity_bytes)
    except Exception:
        return 64 * 1024 * 1024   # conservative default (v7x per-core VMEM)


def _elementwise_dtype():
    # v6e / v7x have native bf16 VPU/EUP; v5e and older do not.
    try:
        kind = jax.devices()[0].device_kind.lower()
    except Exception:
        return jnp.float32
    if any(v in kind for v in ("v2", "v3", "v4", "v5")):
        return jnp.float32
    return jnp.bfloat16


def _vmem_estimate(Bt, T, D, F, H, w_bytes):
    # Double-buffered I/O blocks + single-buffered weights + live f32/bf16 activations.
    io = 2 * Bt * T * D * 4 + Bt * T * 4
    acts = (4 * Bt * T * D * 4          # x2 / residual / t2 / mixed f32 slabs
            + Bt * T * D * 2            # bf16 activation copy
            + Bt * H * D * 6            # mixer hidden f32 + bf16
            + Bt * T * F * 6            # FFN hidden f32 + bf16
            + 2 * Bt * H * T * 2)       # broadcast bf16 mixer weights
    return 2 * io + w_bytes + acts + (2 << 20)


def _pick_bt(B, T, D, F, H, w_bytes, vmem_budget, max_bt=None):
    # Largest divisor of B that fits the VMEM budget; keep grid length >= 2 when
    # B >= 2 so both v7x TensorCores get work (dimension_semantics=("parallel",)).
    cap = B if B < 2 else max(1, B // 2)
    if max_bt is not None:
        cap = max(1, min(cap, int(max_bt)))
    for bt in range(cap, 0, -1):
        if B % bt == 0 and _vmem_estimate(bt, T, D, F, H, w_bytes) <= vmem_budget:
            return bt
    return 1


def mixer_encoder_layer(tensor, mask, params, variant=None, batch_block=None):
    """
    tensor: (B, T, D) float32, mask: (B, T) bool/float.
    params: dict of weights (see init_params). batch_block: optional cap on rows/step.
    """
    B, T, D = tensor.shape
    F = params["ffn_w1"].shape[0]
    H = params["mix_w1"].shape[0]

    pre_ln = variant == "prelayernorm"
    post_ln = variant in ("aiayn", "xlm", "bart")

    # Mask in the layout the final multiply needs (sublane per token, 1 lane).
    mask3 = mask.astype(jnp.float32).reshape(B, T, 1)

    # bf16 weights feed the MXU; biases / LayerNorm params stay f32.
    mw1 = params["mix_w1"].astype(jnp.bfloat16)                 # (H, T)
    mb1 = params["mix_b1"].reshape(1, H, 1).astype(jnp.float32)
    mw2 = params["mix_w2"].astype(jnp.bfloat16)                 # (T, H)
    mb2 = params["mix_b2"].reshape(1, T, 1).astype(jnp.float32)
    g1 = params["ln1_g"].reshape(1, D).astype(jnp.float32)
    be1 = params["ln1_b"].reshape(1, D).astype(jnp.float32)
    fw1t = params["ffn_w1"].T.astype(jnp.bfloat16)              # (D, F)
    fb1 = params["ffn_b1"].reshape(1, F).astype(jnp.float32)
    fw2t = params["ffn_w2"].T.astype(jnp.bfloat16)              # (F, D)
    fb2 = params["ffn_b2"].reshape(1, D).astype(jnp.float32)
    g2 = params["ln2_g"].reshape(1, D).astype(jnp.float32)
    be2 = params["ln2_b"].reshape(1, D).astype(jnp.float32)

    weights = (mw1, mb1, mw2, mb2, g1, be1, fw1t, fb1, fw2t, fb2, g2, be2)
    w_bytes = sum(int(w.size) * w.dtype.itemsize for w in weights)

    # Generation-aware VMEM budget: ~80% of physical (leaves compiler scratch).
    vmem_cap = _vmem_capacity_bytes()
    vmem_budget = max(min(int(vmem_cap * 0.80), vmem_cap - (8 << 20)), 16 << 20)

    Bt = _pick_bt(B, T, D, F, H, w_bytes, vmem_budget, batch_block)
    ew_dtype = _elementwise_dtype()

    kernel = _make_kernel(pre_ln, post_ln, Bt, T, D, F, H, ew_dtype)

    def build_call(single_buffer_weights):
        def w_spec(arr):
            zeros = (0,) * arr.ndim
            if single_buffer_weights:
                return pl.BlockSpec(arr.shape, lambda b, _z=zeros: _z,
                                    pipeline_mode=pl.Buffered(1))
            return pl.BlockSpec(arr.shape, lambda b, _z=zeros: _z)

        return pl.pallas_call(
            kernel,
            out_shape=jax.ShapeDtypeStruct((B, T, D), tensor.dtype),
            grid=(B // Bt,),
            in_specs=[
                pl.BlockSpec((Bt, T, D), lambda b: (b, 0, 0)),   # tensor block
                pl.BlockSpec((Bt, T, 1), lambda b: (b, 0, 0)),   # mask block
                *[w_spec(w) for w in weights],
            ],
            out_specs=pl.BlockSpec((Bt, T, D), lambda b: (b, 0, 0)),
            compiler_params=pltpu.CompilerParams(
                dimension_semantics=("parallel",),
                vmem_limit_bytes=int(vmem_budget)),
        )

    try:
        out = build_call(True)(tensor, mask3, *weights)
        jax.block_until_ready(out)
        return out
    except Exception:
        # TODO(synk): pl.Buffered(1) unsupported on this build -> default buffering.
        return build_call(False)(tensor, mask3, *weights)


def init_params(key, seq_len, emb, ffn):
    """Deterministic synthetic parameters (shapes implied by the module __init__)."""
    ks = jax.random.split(key, 8)
    s = 0.05
    return {
        # MIXER token-mixing MLP: Linear(seq_len -> emb), Linear(emb -> seq_len)
        "mix_w1": s * jax.random.normal(ks[0], (emb, seq_len), jnp.float32),
        "mix_b1": s * jax.random.normal(ks[1], (emb,), jnp.float32),
        "mix_w2": s * jax.random.normal(ks[2], (seq_len, emb), jnp.float32),
        "mix_b2": s * jax.random.normal(ks[3], (seq_len,), jnp.float32),
        # norm1 / norm2 (LayerNorm(emb))
        "ln1_g": jnp.ones((emb,), jnp.float32),
        "ln1_b": jnp.zeros((emb,), jnp.float32),
        "ln2_g": jnp.ones((emb,), jnp.float32),
        "ln2_b": jnp.zeros((emb,), jnp.float32),
        # TransformerFFN: Linear(emb -> ffn), relu, Linear(ffn -> emb)
        "ffn_w1": s * jax.random.normal(ks[4], (ffn, emb), jnp.float32),
        "ffn_b1": s * jax.random.normal(ks[5], (ffn,), jnp.float32),
        "ffn_w2": s * jax.random.normal(ks[6], (emb, ffn), jnp.float32),
        "ffn_b2": s * jax.random.normal(ks[7], (emb,), jnp.float32),
    }


def reference_forward(tensor, mask, params, variant=None):
    """Pure-JAX f32 reference with identical math (tanh-GELU, end-only masking)."""
    pre_ln = variant == "prelayernorm"
    post_ln = variant in ("aiayn", "xlm", "bart")

    def ln(x, g, b):
        mu = jnp.mean(x, -1, keepdims=True)
        var = jnp.mean((x - mu) ** 2, -1, keepdims=True)
        return (x - mu) * jax.lax.rsqrt(var + LAYER_NORM_EPS) * g + b

    x = tensor
    residual = x
    t = ln(x, params["ln1_g"], params["ln1_b"]) if pre_ln else x
    h = jnp.einsum('ht,btd->bhd', params["mix_w1"], t) + params["mix_b1"][None, :, None]
    h = _gelu(h)
    att = jnp.einsum('th,bhd->btd', params["mix_w2"], h) + params["mix_b2"][None, :, None]
    t = residual + att
    if post_ln:
        t = ln(t, params["ln1_g"], params["ln1_b"])
    residual = t
    f_in = ln(t, params["ln2_g"], params["ln2_b"]) if pre_ln else t
    hf = jnp.maximum(f_in @ params["ffn_w1"].T + params["ffn_b1"], 0.0)
    f = hf @ params["ffn_w2"].T + params["ffn_b2"]
    t = residual + f
    if post_ln:
        t = ln(t, params["ln2_g"], params["ln2_b"])
    return t * mask[..., None].astype(t.dtype)


if __name__ == "__main__":
    # Small but lane-dense demo shapes: D, F multiples of 128; T multiple of 8.
    B, T, D, F = 4, 16, 128, 256   # batch, seq_len, embedding_size, ffn_size

    key = jax.random.PRNGKey(0)
    k_x, k_p = jax.random.split(key)

    tensor = jax.random.normal(k_x, (B, T, D), jnp.float32)
    # mask: per-row valid lengths (True = keep token)
    lengths = jnp.array([[T], [T - 4], [T - 8], [T]])
    mask = jnp.arange(T)[None, :] < lengths
    params = init_params(k_p, T, D, F)

    out = mixer_encoder_layer(tensor, mask, params, variant="aiayn")
    jax.block_until_ready(out)

    assert out.shape == (B, T, D) and out.dtype == jnp.float32

    ref = reference_forward(tensor, mask, params, variant="aiayn")
    err = float(jnp.max(jnp.abs(out - ref)))
    assert err < 5e-2, f"max abs error vs reference: {err}"

    print("KERNEL_OK")
</pallas_src>

<mosaic_0001>
module attributes {stable_mosaic.version = 11 : i64} {
  func.func @kernel(%arg0: i32, %arg1: memref<2x16x128xf32, #tpu.memory_space<vmem>>, %arg2: memref<2x16x1xf32, #tpu.memory_space<vmem>>, %arg3: memref<128x16xbf16, #tpu.memory_space<vmem>>, %arg4: memref<1x128x1xf32, #tpu.memory_space<vmem>>, %arg5: memref<16x128xbf16, #tpu.memory_space<vmem>>, %arg6: memref<1x16x1xf32, #tpu.memory_space<vmem>>, %arg7: memref<1x128xf32, #tpu.memory_space<vmem>>, %arg8: memref<1x128xf32, #tpu.memory_space<vmem>>, %arg9: memref<128x256xbf16, #tpu.memory_space<vmem>>, %arg10: memref<1x256xf32, #tpu.memory_space<vmem>>, %arg11: memref<256x128xbf16, #tpu.memory_space<vmem>>, %arg12: memref<1x128xf32, #tpu.memory_space<vmem>>, %arg13: memref<1x128xf32, #tpu.memory_space<vmem>>, %arg14: memref<1x128xf32, #tpu.memory_space<vmem>>, %arg15: memref<2x16x128xf32, #tpu.memory_space<vmem>>) attributes {dimension_semantics = [#tpu.dimension_semantics<parallel>], iteration_bounds = array<i64: 2>, scalar_prefetch = 0 : i64, scratch_operands = 0 : i64, tpu.core_type = #tpu.core_type<tc>, window_params = [{transform_indices = @transform_0, window_bounds = array<i64: 2, 16, 128>}, {transform_indices = @transform_1, window_bounds = array<i64: 2, 16, 1>}, {pipeline_mode = #tpu.pipeline_mode<synchronous>, transform_indices = @transform_2, window_bounds = array<i64: 128, 16>}, {pipeline_mode = #tpu.pipeline_mode<synchronous>, transform_indices = @transform_3, window_bounds = array<i64: 1, 128, 1>}, {pipeline_mode = #tpu.pipeline_mode<synchronous>, transform_indices = @transform_4, window_bounds = array<i64: 16, 128>}, {pipeline_mode = #tpu.pipeline_mode<synchronous>, transform_indices = @transform_5, window_bounds = array<i64: 1, 16, 1>}, {pipeline_mode = #tpu.pipeline_mode<synchronous>, transform_indices = @transform_6, window_bounds = array<i64: 1, 128>}, {pipeline_mode = #tpu.pipeline_mode<synchronous>, transform_indices = @transform_7, window_bounds = array<i64: 1, 128>}, {pipeline_mode = #tpu.pipeline_mode<synchronous>, transform_indices = @transform_8, window_bounds = array<i64: 128, 256>}, {pipeline_mode = #tpu.pipeline_mode<synchronous>, transform_indices = @transform_9, window_bounds = array<i64: 1, 256>}, {pipeline_mode = #tpu.pipeline_mode<synchronous>, transform_indices = @transform_10, window_bounds = array<i64: 256, 128>}, {pipeline_mode = #tpu.pipeline_mode<synchronous>, transform_indices = @transform_11, window_bounds = array<i64: 1, 128>}, {pipeline_mode = #tpu.pipeline_mode<synchronous>, transform_indices = @transform_12, window_bounds = array<i64: 1, 128>}, {pipeline_mode = #tpu.pipeline_mode<synchronous>, transform_indices = @transform_13, window_bounds = array<i64: 1, 128>}, {transform_indices = @transform_14, window_bounds = array<i64: 2, 16, 128>}]} {
    %c0 = arith.constant 0 : index
    %c0_0 = arith.constant 0 : index
    %c0_1 = arith.constant 0 : index
    %0 = vector.load %arg1[%c0, %c0_0, %c0_1] : memref<2x16x128xf32, #tpu.memory_space<vmem>>, vector<2x16x128xf32>
    %1 = vector.shape_cast %0 : vector<2x16x128xf32> to vector<32x128xf32>
    %c0_2 = arith.constant 0 : index
    %c0_3 = arith.constant 0 : index
    %2 = vector.load %arg7[%c0_2, %c0_3] : memref<1x128xf32, #tpu.memory_space<vmem>>, vector<1x128xf32>
    %c0_4 = arith.constant 0 : index
    %c0_5 = arith.constant 0 : index
    %3 = vector.load %arg8[%c0_4, %c0_5] : memref<1x128xf32, #tpu.memory_space<vmem>>, vector<1x128xf32>
    %c0_6 = arith.constant 0 : index
    %c0_7 = arith.constant 0 : index
    %4 = vector.load %arg13[%c0_6, %c0_7] : memref<1x128xf32, #tpu.memory_space<vmem>>, vector<1x128xf32>
    %c0_8 = arith.constant 0 : index
    %c0_9 = arith.constant 0 : index
    %5 = vector.load %arg14[%c0_8, %c0_9] : memref<1x128xf32, #tpu.memory_space<vmem>>, vector<1x128xf32>
    %6 = arith.truncf %1 : vector<32x128xf32> to vector<32x128xbf16>
    %7 = vector.shape_cast %6 : vector<32x128xbf16> to vector<2x16x128xbf16>
    %c0_10 = arith.constant 0 : index
    %c0_11 = arith.constant 0 : index
    %8 = vector.load %arg3[%c0_10, %c0_11] : memref<128x16xbf16, #tpu.memory_space<vmem>>, vector<128x16xbf16>
    %9 = vector.shape_cast %8 : vector<128x16xbf16> to vector<1x128x16xbf16>
    %10 = vector.shape_cast %9 : vector<1x128x16xbf16> to vector<1x128x16xbf16>
    %11 = vector.broadcast %10 : vector<1x128x16xbf16> to vector<2x128x16xbf16>
    "tpu.trace_start"() <{level = 10 : i32, message = "bht,btd->bhd"}> : () -> ()
    %cst = arith.constant dense<0.000000e+00> : vector<2x128x128xf32>
    %12 = tpu.matmul %11, %7, %cst {dimension_numbers = #tpu.dot_dimension_numbers<[2], [1], [1], [2], [0, 0, 0, 1, 1, 2], [0], [0]>} : vector<2x128x16xbf16>, vector<2x16x128xbf16>, vector<2x128x128xf32> -> vector<2x128x128xf32>
    "tpu.trace_stop"() : () -> ()
    %c0_12 = arith.constant 0 : index
    %c0_13 = arith.constant 0 : index
    %c0_14 = arith.constant 0 : index
    %13 = vector.load %arg4[%c0_12, %c0_13, %c0_14] : memref<1x128x1xf32, #tpu.memory_space<vmem>>, vector<1x128x1xf32>
    %14 = vector.broadcast %13 : vector<1x128x1xf32> to vector<2x128x128xf32>
    %15 = arith.addf %12, %14 : vector<2x128x128xf32>
    %16 = arith.truncf %15 : vector<2x128x128xf32> to vector<2x128x128xbf16>
    %cst_15 = arith.constant 5.000000e-01 : bf16
    %17 = vector.broadcast %cst_15 : bf16 to vector<2x128x128xbf16>
    %18 = arith.mulf %17, %16 : vector<2x128x128xbf16>
    %cst_16 = arith.constant 4.467770e-02 : bf16
    %19 = vector.broadcast %cst_16 : bf16 to vector<2x128x128xbf16>
    %20 = arith.mulf %19, %16 : vector<2x128x128xbf16>
    %21 = arith.mulf %20, %16 : vector<2x128x128xbf16>
    %22 = arith.mulf %21, %16 : vector<2x128x128xbf16>
    %23 = arith.addf %16, %22 : vector<2x128x128xbf16>
    %cst_17 = arith.constant 7.968750e-01 : bf16
    %24 = vector.broadcast %cst_17 : bf16 to vector<2x128x128xbf16>
    %25 = arith.mulf %24, %23 : vector<2x128x128xbf16>
    %26 = math.tanh %25 : vector<2x128x128xbf16>
    %cst_18 = arith.constant 1.000000e+00 : bf16
    %27 = vector.broadcast %cst_18 : bf16 to vector<2x128x128xbf16>
    %28 = arith.addf %27, %26 : vector<2x128x128xbf16>
    %29 = arith.mulf %18, %28 : vector<2x128x128xbf16>
    %c0_19 = arith.constant 0 : index
    %c0_20 = arith.constant 0 : index
    %30 = vector.load %arg5[%c0_19, %c0_20] : memref<16x128xbf16, #tpu.memory_space<vmem>>, vector<16x128xbf16>
    %31 = vector.shape_cast %30 : vector<16x128xbf16> to vector<1x16x128xbf16>
    %32 = vector.shape_cast %31 : vector<1x16x128xbf16> to vector<1x16x128xbf16>
    %33 = vector.broadcast %32 : vector<1x16x128xbf16> to vector<2x16x128xbf16>
    "tpu.trace_start"() <{level = 10 : i32, message = "bth,bhd->btd"}> : () -> ()
    %cst_21 = arith.constant dense<0.000000e+00> : vector<2x16x128xf32>
    %34 = tpu.matmul %33, %29, %cst_21 {dimension_numbers = #tpu.dot_dimension_numbers<[2], [1], [1], [2], [0, 0, 0, 1, 1, 2], [0], [0]>} : vector<2x16x128xbf16>, vector<2x128x128xbf16>, vector<2x16x128xf32> -> vector<2x16x128xf32>
    "tpu.trace_stop"() : () -> ()
    %c0_22 = arith.constant 0 : index
    %c0_23 = arith.constant 0 : index
    %c0_24 = arith.constant 0 : index
    %35 = vector.load %arg6[%c0_22, %c0_23, %c0_24] : memref<1x16x1xf32, #tpu.memory_space<vmem>>, vector<1x16x1xf32>
    %36 = vector.broadcast %35 : vector<1x16x1xf32> to vector<2x16x128xf32>
    %37 = arith.addf %34, %36 : vector<2x16x128xf32>
    %38 = vector.shape_cast %37 : vector<2x16x128xf32> to vector<32x128xf32>
    %39 = arith.addf %1, %38 : vector<32x128xf32>
    %cst_25 = arith.constant dense<0.000000e+00> : vector<32xf32>
    %40 = vector.multi_reduction <add>, %39, %cst_25 [1] : vector<32x128xf32> to vector<32xf32>
    %41 = vector.shape_cast %40 : vector<32xf32> to vector<32x1xf32>
    %cst_26 = arith.constant 1.280000e+02 : f32
    %42 = vector.broadcast %cst_26 : f32 to vector<32x1xf32>
    %43 = arith.divf %41, %42 : vector<32x1xf32>
    %44 = arith.mulf %39, %39 : vector<32x128xf32>
    %cst_27 = arith.constant dense<0.000000e+00> : vector<32xf32>
    %45 = vector.multi_reduction <add>, %44, %cst_27 [1] : vector<32x128xf32> to vector<32xf32>
    %46 = vector.shape_cast %45 : vector<32xf32> to vector<32x1xf32>
    %cst_28 = arith.constant 1.280000e+02 : f32
    %47 = vector.broadcast %cst_28 : f32 to vector<32x1xf32>
    %48 = arith.divf %46, %47 : vector<32x1xf32>
    %49 = arith.mulf %43, %43 : vector<32x1xf32>
    %50 = arith.subf %48, %49 : vector<32x1xf32>
    %cst_29 = arith.constant 0.000000e+00 : f32
    %51 = vector.broadcast %cst_29 : f32 to vector<32x1xf32>
    %52 = arith.maximumf %50, %51 : vector<32x1xf32>
    %53 = vector.broadcast %43 : vector<32x1xf32> to vector<32x128xf32>
    %54 = arith.subf %39, %53 : vector<32x128xf32>
    %cst_30 = arith.constant 9.99999974E-6 : f32
    %55 = vector.broadcast %cst_30 : f32 to vector<32x1xf32>
    %56 = arith.addf %52, %55 : vector<32x1xf32>
    %57 = math.rsqrt %56 : vector<32x1xf32>
    %58 = vector.broadcast %57 : vector<32x1xf32> to vector<32x128xf32>
    %59 = arith.mulf %54, %58 : vector<32x128xf32>
    %60 = vector.broadcast %2 : vector<1x128xf32> to vector<32x128xf32>
    %61 = arith.mulf %59, %60 : vector<32x128xf32>
    %62 = vector.broadcast %3 : vector<1x128xf32> to vector<32x128xf32>
    %63 = arith.addf %61, %62 : vector<32x128xf32>
    %64 = arith.truncf %63 : vector<32x128xf32> to vector<32x128xbf16>
    %c0_31 = arith.constant 0 : index
    %c0_32 = arith.constant 0 : index
    %65 = vector.load %arg9[%c0_31, %c0_32] : memref<128x256xbf16, #tpu.memory_space<vmem>>, vector<128x256xbf16>
    %cst_33 = arith.constant dense<0.000000e+00> : vector<32x256xf32>
    %66 = tpu.matmul %64, %65, %cst_33 {dimension_numbers = #tpu.dot_dimension_numbers<[1], [0], [0], [1], [0, 0, 1, 1], [], []>} : vector<32x128xbf16>, vector<128x256xbf16>, vector<32x256xf32> -> vector<32x256xf32>
    %c0_34 = arith.constant 0 : index
    %c0_35 = arith.constant 0 : index
    %67 = vector.load %arg10[%c0_34, %c0_35] : memref<1x256xf32, #tpu.memory_space<vmem>>, vector<1x256xf32>
    %68 = vector.broadcast %67 : vector<1x256xf32> to vector<32x256xf32>
    %69 = arith.addf %66, %68 : vector<32x256xf32>
    %70 = arith.truncf %69 : vector<32x256xf32> to vector<32x256xbf16>
    %cst_36 = arith.constant 0.000000e+00 : bf16
    %71 = vector.broadcast %cst_36 : bf16 to vector<32x256xbf16>
    %72 = arith.maximumf %70, %71 : vector<32x256xbf16>
    %c0_37 = arith.constant 0 : index
    %c0_38 = arith.constant 0 : index
    %73 = vector.load %arg11[%c0_37, %c0_38] : memref<256x128xbf16, #tpu.memory_space<vmem>>, vector<256x128xbf16>
    %cst_39 = arith.constant dense<0.000000e+00> : vector<32x128xf32>
    %74 = tpu.matmul %72, %73, %cst_39 {dimension_numbers = #tpu.dot_dimension_numbers<[1], [0], [0], [1], [0, 0, 1, 1], [], []>} : vector<32x256xbf16>, vector<256x128xbf16>, vector<32x128xf32> -> vector<32x128xf32>
    %c0_40 = arith.constant 0 : index
    %c0_41 = arith.constant 0 : index
    %75 = vector.load %arg12[%c0_40, %c0_41] : memref<1x128xf32, #tpu.memory_space<vmem>>, vector<1x128xf32>
    %76 = vector.broadcast %75 : vector<1x128xf32> to vector<32x128xf32>
    %77 = arith.addf %74, %76 : vector<32x128xf32>
    %78 = arith.addf %63, %77 : vector<32x128xf32>
    %cst_42 = arith.constant dense<0.000000e+00> : vector<32xf32>
    %79 = vector.multi_reduction <add>, %78, %cst_42 [1] : vector<32x128xf32> to vector<32xf32>
    %80 = vector.shape_cast %79 : vector<32xf32> to vector<32x1xf32>
    %cst_43 = arith.constant 1.280000e+02 : f32
    %81 = vector.broadcast %cst_43 : f32 to vector<32x1xf32>
    %82 = arith.divf %80, %81 : vector<32x1xf32>
    %83 = arith.mulf %78, %78 : vector<32x128xf32>
    %cst_44 = arith.constant dense<0.000000e+00> : vector<32xf32>
    %84 = vector.multi_reduction <add>, %83, %cst_44 [1] : vector<32x128xf32> to vector<32xf32>
    %85 = vector.shape_cast %84 : vector<32xf32> to vector<32x1xf32>
    %cst_45 = arith.constant 1.280000e+02 : f32
    %86 = vector.broadcast %cst_45 : f32 to vector<32x1xf32>
    %87 = arith.divf %85, %86 : vector<32x1xf32>
    %88 = arith.mulf %82, %82 : vector<32x1xf32>
    %89 = arith.subf %87, %88 : vector<32x1xf32>
    %cst_46 = arith.constant 0.000000e+00 : f32
    %90 = vector.broadcast %cst_46 : f32 to vector<32x1xf32>
    %91 = arith.maximumf %89, %90 : vector<32x1xf32>
    %92 = vector.broadcast %82 : vector<32x1xf32> to vector<32x128xf32>
    %93 = arith.subf %78, %92 : vector<32x128xf32>
    %cst_47 = arith.constant 9.99999974E-6 : f32
    %94 = vector.broadcast %cst_47 : f32 to vector<32x1xf32>
    %95 = arith.addf %91, %94 : vector<32x1xf32>
    %96 = math.rsqrt %95 : vector<32x1xf32>
    %97 = vector.broadcast %96 : vector<32x1xf32> to vector<32x128xf32>
    %98 = arith.mulf %93, %97 : vector<32x128xf32>
    %99 = vector.broadcast %4 : vector<1x128xf32> to vector<32x128xf32>
    %100 = arith.mulf %98, %99 : vector<32x128xf32>
    %101 = vector.broadcast %5 : vector<1x128xf32> to vector<32x128xf32>
    %102 = arith.addf %100, %101 : vector<32x128xf32>
    %c0_48 = arith.constant 0 : index
    %c0_49 = arith.constant 0 : index
    %c0_50 = arith.constant 0 : index
    %103 = vector.load %arg2[%c0_48, %c0_49, %c0_50] : memref<2x16x1xf32, #tpu.memory_space<vmem>>, vector<2x16x1xf32>
    %104 = vector.shape_cast %103 : vector<2x16x1xf32> to vector<32x1xf32>
    %105 = vector.broadcast %104 : vector<32x1xf32> to vector<32x128xf32>
    %106 = arith.mulf %102, %105 : vector<32x128xf32>
    %107 = vector.shape_cast %106 : vector<32x128xf32> to vector<2x16x128xf32>
    %c0_51 = arith.constant 0 : index
    %c0_52 = arith.constant 0 : index
    %c0_53 = arith.constant 0 : index
    %108 = vector.load %arg15[%c0_51, %c0_52, %c0_53] : memref<2x16x128xf32, #tpu.memory_space<vmem>>, vector<2x16x128xf32>
    tpu.vector_store %arg15[%c0_51, %c0_52, %c0_53], %107 {strides = array<i32>} : memref<2x16x128xf32, #tpu.memory_space<vmem>>, vector<2x16x128xf32>,
    return
  }
  func.func @transform_0(%arg0: i32) -> (i32, i32, i32) {
    %c0_i32 = arith.constant 0 : i32
    %c0_i32_0 = arith.constant 0 : i32
    %c0_i32_1 = arith.constant 0 : i32
    return %arg0, %c0_i32, %c0_i32_0 : i32, i32, i32
  }
  func.func @transform_1(%arg0: i32) -> (i32, i32, i32) {
    %c0_i32 = arith.constant 0 : i32
    %c0_i32_0 = arith.constant 0 : i32
    %c0_i32_1 = arith.constant 0 : i32
    return %arg0, %c0_i32, %c0_i32_0 : i32, i32, i32
  }
  func.func @transform_2(%arg0: i32) -> (i32, i32) {
    %c0_i32 = arith.constant 0 : i32
    %c0_i32_0 = arith.constant 0 : i32
    %c0_i32_1 = arith.constant 0 : i32
    return %c0_i32, %c0_i32_0 : i32, i32
  }
  func.func @transform_3(%arg0: i32) -> (i32, i32, i32) {
    %c0_i32 = arith.constant 0 : i32
    %c0_i32_0 = arith.constant 0 : i32
    %c0_i32_1 = arith.constant 0 : i32
    %c0_i32_2 = arith.constant 0 : i32
    return %c0_i32, %c0_i32_0, %c0_i32_1 : i32, i32, i32
  }
  func.func @transform_4(%arg0: i32) -> (i32, i32) {
    %c0_i32 = arith.constant 0 : i32
    %c0_i32_0 = arith.constant 0 : i32
    %c0_i32_1 = arith.constant 0 : i32
    return %c0_i32, %c0_i32_0 : i32, i32
  }
  func.func @transform_5(%arg0: i32) -> (i32, i32, i32) {
    %c0_i32 = arith.constant 0 : i32
    %c0_i32_0 = arith.constant 0 : i32
    %c0_i32_1 = arith.constant 0 : i32
    %c0_i32_2 = arith.constant 0 : i32
    return %c0_i32, %c0_i32_0, %c0_i32_1 : i32, i32, i32
  }
  func.func @transform_6(%arg0: i32) -> (i32, i32) {
    %c0_i32 = arith.constant 0 : i32
    %c0_i32_0 = arith.constant 0 : i32
    %c0_i32_1 = arith.constant 0 : i32
    return %c0_i32, %c0_i32_0 : i32, i32
  }
  func.func @transform_7(%arg0: i32) -> (i32, i32) {
    %c0_i32 = arith.constant 0 : i32
    %c0_i32_0 = arith.constant 0 : i32
    %c0_i32_1 = arith.constant 0 : i32
    return %c0_i32, %c0_i32_0 : i32, i32
  }
  func.func @transform_8(%arg0: i32) -> (i32, i32) {
    %c0_i32 = arith.constant 0 : i32
    %c0_i32_0 = arith.constant 0 : i32
    %c0_i32_1 = arith.constant 0 : i32
    return %c0_i32, %c0_i32_0 : i32, i32
  }
  func.func @transform_9(%arg0: i32) -> (i32, i32) {
    %c0_i32 = arith.constant 0 : i32
    %c0_i32_0 = arith.constant 0 : i32
    %c0_i32_1 = arith.constant 0 : i32
    return %c0_i32, %c0_i32_0 : i32, i32
  }
  func.func @transform_10(%arg0: i32) -> (i32, i32) {
    %c0_i32 = arith.constant 0 : i32
    %c0_i32_0 = arith.constant 0 : i32
    %c0_i32_1 = arith.constant 0 : i32
    return %c0_i32, %c0_i32_0 : i32, i32
  }
  func.func @transform_11(%arg0: i32) -> (i32, i32) {
    %c0_i32 = arith.constant 0 : i32
    %c0_i32_0 = arith.constant 0 : i32
    %c0_i32_1 = arith.constant 0 : i32
    return %c0_i32, %c0_i32_0 : i32, i32
  }
  func.func @transform_12(%arg0: i32) -> (i32, i32) {
    %c0_i32 = arith.constant 0 : i32
    %c0_i32_0 = arith.constant 0 : i32
    %c0_i32_1 = arith.constant 0 : i32
    return %c0_i32, %c0_i32_0 : i32, i32
  }
  func.func @transform_13(%arg0: i32) -> (i32, i32) {
    %c0_i32 = arith.constant 0 : i32
    %c0_i32_0 = arith.constant 0 : i32
    %c0_i32_1 = arith.constant 0 : i32
    return %c0_i32, %c0_i32_0 : i32, i32
  }
  func.func @transform_14(%arg0: i32) -> (i32, i32, i32) {
    %c0_i32 = arith.constant 0 : i32
    %c0_i32_0 = arith.constant 0 : i32
    %c0_i32_1 = arith.constant 0 : i32
    return %arg0, %c0_i32, %c0_i32_0 : i32, i32, i32
  }
}

module attributes {stable_mosaic.version = 11 : i64} {
  func.func @kernel(%arg0: i32, %arg1: memref<2x16x128xf32, #tpu.memory_space<vmem>>, %arg2: memref<2x16x1xf32, #tpu.memory_space<vmem>>, %arg3: memref<128x16xbf16, #tpu.memory_space<vmem>>, %arg4: memref<1x128x1xf32, #tpu.memory_space<vmem>>, %arg5: memref<16x128xbf16, #tpu.memory_space<vmem>>, %arg6: memref<1x16x1xf32, #tpu.memory_space<vmem>>, %arg7: memref<1x128xf32, #tpu.memory_space<vmem>>, %arg8: memref<1x128xf32, #tpu.memory_space<vmem>>, %arg9: memref<128x256xbf16, #tpu.memory_space<vmem>>, %arg10: memref<1x256xf32, #tpu.memory_space<vmem>>, %arg11: memref<256x128xbf16, #tpu.memory_space<vmem>>, %arg12: memref<1x128xf32, #tpu.memory_space<vmem>>, %arg13: memref<1x128xf32, #tpu.memory_space<vmem>>, %arg14: memref<1x128xf32, #tpu.memory_space<vmem>>, %arg15: memref<2x16x128xf32, #tpu.memory_space<vmem>>) attributes {dimension_semantics = [#tpu.dimension_semantics<parallel>], iteration_bounds = array<i64: 2>, scalar_prefetch = 0 : i64, scratch_operands = 0 : i64, tpu.core_type = #tpu.core_type<tc>, window_params = [{transform_indices = @transform_0, window_bounds = array<i64: 2, 16, 128>}, {transform_indices = @transform_1, window_bounds = array<i64: 2, 16, 1>}, {pipeline_mode = #tpu.pipeline_mode<synchronous>, transform_indices = @transform_2, window_bounds = array<i64: 128, 16>}, {pipeline_mode = #tpu.pipeline_mode<synchronous>, transform_indices = @transform_3, window_bounds = array<i64: 1, 128, 1>}, {pipeline_mode = #tpu.pipeline_mode<synchronous>, transform_indices = @transform_4, window_bounds = array<i64: 16, 128>}, {pipeline_mode = #tpu.pipeline_mode<synchronous>, transform_indices = @transform_5, window_bounds = array<i64: 1, 16, 1>}, {pipeline_mode = #tpu.pipeline_mode<synchronous>, transform_indices = @transform_6, window_bounds = array<i64: 1, 128>}, {pipeline_mode = #tpu.pipeline_mode<synchronous>, transform_indices = @transform_7, window_bounds = array<i64: 1, 128>}, {pipeline_mode = #tpu.pipeline_mode<synchronous>, transform_indices = @transform_8, window_bounds = array<i64: 128, 256>}, {pipeline_mode = #tpu.pipeline_mode<synchronous>, transform_indices = @transform_9, window_bounds = array<i64: 1, 256>}, {pipeline_mode = #tpu.pipeline_mode<synchronous>, transform_indices = @transform_10, window_bounds = array<i64: 256, 128>}, {pipeline_mode = #tpu.pipeline_mode<synchronous>, transform_indices = @transform_11, window_bounds = array<i64: 1, 128>}, {pipeline_mode = #tpu.pipeline_mode<synchronous>, transform_indices = @transform_12, window_bounds = array<i64: 1, 128>}, {pipeline_mode = #tpu.pipeline_mode<synchronous>, transform_indices = @transform_13, window_bounds = array<i64: 1, 128>}, {transform_indices = @transform_14, window_bounds = array<i64: 2, 16, 128>}]} {
    %c0 = arith.constant 0 : index
    %c0_0 = arith.constant 0 : index
    %c0_1 = arith.constant 0 : index
    %0 = vector.load %arg1[%c0, %c0_0, %c0_1] : memref<2x16x128xf32, #tpu.memory_space<vmem>>, vector<2x16x128xf32>
    %1 = vector.shape_cast %0 : vector<2x16x128xf32> to vector<32x128xf32>
    %c0_2 = arith.constant 0 : index
    %c0_3 = arith.constant 0 : index
    %2 = vector.load %arg7[%c0_2, %c0_3] : memref<1x128xf32, #tpu.memory_space<vmem>>, vector<1x128xf32>
    %c0_4 = arith.constant 0 : index
    %c0_5 = arith.constant 0 : index
    %3 = vector.load %arg8[%c0_4, %c0_5] : memref<1x128xf32, #tpu.memory_space<vmem>>, vector<1x128xf32>
    %c0_6 = arith.constant 0 : index
    %c0_7 = arith.constant 0 : index
    %4 = vector.load %arg13[%c0_6, %c0_7] : memref<1x128xf32, #tpu.memory_space<vmem>>, vector<1x128xf32>
    %c0_8 = arith.constant 0 : index
    %c0_9 = arith.constant 0 : index
    %5 = vector.load %arg14[%c0_8, %c0_9] : memref<1x128xf32, #tpu.memory_space<vmem>>, vector<1x128xf32>
    %6 = arith.truncf %1 : vector<32x128xf32> to vector<32x128xbf16>
    %7 = vector.shape_cast %6 : vector<32x128xbf16> to vector<2x16x128xbf16>
    %c0_10 = arith.constant 0 : index
    %c0_11 = arith.constant 0 : index
    %8 = vector.load %arg3[%c0_10, %c0_11] : memref<128x16xbf16, #tpu.memory_space<vmem>>, vector<128x16xbf16>
    %9 = vector.shape_cast %8 : vector<128x16xbf16> to vector<1x128x16xbf16>
    %10 = vector.shape_cast %9 : vector<1x128x16xbf16> to vector<1x128x16xbf16>
    %11 = vector.broadcast %10 : vector<1x128x16xbf16> to vector<2x128x16xbf16>
    "tpu.trace_start"() <{level = 10 : i32, message = "bht,btd->bhd"}> : () -> ()
    %cst = arith.constant dense<0.000000e+00> : vector<2x128x128xf32>
    %12 = tpu.matmul %11, %7, %cst {dimension_numbers = #tpu.dot_dimension_numbers<[2], [1], [1], [2], [0, 0, 0, 1, 1, 2], [0], [0]>} : vector<2x128x16xbf16>, vector<2x16x128xbf16>, vector<2x128x128xf32> -> vector<2x128x128xf32>
    "tpu.trace_stop"() : () -> ()
    %c0_12 = arith.constant 0 : index
    %c0_13 = arith.constant 0 : index
    %c0_14 = arith.constant 0 : index
    %13 = vector.load %arg4[%c0_12, %c0_13, %c0_14] : memref<1x128x1xf32, #tpu.memory_space<vmem>>, vector<1x128x1xf32>
    %14 = vector.broadcast %13 : vector<1x128x1xf32> to vector<2x128x128xf32>
    %15 = arith.addf %12, %14 : vector<2x128x128xf32>
    %16 = arith.truncf %15 : vector<2x128x128xf32> to vector<2x128x128xbf16>
    %cst_15 = arith.constant 5.000000e-01 : bf16
    %17 = vector.broadcast %cst_15 : bf16 to vector<2x128x128xbf16>
    %18 = arith.mulf %17, %16 : vector<2x128x128xbf16>
    %cst_16 = arith.constant 4.467770e-02 : bf16
    %19 = vector.broadcast %cst_16 : bf16 to vector<2x128x128xbf16>
    %20 = arith.mulf %19, %16 : vector<2x128x128xbf16>
    %21 = arith.mulf %20, %16 : vector<2x128x128xbf16>
    %22 = arith.mulf %21, %16 : vector<2x128x128xbf16>
    %23 = arith.addf %16, %22 : vector<2x128x128xbf16>
    %cst_17 = arith.constant 7.968750e-01 : bf16
    %24 = vector.broadcast %cst_17 : bf16 to vector<2x128x128xbf16>
    %25 = arith.mulf %24, %23 : vector<2x128x128xbf16>
    %26 = math.tanh %25 : vector<2x128x128xbf16>
    %cst_18 = arith.constant 1.000000e+00 : bf16
    %27 = vector.broadcast %cst_18 : bf16 to vector<2x128x128xbf16>
    %28 = arith.addf %27, %26 : vector<2x128x128xbf16>
    %29 = arith.mulf %18, %28 : vector<2x128x128xbf16>
    %c0_19 = arith.constant 0 : index
    %c0_20 = arith.constant 0 : index
    %30 = vector.load %arg5[%c0_19, %c0_20] : memref<16x128xbf16, #tpu.memory_space<vmem>>, vector<16x128xbf16>
    %31 = vector.shape_cast %30 : vector<16x128xbf16> to vector<1x16x128xbf16>
    %32 = vector.shape_cast %31 : vector<1x16x128xbf16> to vector<1x16x128xbf16>
    %33 = vector.broadcast %32 : vector<1x16x128xbf16> to vector<2x16x128xbf16>
    "tpu.trace_start"() <{level = 10 : i32, message = "bth,bhd->btd"}> : () -> ()
    %cst_21 = arith.constant dense<0.000000e+00> : vector<2x16x128xf32>
    %34 = tpu.matmul %33, %29, %cst_21 {dimension_numbers = #tpu.dot_dimension_numbers<[2], [1], [1], [2], [0, 0, 0, 1, 1, 2], [0], [0]>} : vector<2x16x128xbf16>, vector<2x128x128xbf16>, vector<2x16x128xf32> -> vector<2x16x128xf32>
    "tpu.trace_stop"() : () -> ()
    %c0_22 = arith.constant 0 : index
    %c0_23 = arith.constant 0 : index
    %c0_24 = arith.constant 0 : index
    %35 = vector.load %arg6[%c0_22, %c0_23, %c0_24] : memref<1x16x1xf32, #tpu.memory_space<vmem>>, vector<1x16x1xf32>
    %36 = vector.broadcast %35 : vector<1x16x1xf32> to vector<2x16x128xf32>
    %37 = arith.addf %34, %36 : vector<2x16x128xf32>
    %38 = vector.shape_cast %37 : vector<2x16x128xf32> to vector<32x128xf32>
    %39 = arith.addf %1, %38 : vector<32x128xf32>
    %cst_25 = arith.constant dense<0.000000e+00> : vector<32xf32>
    %40 = vector.multi_reduction <add>, %39, %cst_25 [1] : vector<32x128xf32> to vector<32xf32>
    %41 = vector.shape_cast %40 : vector<32xf32> to vector<32x1xf32>
    %cst_26 = arith.constant 1.280000e+02 : f32
    %42 = vector.broadcast %cst_26 : f32 to vector<32x1xf32>
    %43 = arith.divf %41, %42 : vector<32x1xf32>
    %44 = arith.mulf %39, %39 : vector<32x128xf32>
    %cst_27 = arith.constant dense<0.000000e+00> : vector<32xf32>
    %45 = vector.multi_reduction <add>, %44, %cst_27 [1] : vector<32x128xf32> to vector<32xf32>
    %46 = vector.shape_cast %45 : vector<32xf32> to vector<32x1xf32>
    %cst_28 = arith.constant 1.280000e+02 : f32
    %47 = vector.broadcast %cst_28 : f32 to vector<32x1xf32>
    %48 = arith.divf %46, %47 : vector<32x1xf32>
    %49 = arith.mulf %43, %43 : vector<32x1xf32>
    %50 = arith.subf %48, %49 : vector<32x1xf32>
    %cst_29 = arith.constant 0.000000e+00 : f32
    %51 = vector.broadcast %cst_29 : f32 to vector<32x1xf32>
    %52 = arith.maximumf %50, %51 : vector<32x1xf32>
    %53 = vector.broadcast %43 : vector<32x1xf32> to vector<32x128xf32>
    %54 = arith.subf %39, %53 : vector<32x128xf32>
    %cst_30 = arith.constant 9.99999974E-6 : f32
    %55 = vector.broadcast %cst_30 : f32 to vector<32x1xf32>
    %56 = arith.addf %52, %55 : vector<32x1xf32>
    %57 = math.rsqrt %56 : vector<32x1xf32>
    %58 = vector.broadcast %57 : vector<32x1xf32> to vector<32x128xf32>
    %59 = arith.mulf %54, %58 : vector<32x128xf32>
    %60 = vector.broadcast %2 : vector<1x128xf32> to vector<32x128xf32>
    %61 = arith.mulf %59, %60 : vector<32x128xf32>
    %62 = vector.broadcast %3 : vector<1x128xf32> to vector<32x128xf32>
    %63 = arith.addf %61, %62 : vector<32x128xf32>
    %64 = arith.truncf %63 : vector<32x128xf32> to vector<32x128xbf16>
    %c0_31 = arith.constant 0 : index
    %c0_32 = arith.constant 0 : index
    %65 = vector.load %arg9[%c0_31, %c0_32] : memref<128x256xbf16, #tpu.memory_space<vmem>>, vector<128x256xbf16>
    %cst_33 = arith.constant dense<0.000000e+00> : vector<32x256xf32>
    %66 = tpu.matmul %64, %65, %cst_33 {dimension_numbers = #tpu.dot_dimension_numbers<[1], [0], [0], [1], [0, 0, 1, 1], [], []>} : vector<32x128xbf16>, vector<128x256xbf16>, vector<32x256xf32> -> vector<32x256xf32>
    %c0_34 = arith.constant 0 : index
    %c0_35 = arith.constant 0 : index
    %67 = vector.load %arg10[%c0_34, %c0_35] : memref<1x256xf32, #tpu.memory_space<vmem>>, vector<1x256xf32>
    %68 = vector.broadcast %67 : vector<1x256xf32> to vector<32x256xf32>
    %69 = arith.addf %66, %68 : vector<32x256xf32>
    %70 = arith.truncf %69 : vector<32x256xf32> to vector<32x256xbf16>
    %cst_36 = arith.constant 0.000000e+00 : bf16
    %71 = vector.broadcast %cst_36 : bf16 to vector<32x256xbf16>
    %72 = arith.maximumf %70, %71 : vector<32x256xbf16>
    %c0_37 = arith.constant 0 : index
    %c0_38 = arith.constant 0 : index
    %73 = vector.load %arg11[%c0_37, %c0_38] : memref<256x128xbf16, #tpu.memory_space<vmem>>, vector<256x128xbf16>
    %cst_39 = arith.constant dense<0.000000e+00> : vector<32x128xf32>
    %74 = tpu.matmul %72, %73, %cst_39 {dimension_numbers = #tpu.dot_dimension_numbers<[1], [0], [0], [1], [0, 0, 1, 1], [], []>} : vector<32x256xbf16>, vector<256x128xbf16>, vector<32x128xf32> -> vector<32x128xf32>
    %c0_40 = arith.constant 0 : index
    %c0_41 = arith.constant 0 : index
    %75 = vector.load %arg12[%c0_40, %c0_41] : memref<1x128xf32, #tpu.memory_space<vmem>>, vector<1x128xf32>
    %76 = vector.broadcast %75 : vector<1x128xf32> to vector<32x128xf32>
    %77 = arith.addf %74, %76 : vector<32x128xf32>
    %78 = arith.addf %63, %77 : vector<32x128xf32>
    %cst_42 = arith.constant dense<0.000000e+00> : vector<32xf32>
    %79 = vector.multi_reduction <add>, %78, %cst_42 [1] : vector<32x128xf32> to vector<32xf32>
    %80 = vector.shape_cast %79 : vector<32xf32> to vector<32x1xf32>
    %cst_43 = arith.constant 1.280000e+02 : f32
    %81 = vector.broadcast %cst_43 : f32 to vector<32x1xf32>
    %82 = arith.divf %80, %81 : vector<32x1xf32>
    %83 = arith.mulf %78, %78 : vector<32x128xf32>
    %cst_44 = arith.constant dense<0.000000e+00> : vector<32xf32>
    %84 = vector.multi_reduction <add>, %83, %cst_44 [1] : vector<32x128xf32> to vector<32xf32>
    %85 = vector.shape_cast %84 : vector<32xf32> to vector<32x1xf32>
    %cst_45 = arith.constant 1.280000e+02 : f32
    %86 = vector.broadcast %cst_45 : f32 to vector<32x1xf32>
    %87 = arith.divf %85, %86 : vector<32x1xf32>
    %88 = arith.mulf %82, %82 : vector<32x1xf32>
    %89 = arith.subf %87, %88 : vector<32x1xf32>
    %cst_46 = arith.constant 0.000000e+00 : f32
    %90 = vector.broadcast %cst_46 : f32 to vector<32x1xf32>
    %91 = arith.maximumf %89, %90 : vector<32x1xf32>
    %92 = vector.broadcast %82 : vector<32x1xf32> to vector<32x128xf32>
    %93 = arith.subf %78, %92 : vector<32x128xf32>
    %cst_47 = arith.constant 9.99999974E-6 : f32
    %94 = vector.broadcast %cst_47 : f32 to vector<32x1xf32>
    %95 = arith.addf %91, %94 : vector<32x1xf32>
    %96 = math.rsqrt %95 : vector<32x1xf32>
    %97 = vector.broadcast %96 : vector<32x1xf32> to vector<32x128xf32>
    %98 = arith.mulf %93, %97 : vector<32x128xf32>
    %99 = vector.broadcast %4 : vector<1x128xf32> to vector<32x128xf32>
    %100 = arith.mulf %98, %99 : vector<32x128xf32>
    %101 = vector.broadcast %5 : vector<1x128xf32> to vector<32x128xf32>
    %102 = arith.addf %100, %101 : vector<32x128xf32>
    %c0_48 = arith.constant 0 : index
    %c0_49 = arith.constant 0 : index
    %c0_50 = arith.constant 0 : index
    %103 = vector.load %arg2[%c0_48, %c0_49, %c0_50] : memref<2x16x1xf32, #tpu.memory_space<vmem>>, vector<2x16x1xf32>
    %104 = vector.shape_cast %103 : vector<2x16x1xf32> to vector<32x1xf32>
    %105 = vector.broadcast %104 : vector<32x1xf32> to vector<32x128xf32>
    %106 = arith.mulf %102, %105 : vector<32x128xf32>
    %107 = vector.shape_cast %106 : vector<32x128xf32> to vector<2x16x128xf32>
    %c0_51 = arith.constant 0 : index
    %c0_52 = arith.constant 0 : index
    %c0_53 = arith.constant 0 : index
    %108 = vector.load %arg15[%c0_51, %c0_52, %c0_53] : memref<2x16x128xf32, #tpu.memory_space<vmem>>, vector<2x16x128xf32>
    tpu.vector_store %arg15[%c0_51, %c0_52, %c0_53], %107 {strides = array<i32>} : memref<2x16x128xf32, #tpu.memory_space<vmem>>, vector<2x16x128xf32>,
    return
  }
  func.func @transform_0(%arg0: i32) -> (i32, i32, i32) {
    %c0_i32 = arith.constant 0 : i32
    %c0_i32_0 = arith.constant 0 : i32
    %c0_i32_1 = arith.constant 0 : i32
    return %arg0, %c0_i32, %c0_i32_0 : i32, i32, i32
  }
  func.func @transform_1(%arg0: i32) -> (i32, i32, i32) {
    %c0_i32 = arith.constant 0 : i32
    %c0_i32_0 = arith.constant 0 : i32
    %c0_i32_1 = arith.constant 0 : i32
    return %arg0, %c0_i32, %c0_i32_0 : i32, i32, i32
  }
  func.func @transform_2(%arg0: i32) -> (i32, i32) {
    %c0_i32 = arith.constant 0 : i32
    %c0_i32_0 = arith.constant 0 : i32
    %c0_i32_1 = arith.constant 0 : i32
    return %c0_i32, %c0_i32_0 : i32, i32
  }
  func.func @transform_3(%arg0: i32) -> (i32, i32, i32) {
    %c0_i32 = arith.constant 0 : i32
    %c0_i32_0 = arith.constant 0 : i32
    %c0_i32_1 = arith.constant 0 : i32
    %c0_i32_2 = arith.constant 0 : i32
    return %c0_i32, %c0_i32_0, %c0_i32_1 : i32, i32, i32
  }
  func.func @transform_4(%arg0: i32) -> (i32, i32) {
    %c0_i32 = arith.constant 0 : i32
    %c0_i32_0 = arith.constant 0 : i32
    %c0_i32_1 = arith.constant 0 : i32
    return %c0_i32, %c0_i32_0 : i32, i32
  }
  func.func @transform_5(%arg0: i32) -> (i32, i32, i32) {
    %c0_i32 = arith.constant 0 : i32
    %c0_i32_0 = arith.constant 0 : i32
    %c0_i32_1 = arith.constant 0 : i32
    %c0_i32_2 = arith.constant 0 : i32
    return %c0_i32, %c0_i32_0, %c0_i32_1 : i32, i32, i32
  }
  func.func @transform_6(%arg0: i32) -> (i32, i32) {
    %c0_i32 = arith.constant 0 : i32
    %c0_i32_0 = arith.constant 0 : i32
    %c0_i32_1 = arith.constant 0 : i32
    return %c0_i32, %c0_i32_0 : i32, i32
  }
  func.func @transform_7(%arg0: i32) -> (i32, i32) {
    %c0_i32 = arith.constant 0 : i32
    %c0_i32_0 = arith.constant 0 : i32
    %c0_i32_1 = arith.constant 0 : i32
    return %c0_i32, %c0_i32_0 : i32, i32
  }
  func.func @transform_8(%arg0: i32) -> (i32, i32) {
    %c0_i32 = arith.constant 0 : i32
    %c0_i32_0 = arith.constant 0 : i32
    %c0_i32_1 = arith.constant 0 : i32
    return %c0_i32, %c0_i32_0 : i32, i32
  }
  func.func @transform_9(%arg0: i32) -> (i32, i32) {
    %c0_i32 = arith.constant 0 : i32
    %c0_i32_0 = arith.constant 0 : i32
    %c0_i32_1 = arith.constant 0 : i32
    return %c0_i32, %c0_i32_0 : i32, i32
  }
  func.func @transform_10(%arg0: i32) -> (i32, i32) {
    %c0_i32 = arith.constant 0 : i32
    %c0_i32_0 = arith.constant 0 : i32
    %c0_i32_1 = arith.constant 0 : i32
    return %c0_i32, %c0_i32_0 : i32, i32
  }
  func.func @transform_11(%arg0: i32) -> (i32, i32) {
    %c0_i32 = arith.constant 0 : i32
    %c0_i32_0 = arith.constant 0 : i32
    %c0_i32_1 = arith.constant 0 : i32
    return %c0_i32, %c0_i32_0 : i32, i32
  }
  func.func @transform_12(%arg0: i32) -> (i32, i32) {
    %c0_i32 = arith.constant 0 : i32
    %c0_i32_0 = arith.constant 0 : i32
    %c0_i32_1 = arith.constant 0 : i32
    return %c0_i32, %c0_i32_0 : i32, i32
  }
  func.func @transform_13(%arg0: i32) -> (i32, i32) {
    %c0_i32 = arith.constant 0 : i32
    %c0_i32_0 = arith.constant 0 : i32
    %c0_i32_1 = arith.constant 0 : i32
    return %c0_i32, %c0_i32_0 : i32, i32
  }
  func.func @transform_14(%arg0: i32) -> (i32, i32, i32) {
    %c0_i32 = arith.constant 0 : i32
    %c0_i32_0 = arith.constant 0 : i32
    %c0_i32_1 = arith.constant 0 : i32
    return %arg0, %c0_i32, %c0_i32_0 : i32, i32, i32
  }
}

</mosaic_0001>

<llo_original>
// kernel: tpu_custom_call.1
$region0: #{tpu_custom_call.1}
  #allocation0 [shape = 'u32[]', space=smem, size = 0x4, offset = 0x4, fixed_abs, tag = 'smem constant byte address 0x4 - core index']
  #allocation1 [shape = 'u32[72,128]{1,0:T(1,128)}', space=vmem, size = 0x9000, scoped, tag = 'internal scratch']
  %s0 = inlined_call_operand.hbm [shape: f32[4,16,128], index: 0, kind: input, shape index: {}]
  %s1 = inlined_call_operand.vmem [shape: f32[4,16,1], index: 1, kind: input, shape index: {}]
  %s2 = inlined_call_operand.vmem [shape: bf16[128,16], index: 2, kind: input, shape index: {}]
  %s3 = inlined_call_operand.vmem [shape: f32[1,128,1], index: 3, kind: input, shape index: {}]
  %s4 = inlined_call_operand.vmem [shape: bf16[16,128], index: 4, kind: input, shape index: {}]
  %s5 = inlined_call_operand.vmem [shape: f32[1,16,1], index: 5, kind: input, shape index: {}]
  %s6 = inlined_call_operand.vmem [shape: f32[1,128], index: 6, kind: input, shape index: {}]
  %s7 = inlined_call_operand.vmem [shape: f32[1,128], index: 7, kind: input, shape index: {}]
  %s8 = inlined_call_operand.vmem [shape: bf16[128,256], index: 8, kind: input, shape index: {}]
  %s9 = inlined_call_operand.vmem [shape: f32[1,256], index: 9, kind: input, shape index: {}]
  %s10 = inlined_call_operand.vmem [shape: bf16[256,128], index: 10, kind: input, shape index: {}]
  %s11 = inlined_call_operand.vmem [shape: f32[1,128], index: 11, kind: input, shape index: {}]
  %s12 = inlined_call_operand.vmem [shape: f32[1,128], index: 12, kind: input, shape index: {}]
  %s13 = inlined_call_operand.vmem [shape: f32[1,128], index: 13, kind: input, shape index: {}]
  %s14 = inlined_call_operand.hbm [shape: f32[4,16,128], index: 14, kind: output, shape index: {}]
  %s15 = sld [smem:[#allocation0]]
  $region93: #{tpu_custom_call.1} parent=0
    _
  %s17 = ssub.s32 1, %s15
  %s18 = scalar_select 0, %s17, %s15
  $region1: #{tpu_custom_call.1} parent=0
    #allocation2 [shape = 'u8[32768]{0}', space=vmem, size = 0x8000, scoped, tag = 'input window, operand 0']
    #allocation3 [shape = 's32[2]{0}', space=sflag, size = 0x8, scoped, tag = 'scoped memory for tpu_custom_call.1']
    #allocation4 [shape = 's32[2]{0}', space=sflag, size = 0x8, scoped, tag = 'scoped memory for tpu_custom_call.1']
    #allocation5 [shape = 'u8[32768]{0}', space=vmem, size = 0x8000, scoped, tag = 'output window, operand 0']
    %19 = vsyncpa [#allocation3], 0
    %s20 = scalar_lea.sflag [#allocation3], 1
    %21 = vsyncpa %s20, 0
    %22 = vsyncpa [#allocation4], 0
    %s23 = scalar_lea.sflag [#allocation4], 1
    %24 = vsyncpa %s23, 0
    loop: start=0, step=1, limit=4
    $region2: #{tpu_custom_call.1} parent=1 // loop_pre_header
      _
    $region3: #{tpu_custom_call.1} parent=1 // loop_header
      %s26 = sphi 0, %s30
      %p27 = scmp.ge.s32.totalorder %s26, 4
      %s36 = sphi 0, %s38
      %s39 = sphi 0, %s36
      %s40 = sphi 0, %s39
      %s56 = sphi 0, %s40
      %s62 = sphi 0, %s64
      %s65 = sphi 0, %s62
      %s66 = sphi 0, %s65
      %s82 = sphi 0, %s66
      %s86 = sphi 0, %s86
      %s88 = sphi 0, %s86
      %s89 = sphi 0, %s88
      %s103 = sphi 0, %s89
      %s107 = sphi 0, %s107
      %s109 = sphi 0, %s107
      %s110 = sphi 0, %s109
      %s124 = sphi 0, %s110
      %s128 = sphi 0, %s128
      %s130 = sphi 0, %s128
      %s131 = sphi 0, %s130
      %s145 = sphi 0, %s131
      %s149 = sphi 0, %s149
      %s151 = sphi 0, %s149
      %s152 = sphi 0, %s151
      %s166 = sphi 0, %s152
      %s170 = sphi 0, %s170
      %s172 = sphi 0, %s170
      %s173 = sphi 0, %s172
      %s187 = sphi 0, %s173
      %s191 = sphi 0, %s191
      %s193 = sphi 0, %s191
      %s194 = sphi 0, %s193
      %s208 = sphi 0, %s194
      %s212 = sphi 0, %s212
      %s214 = sphi 0, %s212
      %s215 = sphi 0, %s214
      %s229 = sphi 0, %s215
      %s233 = sphi 0, %s233
      %s235 = sphi 0, %s233
      %s236 = sphi 0, %s235
      %s250 = sphi 0, %s236
      %s254 = sphi 0, %s254
      %s256 = sphi 0, %s254
      %s257 = sphi 0, %s256
      %s271 = sphi 0, %s257
      %s275 = sphi 0, %s275
      %s277 = sphi 0, %s275
      %s278 = sphi 0, %s277
      %s292 = sphi 0, %s278
      %s296 = sphi 0, %s296
      %s298 = sphi 0, %s296
      %s299 = sphi 0, %s298
      %s313 = sphi 0, %s299
      %s317 = sphi 0, %s317
      %s319 = sphi 0, %s317
      %s320 = sphi 0, %s319
      %s334 = sphi 0, %s320
      %s340 = sphi 0, %s342
      %s343 = sphi 0, %s340
      %s344 = sphi 0, %s343
      %s360 = sphi 0, %s344
    $region4: #{tpu_custom_call.1} parent=1 // loop_header_branch
      %29 = sbr.rel (%p27) target = $region8
    $region5: #{tpu_custom_call.1} parent=1 // loop_body
      %s31 = ssub.s32 %s26, 1
      %s32 = ssub.s32 %s26, 2
      %s33 = sadd.s32 %s26, 1
      %s34 = ssub.s32 %s26, %s33
      %p35 = scmp.eq.s32.totalorder %s34, 0
      %s37 = sadd.s32 %s36, 1
      %s38 = scalar_select %p35, %s36, %s37
      %p41 = pneg %p35
      %p42 = scmp.eq.s32.totalorder %s26, 1
      %p43 = por %p41, %p42
      %p44 = scmp.ne.s32.totalorder %s36, %s39
      %p45 = scmp.eq.s32.totalorder %s26, 0
      %p46 = por %p44, %p45
      %p47 = scmp.ne.s32.totalorder %s36, %s39
      %p48 = scmp.eq.s32.totalorder %s31, 1
      %p49 = por %p47, %p48
      %p50 = scmp.ne.s32.totalorder %s39, %s40
      %p51 = scmp.eq.s32.totalorder %s31, 0
      %p52 = por %p50, %p51
      %p53 = scmp.ne.s32.totalorder %s39, %s40
      %p54 = scmp.eq.s32.totalorder %s32, 1
      %p55 = por %p53, %p54
      %p57 = scmp.ne.s32.totalorder %s40, %s56
      %p58 = scmp.eq.s32.totalorder %s32, 0
      %p59 = por %p57, %p58
      %s60 = ssub.s32 %s26, %s33
      %p61 = scmp.eq.s32.totalorder %s60, 0
      %s63 = sadd.s32 %s62, 1
      %s64 = scalar_select %p61, %s62, %s63
      %p67 = pneg %p61
      %p68 = scmp.eq.s32.totalorder %s26, 1
      %p69 = por %p67, %p68
      %p70 = scmp.ne.s32.totalorder %s62, %s65
      %p71 = scmp.eq.s32.totalorder %s26, 0
      %p72 = por %p70, %p71
      %p73 = scmp.ne.s32.totalorder %s62, %s65
      %p74 = scmp.eq.s32.totalorder %s31, 1
      %p75 = por %p73, %p74
      %p76 = scmp.ne.s32.totalorder %s65, %s66
      %p77 = scmp.eq.s32.totalorder %s31, 0
      %p78 = por %p76, %p77
      %p79 = scmp.ne.s32.totalorder %s65, %s66
      %p80 = scmp.eq.s32.totalorder %s32, 1
      %p81 = por %p79, %p80
      %p83 = scmp.ne.s32.totalorder %s66, %s82
      %p84 = scmp.eq.s32.totalorder %s32, 0
      %p85 = por %p83, %p84
      %s87 = sadd.s32 %s86, 1
      %p90 = scmp.eq.s32.totalorder %s26, 1
      %p91 = scmp.ne.s32.totalorder %s86, %s88
      %p92 = scmp.eq.s32.totalorder %s26, 0
      %p93 = por %p91, %p92
      %p94 = scmp.ne.s32.totalorder %s86, %s88
      %p95 = scmp.eq.s32.totalorder %s31, 1
      %p96 = por %p94, %p95
      %p97 = scmp.ne.s32.totalorder %s88, %s89
      %p98 = scmp.eq.s32.totalorder %s31, 0
      %p99 = por %p97, %p98
      %p100 = scmp.ne.s32.totalorder %s88, %s89
      %p101 = scmp.eq.s32.totalorder %s32, 1
      %p102 = por %p100, %p101
      %p104 = scmp.ne.s32.totalorder %s89, %s103
      %p105 = scmp.eq.s32.totalorder %s32, 0
      %p106 = por %p104, %p105
      %s108 = sadd.s32 %s107, 1
      %p111 = scmp.eq.s32.totalorder %s26, 1
      %p112 = scmp.ne.s32.totalorder %s107, %s109
      %p113 = scmp.eq.s32.totalorder %s26, 0
      %p114 = por %p112, %p113
      %p115 = scmp.ne.s32.totalorder %s107, %s109
      %p116 = scmp.eq.s32.totalorder %s31, 1
      %p117 = por %p115, %p116
      %p118 = scmp.ne.s32.totalorder %s109, %s110
      %p119 = scmp.eq.s32.totalorder %s31, 0
      %p120 = por %p118, %p119
      %p121 = scmp.ne.s32.totalorder %s109, %s110
      %p122 = scmp.eq.s32.totalorder %s32, 1
      %p123 = por %p121, %p122
      %p125 = scmp.ne.s32.totalorder %s110, %s124
      %p126 = scmp.eq.s32.totalorder %s32, 0
      %p127 = por %p125, %p126
      %s129 = sadd.s32 %s128, 1
      %p132 = scmp.eq.s32.totalorder %s26, 1
      %p133 = scmp.ne.s32.totalorder %s128, %s130
      %p134 = scmp.eq.s32.totalorder %s26, 0
      %p135 = por %p133, %p134
      %p136 = scmp.ne.s32.totalorder %s128, %s130
      %p137 = scmp.eq.s32.totalorder %s31, 1
      %p138 = por %p136, %p137
      %p139 = scmp.ne.s32.totalorder %s130, %s131
      %p140 = scmp.eq.s32.totalorder %s31, 0
      %p141 = por %p139, %p140
      %p142 = scmp.ne.s32.totalorder %s130, %s131
      %p143 = scmp.eq.s32.totalorder %s32, 1
      %p144 = por %p142, %p143
      %p146 = scmp.ne.s32.totalorder %s131, %s145
      %p147 = scmp.eq.s32.totalorder %s32, 0
      %p148 = por %p146, %p147
      %s150 = sadd.s32 %s149, 1
      %p153 = scmp.eq.s32.totalorder %s26, 1
      %p154 = scmp.ne.s32.totalorder %s149, %s151
      %p155 = scmp.eq.s32.totalorder %s26, 0
      %p156 = por %p154, %p155
      %p157 = scmp.ne.s32.totalorder %s149, %s151
      %p158 = scmp.eq.s32.totalorder %s31, 1
      %p159 = por %p157, %p158
      %p160 = scmp.ne.s32.totalorder %s151, %s152
      %p161 = scmp.eq.s32.totalorder %s31, 0
      %p162 = por %p160, %p161
      %p163 = scmp.ne.s32.totalorder %s151, %s152
      %p164 = scmp.eq.s32.totalorder %s32, 1
      %p165 = por %p163, %p164
      %p167 = scmp.ne.s32.totalorder %s152, %s166
      %p168 = scmp.eq.s32.totalorder %s32, 0
      %p169 = por %p167, %p168
      %s171 = sadd.s32 %s170, 1
      %p174 = scmp.eq.s32.totalorder %s26, 1
      %p175 = scmp.ne.s32.totalorder %s170, %s172
      %p176 = scmp.eq.s32.totalorder %s26, 0
      %p177 = por %p175, %p176
      %p178 = scmp.ne.s32.totalorder %s170, %s172
      %p179 = scmp.eq.s32.totalorder %s31, 1
      %p180 = por %p178, %p179
      %p181 = scmp.ne.s32.totalorder %s172, %s173
      %p182 = scmp.eq.s32.totalorder %s31, 0
      %p183 = por %p181, %p182
      %p184 = scmp.ne.s32.totalorder %s172, %s173
      %p185 = scmp.eq.s32.totalorder %s32, 1
      %p186 = por %p184, %p185
      %p188 = scmp.ne.s32.totalorder %s173, %s187
      %p189 = scmp.eq.s32.totalorder %s32, 0
      %p190 = por %p188, %p189
      %s192 = sadd.s32 %s191, 1
      %p195 = scmp.eq.s32.totalorder %s26, 1
      %p196 = scmp.ne.s32.totalorder %s191, %s193
      %p197 = scmp.eq.s32.totalorder %s26, 0
      %p198 = por %p196, %p197
      %p199 = scmp.ne.s32.totalorder %s191, %s193
      %p200 = scmp.eq.s32.totalorder %s31, 1
      %p201 = por %p199, %p200
      %p202 = scmp.ne.s32.totalorder %s193, %s194
      %p203 = scmp.eq.s32.totalorder %s31, 0
      %p204 = por %p202, %p203
      %p205 = scmp.ne.s32.totalorder %s193, %s194
      %p206 = scmp.eq.s32.totalorder %s32, 1
      %p207 = por %p205, %p206
      %p209 = scmp.ne.s32.totalorder %s194, %s208
      %p210 = scmp.eq.s32.totalorder %s32, 0
      %p211 = por %p209, %p210
      %s213 = sadd.s32 %s212, 1
      %p216 = scmp.eq.s32.totalorder %s26, 1
      %p217 = scmp.ne.s32.totalorder %s212, %s214
      %p218 = scmp.eq.s32.totalorder %s26, 0
      %p219 = por %p217, %p218
      %p220 = scmp.ne.s32.totalorder %s212, %s214
      %p221 = scmp.eq.s32.totalorder %s31, 1
      %p222 = por %p220, %p221
      %p223 = scmp.ne.s32.totalorder %s214, %s215
      %p224 = scmp.eq.s32.totalorder %s31, 0
      %p225 = por %p223, %p224
      %p226 = scmp.ne.s32.totalorder %s214, %s215
      %p227 = scmp.eq.s32.totalorder %s32, 1
      %p228 = por %p226, %p227
      %p230 = scmp.ne.s32.totalorder %s215, %s229
      %p231 = scmp.eq.s32.totalorder %s32, 0
      %p232 = por %p230, %p231
      %s234 = sadd.s32 %s233, 1
      %p237 = scmp.eq.s32.totalorder %s26, 1
      %p238 = scmp.ne.s32.totalorder %s233, %s235
      %p239 = scmp.eq.s32.totalorder %s26, 0
      %p240 = por %p238, %p239
      %p241 = scmp.ne.s32.totalorder %s233, %s235
      %p242 = scmp.eq.s32.totalorder %s31, 1
      %p243 = por %p241, %p242
      %p244 = scmp.ne.s32.totalorder %s235, %s236
      %p245 = scmp.eq.s32.totalorder %s31, 0
      %p246 = por %p244, %p245
      %p247 = scmp.ne.s32.totalorder %s235, %s236
      %p248 = scmp.eq.s32.totalorder %s32, 1
      %p249 = por %p247, %p248
      %p251 = scmp.ne.s32.totalorder %s236, %s250
      %p252 = scmp.eq.s32.totalorder %s32, 0
      %p253 = por %p251, %p252
      %s255 = sadd.s32 %s254, 1
      %p258 = scmp.eq.s32.totalorder %s26, 1
      %p259 = scmp.ne.s32.totalorder %s254, %s256
      %p260 = scmp.eq.s32.totalorder %s26, 0
      %p261 = por %p259, %p260
      %p262 = scmp.ne.s32.totalorder %s254, %s256
      %p263 = scmp.eq.s32.totalorder %s31, 1
      %p264 = por %p262, %p263
      %p265 = scmp.ne.s32.totalorder %s256, %s257
      %p266 = scmp.eq.s32.totalorder %s31, 0
      %p267 = por %p265, %p266
      %p268 = scmp.ne.s32.totalorder %s256, %s257
      %p269 = scmp.eq.s32.totalorder %s32, 1
      %p270 = por %p268, %p269
      %p272 = scmp.ne.s32.totalorder %s257, %s271
      %p273 = scmp.eq.s32.totalorder %s32, 0
      %p274 = por %p272, %p273
      %s276 = sadd.s32 %s275, 1
      %p279 = scmp.eq.s32.totalorder %s26, 1
      %p280 = scmp.ne.s32.totalorder %s275, %s277
      %p281 = scmp.eq.s32.totalorder %s26, 0
      %p282 = por %p280, %p281
      %p283 = scmp.ne.s32.totalorder %s275, %s277
      %p284 = scmp.eq.s32.totalorder %s31, 1
      %p285 = por %p283, %p284
      %p286 = scmp.ne.s32.totalorder %s277, %s278
      %p287 = scmp.eq.s32.totalorder %s31, 0
      %p288 = por %p286, %p287
      %p289 = scmp.ne.s32.totalorder %s277, %s278
      %p290 = scmp.eq.s32.totalorder %s32, 1
      %p291 = por %p289, %p290
      %p293 = scmp.ne.s32.totalorder %s278, %s292
      %p294 = scmp.eq.s32.totalorder %s32, 0
      %p295 = por %p293, %p294
      %s297 = sadd.s32 %s296, 1
      %p300 = scmp.eq.s32.totalorder %s26, 1
      %p301 = scmp.ne.s32.totalorder %s296, %s298
      %p302 = scmp.eq.s32.totalorder %s26, 0
      %p303 = por %p301, %p302
      %p304 = scmp.ne.s32.totalorder %s296, %s298
      %p305 = scmp.eq.s32.totalorder %s31, 1
      %p306 = por %p304, %p305
      %p307 = scmp.ne.s32.totalorder %s298, %s299
      %p308 = scmp.eq.s32.totalorder %s31, 0
      %p309 = por %p307, %p308
      %p310 = scmp.ne.s32.totalorder %s298, %s299
      %p311 = scmp.eq.s32.totalorder %s32, 1
      %p312 = por %p310, %p311
      %p314 = scmp.ne.s32.totalorder %s299, %s313
      %p315 = scmp.eq.s32.totalorder %s32, 0
      %p316 = por %p314, %p315
      %s318 = sadd.s32 %s317, 1
      %p321 = scmp.eq.s32.totalorder %s26, 1
      %p322 = scmp.ne.s32.totalorder %s317, %s319
      %p323 = scmp.eq.s32.totalorder %s26, 0
      %p324 = por %p322, %p323
      %p325 = scmp.ne.s32.totalorder %s317, %s319
      %p326 = scmp.eq.s32.totalorder %s31, 1
      %p327 = por %p325, %p326
      %p328 = scmp.ne.s32.totalorder %s319, %s320
      %p329 = scmp.eq.s32.totalorder %s31, 0
      %p330 = por %p328, %p329
      %p331 = scmp.ne.s32.totalorder %s319, %s320
      %p332 = scmp.eq.s32.totalorder %s32, 1
      %p333 = por %p331, %p332
      %p335 = scmp.ne.s32.totalorder %s320, %s334
      %p336 = scmp.eq.s32.totalorder %s32, 0
      %p337 = por %p335, %p336
      %s338 = ssub.s32 %s26, %s33
      %p339 = scmp.eq.s32.totalorder %s338, 0
      %s341 = sadd.s32 %s340, 1
      %s342 = scalar_select %p339, %s340, %s341
      %p345 = pneg %p339
      %p346 = scmp.eq.s32.totalorder %s26, 1
      %p347 = por %p345, %p346
      %p348 = scmp.ne.s32.totalorder %s340, %s343
      %p349 = scmp.eq.s32.totalorder %s26, 0
      %p350 = por %p348, %p349
      %p351 = scmp.ne.s32.totalorder %s340, %s343
      %p352 = scmp.eq.s32.totalorder %s31, 1
      %p353 = por %p351, %p352
      %p354 = scmp.ne.s32.totalorder %s343, %s344
      %p355 = scmp.eq.s32.totalorder %s31, 0
      %p356 = por %p354, %p355
      %p357 = scmp.ne.s32.totalorder %s343, %s344
      %p358 = scmp.eq.s32.totalorder %s32, 1
      %p359 = por %p357, %p358
      %p361 = scmp.ne.s32.totalorder %s344, %s360
      %p362 = scmp.eq.s32.totalorder %s32, 0
      %p363 = por %p361, %p362
      %p364 = scmp.le.s32.totalorder 1, %s26
      %p365 = scmp.lt.s32.totalorder %s26, 3
      %p366 = pnand %p364, %p365
      %p367 = pneg %p366
      // Predicated region
      $region9: #{tpu_custom_call.1} parent=5 // pred_check
        _
      $region10: #{tpu_custom_call.1} parent=5 // pred_check_branch
        %369 = sbr.rel (%p366) target = $region12
      $region11: #{tpu_custom_call.1} parent=5 // pred_region
        %s370 = ssub.s32 %s26, 1
        // Predicated region
        $region13: #{tpu_custom_call.1} parent=11 // pred_check
          %p371 = pneg %p99
        $region14: #{tpu_custom_call.1} parent=11 // pred_check_branch
          %373 = sbr.rel (%p371) target = $region16
        $region15: #{tpu_custom_call.1} parent=11 // pred_region
          _
        $region16: #{tpu_custom_call.1} parent=11 // pred_fallthru
          _
        // Predicated region
        $region17: #{tpu_custom_call.1} parent=11 // pred_check
          %p374 = pneg %p120
        $region18: #{tpu_custom_call.1} parent=11 // pred_check_branch
          %376 = sbr.rel (%p374) target = $region20
        $region19: #{tpu_custom_call.1} parent=11 // pred_region
          _
        $region20: #{tpu_custom_call.1} parent=11 // pred_fallthru
          _
        // Predicated region
        $region21: #{tpu_custom_call.1} parent=11 // pred_check
          %p377 = pneg %p141
        $region22: #{tpu_custom_call.1} parent=11 // pred_check_branch
          %379 = sbr.rel (%p377) target = $region24
        $region23: #{tpu_custom_call.1} parent=11 // pred_region
          _
        $region24: #{tpu_custom_call.1} parent=11 // pred_fallthru
          _
        // Predicated region
        $region25: #{tpu_custom_call.1} parent=11 // pred_check
          %p380 = pneg %p162
        $region26: #{tpu_custom_call.1} parent=11 // pred_check_branch
          %382 = sbr.rel (%p380) target = $region28
        $region27: #{tpu_custom_call.1} parent=11 // pred_region
          _
        $region28: #{tpu_custom_call.1} parent=11 // pred_fallthru
          _
        // Predicated region
        $region29: #{tpu_custom_call.1} parent=11 // pred_check
          %p383 = pneg %p183
        $region30: #{tpu_custom_call.1} parent=11 // pred_check_branch
          %385 = sbr.rel (%p383) target = $region32
        $region31: #{tpu_custom_call.1} parent=11 // pred_region
          _
        $region32: #{tpu_custom_call.1} parent=11 // pred_fallthru
          _
        // Predicated region
        $region33: #{tpu_custom_call.1} parent=11 // pred_check
          %p386 = pneg %p204
        $region34: #{tpu_custom_call.1} parent=11 // pred_check_branch
          %388 = sbr.rel (%p386) target = $region36
        $region35: #{tpu_custom_call.1} parent=11 // pred_region
          _
        $region36: #{tpu_custom_call.1} parent=11 // pred_fallthru
          _
        // Predicated region
        $region37: #{tpu_custom_call.1} parent=11 // pred_check
          %p389 = pneg %p225
        $region38: #{tpu_custom_call.1} parent=11 // pred_check_branch
          %391 = sbr.rel (%p389) target = $region40
        $region39: #{tpu_custom_call.1} parent=11 // pred_region
          _
        $region40: #{tpu_custom_call.1} parent=11 // pred_fallthru
          _
        // Predicated region
        $region41: #{tpu_custom_call.1} parent=11 // pred_check
          %p392 = pneg %p246
        $region42: #{tpu_custom_call.1} parent=11 // pred_check_branch
          %394 = sbr.rel (%p392) target = $region44
        $region43: #{tpu_custom_call.1} parent=11 // pred_region
          _
        $region44: #{tpu_custom_call.1} parent=11 // pred_fallthru
          _
        // Predicated region
        $region45: #{tpu_custom_call.1} parent=11 // pred_check
          %p395 = pneg %p267
        $region46: #{tpu_custom_call.1} parent=11 // pred_check_branch
          %397 = sbr.rel (%p395) target = $region48
        $region47: #{tpu_custom_call.1} parent=11 // pred_region
          _
        $region48: #{tpu_custom_call.1} parent=11 // pred_fallthru
          _
        // Predicated region
        $region49: #{tpu_custom_call.1} parent=11 // pred_check
          %p398 = pneg %p288
        $region50: #{tpu_custom_call.1} parent=11 // pred_check_branch
          %400 = sbr.rel (%p398) target = $region52
        $region51: #{tpu_custom_call.1} parent=11 // pred_region
          _
        $region52: #{tpu_custom_call.1} parent=11 // pred_fallthru
          _
        // Predicated region
        $region53: #{tpu_custom_call.1} parent=11 // pred_check
          %p401 = pneg %p309
        $region54: #{tpu_custom_call.1} parent=11 // pred_check_branch
          %403 = sbr.rel (%p401) target = $region56
        $region55: #{tpu_custom_call.1} parent=11 // pred_region
          _
        $region56: #{tpu_custom_call.1} parent=11 // pred_fallthru
          _
        // Predicated region
        $region57: #{tpu_custom_call.1} parent=11 // pred_check
          %p404 = pneg %p330
        $region58: #{tpu_custom_call.1} parent=11 // pred_check_branch
          %406 = sbr.rel (%p404) target = $region60
        $region59: #{tpu_custom_call.1} parent=11 // pred_region
          _
        $region60: #{tpu_custom_call.1} parent=11 // pred_fallthru
          _
      $region12: #{tpu_custom_call.1} parent=5 // pred_fallthru
        _
      %p407 = scmp.lt.s32.totalorder %s26, 2
      // Predicated region
      $region61: #{tpu_custom_call.1} parent=5 // pred_check
        %p408 = pneg %p407
      $region62: #{tpu_custom_call.1} parent=5 // pred_check_branch
        %410 = sbr.rel (%p408) target = $region64
      $region63: #{tpu_custom_call.1} parent=5 // pred_region
        // Predicated region
        $region65: #{tpu_custom_call.1} parent=63 // pred_check
          %p411 = pneg %p46
        $region66: #{tpu_custom_call.1} parent=63 // pred_check_branch
          %413 = sbr.rel (%p411) target = $region68
        $region67: #{tpu_custom_call.1} parent=63 // pred_region
          %s414 = sand.u32 %s36, 1
          %s415 = scalar_lea.sflag [#allocation3], %s414
          %s416 = sand.u32 %s36, 1
          %s417 = smul.addr %s416, 32
          %s418 = scalar_lea.vmem [#allocation2], %s417
          %s419 = smul.u32 2, %s26
          %421 = vsyncadd %s415, 0
          %s422 = smul.addr %s419, 2
          %s423 = smul.addr %s422, 8
          %s424 = scalar_lea.hbm %s0, %s423
          %s425 = sshll.u32 %s424, 4
          %s426 = int_to_ptr.hbm [resolvable:$true] %s425
          %s427 = sshll.u32 %s418, 4
          %s428 = int_to_ptr.vmem [resolvable:$true] %s427
          %433 = dma.hbm_to_vmem [thread:$0]  %s426, 512, %s428, %s415, 128, 128, 8
        $region68: #{tpu_custom_call.1} parent=63 // pred_fallthru
          _
        // Predicated region
        $region69: #{tpu_custom_call.1} parent=63 // pred_check
          %p434 = pneg %p72
        $region70: #{tpu_custom_call.1} parent=63 // pred_check_branch
          %436 = sbr.rel (%p434) target = $region72
        $region71: #{tpu_custom_call.1} parent=63 // pred_region
          %s437 = smul.u32 2, %s26
          %p438 = scmp.lt.s32.totalorder %s437, 3
          %s439 = scalar_select %p438, %s437, 3
          %s440 = smul.addr %s439, 2
          %s441 = smul.addr %s440, 8
          %s442 = scalar_lea.vmem %s1, %s441
          %s443 = smul.u32 2, %s26
        $region72: #{tpu_custom_call.1} parent=63 // pred_fallthru
          _
      $region64: #{tpu_custom_call.1} parent=5 // pred_fallthru
        _
      %p444 = scmp.le.s32.totalorder 1, %s26
      %p445 = scmp.lt.s32.totalorder %s26, 3
      %p446 = pnand %p444, %p445
      %p447 = pneg %p446
      // Predicated region
      $region73: #{tpu_custom_call.1} parent=5 // pred_check
        _
      $region74: #{tpu_custom_call.1} parent=5 // pred_check_branch
        %449 = sbr.rel (%p446) target = $region76
      $region75: #{tpu_custom_call.1} parent=5 // pred_region
        %s450 = ssub.s32 %s26, 1
        %s451 = sand.u32 %s39, 1
        %s452 = scalar_lea.sflag [#allocation3], %s451
        %s453 = sand.u32 %s39, 1
        %s454 = smul.addr %s453, 32
        %s455 = scalar_lea.vmem [#allocation2], %s454
        // Predicated region
        $region77: #{tpu_custom_call.1} parent=75 // pred_check
          %p456 = pneg %p52
        $region78: #{tpu_custom_call.1} parent=75 // pred_check_branch
          %458 = sbr.rel (%p456) target = $region80
        $region79: #{tpu_custom_call.1} parent=75 // pred_region
          %460 = dma.done %s452, 512
        $region80: #{tpu_custom_call.1} parent=75 // pred_fallthru
          _
        %s461 = sand.u32 %s39, 1
        %s462 = scalar_lea.sflag [#allocation3], %s461
        %s463 = sand.u32 %s39, 1
        %s464 = smul.addr %s463, 32
        %s465 = scalar_lea.vmem [#allocation2], %s464
        %p466 = pneg %p52
        %p467 = pneg %p49
        %s468 = smul.u32 2, %s31
        %p469 = scmp.lt.s32.totalorder %s468, 3
        %s470 = scalar_select %p469, %s468, 3
        %s471 = smul.addr %s470, 2
        %s472 = smul.addr %s471, 8
        %s473 = scalar_lea.vmem %s1, %s472
        %p474 = pneg %p78
        %p475 = pneg %p75
        %p476 = pneg %p99
        %p477 = pneg %p96
        %p478 = pneg %p120
        %p479 = pneg %p117
        %p480 = pneg %p141
        %p481 = pneg %p138
        %p482 = pneg %p162
        %p483 = pneg %p159
        %p484 = pneg %p183
        %p485 = pneg %p180
        %p486 = pneg %p204
        %p487 = pneg %p201
        %p488 = pneg %p225
        %p489 = pneg %p222
        %p490 = pneg %p246
        %p491 = pneg %p243
        %p492 = pneg %p267
        %p493 = pneg %p264
        %p494 = pneg %p288
        %p495 = pneg %p285
        %p496 = pneg %p309
        %p497 = pneg %p306
        %p498 = pneg %p330
        %p499 = pneg %p327
        %p500 = pneg %p356
        %p501 = pneg %p353
        %s502 = sand.u32 %s343, 1
        %s503 = scalar_lea.sflag [#allocation4], %s502
        %s504 = sand.u32 %s343, 1
        %s505 = smul.addr %s504, 32
        %s506 = scalar_lea.vmem [#allocation5], %s505
        %s507 = smul.u32 2, %s31
        %s508 = smul.u32 2, %s31
        %p509 = scmp.lt.s32.totalorder %s508, 3
        %s510 = scalar_select %p509, %s508, 3
        %s511 = smul.addr %s510, 2
        %s512 = smul.addr %s511, 8
        %s513 = scalar_lea.vmem %s1, %s512
        %s514 = smul.u32 2, %s31
        %s515 = smul.u32 2, %s31
        %v517 = vld [vmem:[%s455] sm:$0xff]
        %v518 = vld [vmem:[%s455 + $0x8] sm:$0xff]
        %v519 = vld [vmem:[%s455 + $0x10] sm:$0xff]
        %v520 = vld [vmem:[%s455 + $0x18] sm:$0xff]
        %v521 = vld [vmem:[%s6] sm:$0x1]
        %v522 = vld [vmem:[%s7] sm:$0x1]
        %v523 = vld [vmem:[%s12] sm:$0x1]
        %v524 = vld [vmem:[%s13] sm:$0x1]
        %v525 = vpack.c.bf16 %v517, %v517
        %v526 = vpack.c.bf16 %v518, %v518
        %v527 = vpack.c.bf16 %v519, %v519
        %v528 = vpack.c.bf16 %v520, %v520
        %v529 = vld [vmem:[%s2] sm:$0xf]
        %v530 = vld [vmem:[%s2 + $0x4] sm:$0xf]
        %v531 = vld [vmem:[%s2 + $0x8] sm:$0xf]
        %v532 = vld [vmem:[%s2 + $0xc] sm:$0xf]
        %v533 = vld [vmem:[%s2 + $0x10] sm:$0xf]
        %v534 = vld [vmem:[%s2 + $0x14] sm:$0xf]
        %v535 = vld [vmem:[%s2 + $0x18] sm:$0xf]
        %v536 = vld [vmem:[%s2 + $0x1c] sm:$0xf]
        %v537 = vld [vmem:[%s2 + $0x20] sm:$0xf]
        %v538 = vld [vmem:[%s2 + $0x24] sm:$0xf]
        %v539 = vld [vmem:[%s2 + $0x28] sm:$0xf]
        %v540 = vld [vmem:[%s2 + $0x2c] sm:$0xf]
        %v541 = vld [vmem:[%s2 + $0x30] sm:$0xf]
        %v542 = vld [vmem:[%s2 + $0x34] sm:$0xf]
        %v543 = vld [vmem:[%s2 + $0x38] sm:$0xf]
        %v544 = vld [vmem:[%s2 + $0x3c] sm:$0xf]
        %v545 = vld [vmem:[%s3] sm:$0xff]
        %v546 = vld [vmem:[%s3 + $0x8] sm:$0xff]
        %v547 = vld [vmem:[%s3 + $0x10] sm:$0xff]
        %v548 = vld [vmem:[%s3 + $0x18] sm:$0xff]
        %v549 = vld [vmem:[%s3 + $0x20] sm:$0xff]
        %v550 = vld [vmem:[%s3 + $0x28] sm:$0xff]
        %v551 = vld [vmem:[%s3 + $0x30] sm:$0xff]
        %v552 = vld [vmem:[%s3 + $0x38] sm:$0xff]
        %v553 = vld [vmem:[%s3 + $0x40] sm:$0xff]
        %v554 = vld [vmem:[%s3 + $0x48] sm:$0xff]
        %v555 = vld [vmem:[%s3 + $0x50] sm:$0xff]
        %v556 = vld [vmem:[%s3 + $0x58] sm:$0xff]
        %v557 = vld [vmem:[%s3 + $0x60] sm:$0xff]
        %v558 = vld [vmem:[%s3 + $0x68] sm:$0xff]
        %v559 = vld [vmem:[%s3 + $0x70] sm:$0xff]
        %v560 = vld [vmem:[%s3 + $0x78] sm:$0xff]
        %562 = vset.pattern.permute.xlu0 0
        %563 = vperm.xlu0 %562, %v545
        %v564 = vpop.permute.xlu0 %563
        %567 = vset.pattern.permute.xlu0 0
        %568 = vperm.xlu0 %567, %v546
        %v569 = vpop.permute.xlu0 %568
        %572 = vset.pattern.permute.xlu0 0
        %573 = vperm.xlu0 %572, %v547
        %v574 = vpop.permute.xlu0 %573
        %577 = vset.pattern.permute.xlu0 0
        %578 = vperm.xlu0 %577, %v548
        %v579 = vpop.permute.xlu0 %578
        %582 = vset.pattern.permute.xlu0 0
        %583 = vperm.xlu0 %582, %v549
        %v584 = vpop.permute.xlu0 %583
        %587 = vset.pattern.permute.xlu0 0
        %588 = vperm.xlu0 %587, %v550
        %v589 = vpop.permute.xlu0 %588
        %592 = vset.pattern.permute.xlu0 0
        %593 = vperm.xlu0 %592, %v551
        %v594 = vpop.permute.xlu0 %593
        %597 = vset.pattern.permute.xlu0 0
        %598 = vperm.xlu0 %597, %v552
        %v599 = vpop.permute.xlu0 %598
        %602 = vset.pattern.permute.xlu0 0
        %603 = vperm.xlu0 %602, %v553
        %v604 = vpop.permute.xlu0 %603
        %607 = vset.pattern.permute.xlu0 0
        %608 = vperm.xlu0 %607, %v554
        %v609 = vpop.permute.xlu0 %608
        %612 = vset.pattern.permute.xlu0 0
        %613 = vperm.xlu0 %612, %v555
        %v614 = vpop.permute.xlu0 %613
        %617 = vset.pattern.permute.xlu0 0
        %618 = vperm.xlu0 %617, %v556
        %v619 = vpop.permute.xlu0 %618
        %622 = vset.pattern.permute.xlu0 0
        %623 = vperm.xlu0 %622, %v557
        %v624 = vpop.permute.xlu0 %623
        %627 = vset.pattern.permute.xlu0 0
        %628 = vperm.xlu0 %627, %v558
        %v629 = vpop.permute.xlu0 %628
        %632 = vset.pattern.permute.xlu0 0
        %633 = vperm.xlu0 %632, %v559
        %v634 = vpop.permute.xlu0 %633
        %637 = vset.pattern.permute.xlu0 0
        %638 = vperm.xlu0 %637, %v560
        %v639 = vpop.permute.xlu0 %638
        %v657 = vunpack.c.l.b16 %v529
        %v658 = vunpack.c.l.b16 %v530
        %v659 = vunpack.c.l.b16 %v531
        %v660 = vunpack.c.l.b16 %v532
        %v661 = vunpack.c.l.b16 %v533
        %v662 = vunpack.c.l.b16 %v534
        %v663 = vunpack.c.l.b16 %v535
        %v664 = vunpack.c.l.b16 %v536
        %v665 = vunpack.c.l.b16 %v537
        %v666 = vunpack.c.l.b16 %v538
        %v667 = vunpack.c.l.b16 %v539
        %v668 = vunpack.c.l.b16 %v540
        %v669 = vunpack.c.l.b16 %v541
        %v670 = vunpack.c.l.b16 %v542
        %v671 = vunpack.c.l.b16 %v543
        %v672 = vunpack.c.l.b16 %v544
        %v673 = vpack.c.b16 %v658, %v657
        %v674 = vpack.c.b16 %v660, %v659
        %v675 = vpack.c.b16 %v662, %v661
        %v676 = vpack.c.b16 %v664, %v663
        %v677 = vpack.c.b16 %v666, %v665
        %v678 = vpack.c.b16 %v668, %v667
        %v679 = vpack.c.b16 %v670, %v669
        %v680 = vpack.c.b16 %v672, %v671
        %v683 = vunpack.c.l.b16 %v525
        %v684 = vunpack.c.l.b16 %v526
        %v685 = vpack.c.b16 %v684, %v683
        %vm687 = vcmask 130048
        %v689 = vsel %vm687, %v673, 0
        %v692 = vsel %vm687, %v674, 0
        %v695 = vsel %vm687, %v675, 0
        %v698 = vsel %vm687, %v676, 0
        %v701 = vsel %vm687, %v677, 0
        %v704 = vsel %vm687, %v678, 0
        %v707 = vsel %vm687, %v679, 0
        %v710 = vsel %vm687, %v680, 0
        %712 = vmatpush.bf16.msra.mxu0 0
        %713 = vmatpush.bf16.msra.mxu0 0
        %714 = vmatpush.bf16.msra.mxu0 0
        %715 = vmatpush.bf16.msra.mxu0 0
        %716 = vmatpush.bf16.msra.mxu0 0
        %717 = vmatpush.bf16.msra.mxu0 0
        %718 = vmatpush.bf16.msra.mxu0 0
        %719 = vmatpush.bf16.msra.mxu0 %v685
        %720 = vmatmul.bf16.gmra.mxu0 %v689
        %v721 = vpop.f32.mrf.mxu0
        %v722 = vadd.f32 %v564, %v721
        %v723 = vpop.f32.mrf.mxu0
        %v724 = vadd.f32 %v569, %v723
        %725 = vmatmul.bf16.gmra.mxu0 %v692
        %v726 = vpop.f32.mrf.mxu0
        %v727 = vadd.f32 %v574, %v726
        %v728 = vpop.f32.mrf.mxu0
        %v729 = vadd.f32 %v579, %v728
        %730 = vmatmul.bf16.gmra.mxu0 %v695
        %v731 = vpop.f32.mrf.mxu0
        %v732 = vadd.f32 %v584, %v731
        %v733 = vpop.f32.mrf.mxu0
        %v734 = vadd.f32 %v589, %v733
        %735 = vmatmul.bf16.gmra.mxu0 %v698
        %v736 = vpop.f32.mrf.mxu0
        %v737 = vadd.f32 %v594, %v736
        %v738 = vpop.f32.mrf.mxu0
        %v739 = vadd.f32 %v599, %v738
        %740 = vmatmul.bf16.gmra.mxu0 %v701
        %v741 = vpop.f32.mrf.mxu0
        %v742 = vadd.f32 %v604, %v741
        %v743 = vpop.f32.mrf.mxu0
        %v744 = vadd.f32 %v609, %v743
        %745 = vmatmul.bf16.gmra.mxu0 %v704
        %v746 = vpop.f32.mrf.mxu0
        %v747 = vadd.f32 %v614, %v746
        %v748 = vpop.f32.mrf.mxu0
        %v749 = vadd.f32 %v619, %v748
        %750 = vmatmul.bf16.gmra.mxu0 %v707
        %v751 = vpop.f32.mrf.mxu0
        %v752 = vadd.f32 %v624, %v751
        %v753 = vpop.f32.mrf.mxu0
        %v754 = vadd.f32 %v629, %v753
        %755 = vmatmul.bf16.gmra.mxu0 %v710
        %v756 = vpop.f32.mrf.mxu0
        %v757 = vadd.f32 %v634, %v756
        %v758 = vpop.f32.mrf.mxu0
        %v759 = vadd.f32 %v639, %v758
        %760 = vdwg.mxu0
        %v763 = vunpack.c.l.b16 %v527
        %v764 = vunpack.c.l.b16 %v528
        %v765 = vpack.c.b16 %v764, %v763
        %767 = vmatpush.bf16.msra.mxu0 0
        %768 = vmatpush.bf16.msra.mxu0 0
        %769 = vmatpush.bf16.msra.mxu0 0
        %770 = vmatpush.bf16.msra.mxu0 0
        %771 = vmatpush.bf16.msra.mxu0 0
        %772 = vmatpush.bf16.msra.mxu0 0
        %773 = vmatpush.bf16.msra.mxu0 0
        %774 = vmatpush.bf16.msra.mxu0 %v765
        %775 = vmatmul.bf16.gmra.mxu0 %v689
        %v776 = vpop.f32.mrf.mxu0
        %v777 = vadd.f32 %v564, %v776
        %v778 = vpop.f32.mrf.mxu0
        %v779 = vadd.f32 %v569, %v778
        %780 = vmatmul.bf16.gmra.mxu0 %v692
        %v781 = vpop.f32.mrf.mxu0
        %v782 = vadd.f32 %v574, %v781
        %v783 = vpop.f32.mrf.mxu0
        %v784 = vadd.f32 %v579, %v783
        %785 = vmatmul.bf16.gmra.mxu0 %v695
        %v786 = vpop.f32.mrf.mxu0
        %v787 = vadd.f32 %v584, %v786
        %v788 = vpop.f32.mrf.mxu0
        %v789 = vadd.f32 %v589, %v788
        %790 = vmatmul.bf16.gmra.mxu0 %v698
        %v791 = vpop.f32.mrf.mxu0
        %v792 = vadd.f32 %v594, %v791
        %v793 = vpop.f32.mrf.mxu0
        %v794 = vadd.f32 %v599, %v793
        %795 = vmatmul.bf16.gmra.mxu0 %v701
        %v796 = vpop.f32.mrf.mxu0
        %v797 = vadd.f32 %v604, %v796
        %v798 = vpop.f32.mrf.mxu0
        %v799 = vadd.f32 %v609, %v798
        %800 = vmatmul.bf16.gmra.mxu0 %v704
        %v801 = vpop.f32.mrf.mxu0
        %v802 = vadd.f32 %v614, %v801
        %v803 = vpop.f32.mrf.mxu0
        %v804 = vadd.f32 %v619, %v803
        %805 = vmatmul.bf16.gmra.mxu0 %v707
        %v806 = vpop.f32.mrf.mxu0
        %v807 = vadd.f32 %v624, %v806
        %v808 = vpop.f32.mrf.mxu0
        %v809 = vadd.f32 %v629, %v808
        %810 = vmatmul.bf16.gmra.mxu0 %v710
        %v811 = vpop.f32.mrf.mxu0
        %v812 = vadd.f32 %v634, %v811
        %v813 = vpop.f32.mrf.mxu0
        %v814 = vadd.f32 %v639, %v813
        %815 = vdwg.mxu0
        %v816 = vpack.c.bf16 %v722, %v722
        %v817 = vpack.c.bf16 %v724, %v724
        %v818 = vpack.c.bf16 %v727, %v727
        %v819 = vpack.c.bf16 %v729, %v729
        %v820 = vpack.c.bf16 %v732, %v732
        %v821 = vpack.c.bf16 %v734, %v734
        %v822 = vpack.c.bf16 %v737, %v737
        %v823 = vpack.c.bf16 %v739, %v739
        %v824 = vpack.c.bf16 %v742, %v742
        %v825 = vpack.c.bf16 %v744, %v744
        %v826 = vpack.c.bf16 %v747, %v747
        %v827 = vpack.c.bf16 %v749, %v749
        %v828 = vpack.c.bf16 %v752, %v752
        %v829 = vpack.c.bf16 %v754, %v754
        %v830 = vpack.c.bf16 %v757, %v757
        %v831 = vpack.c.bf16 %v759, %v759
        %v832 = vpack.c.bf16 %v777, %v777
        %v833 = vpack.c.bf16 %v779, %v779
        %v834 = vpack.c.bf16 %v782, %v782
        %v835 = vpack.c.bf16 %v784, %v784
        %v836 = vpack.c.bf16 %v787, %v787
        %v837 = vpack.c.bf16 %v789, %v789
        %v838 = vpack.c.bf16 %v792, %v792
        %v839 = vpack.c.bf16 %v794, %v794
        %v840 = vpack.c.bf16 %v797, %v797
        %v841 = vpack.c.bf16 %v799, %v799
        %v842 = vpack.c.bf16 %v802, %v802
        %v843 = vpack.c.bf16 %v804, %v804
        %v844 = vpack.c.bf16 %v807, %v807
        %v845 = vpack.c.bf16 %v809, %v809
        %v846 = vpack.c.bf16 %v812, %v812
        %v847 = vpack.c.bf16 %v814, %v814
        %v848 = vunpack.c.l.bf16 %v816
        %v849 = vunpack.c.l.bf16 %v817
        %v850 = vunpack.c.l.bf16 %v818
        %v851 = vunpack.c.l.bf16 %v819
        %v852 = vunpack.c.l.bf16 %v820
        %v853 = vunpack.c.l.bf16 %v821
        %v854 = vunpack.c.l.bf16 %v822
        %v855 = vunpack.c.l.bf16 %v823
        %v856 = vunpack.c.l.bf16 %v824
        %v857 = vunpack.c.l.bf16 %v825
        %v858 = vunpack.c.l.bf16 %v826
        %v859 = vunpack.c.l.bf16 %v827
        %v860 = vunpack.c.l.bf16 %v828
        %v861 = vunpack.c.l.bf16 %v829
        %v862 = vunpack.c.l.bf16 %v830
        %v863 = vunpack.c.l.bf16 %v831
        %v864 = vunpack.c.l.bf16 %v832
        %v865 = vunpack.c.l.bf16 %v833
        %v866 = vunpack.c.l.bf16 %v834
        %v867 = vunpack.c.l.bf16 %v835
        %v868 = vunpack.c.l.bf16 %v836
        %v869 = vunpack.c.l.bf16 %v837
        %v870 = vunpack.c.l.bf16 %v838
        %v871 = vunpack.c.l.bf16 %v839
        %v872 = vunpack.c.l.bf16 %v840
        %v873 = vunpack.c.l.bf16 %v841
        %v874 = vunpack.c.l.bf16 %v842
        %v875 = vunpack.c.l.bf16 %v843
        %v876 = vunpack.c.l.bf16 %v844
        %v877 = vunpack.c.l.bf16 %v845
        %v878 = vunpack.c.l.bf16 %v846
        %v879 = vunpack.c.l.bf16 %v847
        %v880 = vmul.f32 %v848, 0.5
        %v881 = vmul.f32 %v849, 0.5
        %v882 = vmul.f32 %v850, 0.5
        %v883 = vmul.f32 %v851, 0.5
        %v884 = vmul.f32 %v852, 0.5
        %v885 = vmul.f32 %v853, 0.5
        %v886 = vmul.f32 %v854, 0.5
        %v887 = vmul.f32 %v855, 0.5
        %v888 = vmul.f32 %v856, 0.5
        %v889 = vmul.f32 %v857, 0.5
        %v890 = vmul.f32 %v858, 0.5
        %v891 = vmul.f32 %v859, 0.5
        %v892 = vmul.f32 %v860, 0.5
        %v893 = vmul.f32 %v861, 0.5
        %v894 = vmul.f32 %v862, 0.5
        %v895 = vmul.f32 %v863, 0.5
        %v896 = vmul.f32 %v864, 0.5
        %v897 = vmul.f32 %v865, 0.5
        %v898 = vmul.f32 %v866, 0.5
        %v899 = vmul.f32 %v867, 0.5
        %v900 = vmul.f32 %v868, 0.5
        %v901 = vmul.f32 %v869, 0.5
        %v902 = vmul.f32 %v870, 0.5
        %v903 = vmul.f32 %v871, 0.5
        %v904 = vmul.f32 %v872, 0.5
        %v905 = vmul.f32 %v873, 0.5
        %v906 = vmul.f32 %v874, 0.5
        %v907 = vmul.f32 %v875, 0.5
        %v908 = vmul.f32 %v876, 0.5
        %v909 = vmul.f32 %v877, 0.5
        %v910 = vmul.f32 %v878, 0.5
        %v911 = vmul.f32 %v879, 0.5
        %v912 = vpack.c.bf16 %v880, %v880
        %v913 = vpack.c.bf16 %v881, %v881
        %v914 = vpack.c.bf16 %v882, %v882
        %v915 = vpack.c.bf16 %v883, %v883
        %v916 = vpack.c.bf16 %v884, %v884
        %v917 = vpack.c.bf16 %v885, %v885
        %v918 = vpack.c.bf16 %v886, %v886
        %v919 = vpack.c.bf16 %v887, %v887
        %v920 = vpack.c.bf16 %v888, %v888
        %v921 = vpack.c.bf16 %v889, %v889
        %v922 = vpack.c.bf16 %v890, %v890
        %v923 = vpack.c.bf16 %v891, %v891
        %v924 = vpack.c.bf16 %v892, %v892
        %v925 = vpack.c.bf16 %v893, %v893
        %v926 = vpack.c.bf16 %v894, %v894
        %v927 = vpack.c.bf16 %v895, %v895
        %v928 = vpack.c.bf16 %v896, %v896
        %v929 = vpack.c.bf16 %v897, %v897
        %v930 = vpack.c.bf16 %v898, %v898
        %v931 = vpack.c.bf16 %v899, %v899
        %v932 = vpack.c.bf16 %v900, %v900
        %v933 = vpack.c.bf16 %v901, %v901
        %v934 = vpack.c.bf16 %v902, %v902
        %v935 = vpack.c.bf16 %v903, %v903
        %v936 = vpack.c.bf16 %v904, %v904
        %v937 = vpack.c.bf16 %v905, %v905
        %v938 = vpack.c.bf16 %v906, %v906
        %v939 = vpack.c.bf16 %v907, %v907
        %v940 = vpack.c.bf16 %v908, %v908
        %v941 = vpack.c.bf16 %v909, %v909
        %v942 = vpack.c.bf16 %v910, %v910
        %v943 = vpack.c.bf16 %v911, %v911
        %v944 = vmul.f32 %v848, 0.044677734
        %v945 = vmul.f32 %v849, 0.044677734
        %v946 = vmul.f32 %v850, 0.044677734
        %v947 = vmul.f32 %v851, 0.044677734
        %v948 = vmul.f32 %v852, 0.044677734
        %v949 = vmul.f32 %v853, 0.044677734
        %v950 = vmul.f32 %v854, 0.044677734
        %v951 = vmul.f32 %v855, 0.044677734
        %v952 = vmul.f32 %v856, 0.044677734
        %v953 = vmul.f32 %v857, 0.044677734
        %v954 = vmul.f32 %v858, 0.044677734
        %v955 = vmul.f32 %v859, 0.044677734
        %v956 = vmul.f32 %v860, 0.044677734
        %v957 = vmul.f32 %v861, 0.044677734
        %v958 = vmul.f32 %v862, 0.044677734
        %v959 = vmul.f32 %v863, 0.044677734
        %v960 = vmul.f32 %v864, 0.044677734
        %v961 = vmul.f32 %v865, 0.044677734
        %v962 = vmul.f32 %v866, 0.044677734
        %v963 = vmul.f32 %v867, 0.044677734
        %v964 = vmul.f32 %v868, 0.044677734
        %v965 = vmul.f32 %v869, 0.044677734
        %v966 = vmul.f32 %v870, 0.044677734
        %v967 = vmul.f32 %v871, 0.044677734
        %v968 = vmul.f32 %v872, 0.044677734
        %v969 = vmul.f32 %v873, 0.044677734
        %v970 = vmul.f32 %v874, 0.044677734
        %v971 = vmul.f32 %v875, 0.044677734
        %v972 = vmul.f32 %v876, 0.044677734
        %v973 = vmul.f32 %v877, 0.044677734
        %v974 = vmul.f32 %v878, 0.044677734
        %v975 = vmul.f32 %v879, 0.044677734
        %v976 = vpack.c.bf16 %v944, %v944
        %v977 = vpack.c.bf16 %v945, %v945
        %v978 = vpack.c.bf16 %v946, %v946
        %v979 = vpack.c.bf16 %v947, %v947
        %v980 = vpack.c.bf16 %v948, %v948
        %v981 = vpack.c.bf16 %v949, %v949
        %v982 = vpack.c.bf16 %v950, %v950
        %v983 = vpack.c.bf16 %v951, %v951
        %v984 = vpack.c.bf16 %v952, %v952
        %v985 = vpack.c.bf16 %v953, %v953
        %v986 = vpack.c.bf16 %v954, %v954
        %v987 = vpack.c.bf16 %v955, %v955
        %v988 = vpack.c.bf16 %v956, %v956
        %v989 = vpack.c.bf16 %v957, %v957
        %v990 = vpack.c.bf16 %v958, %v958
        %v991 = vpack.c.bf16 %v959, %v959
        %v992 = vpack.c.bf16 %v960, %v960
        %v993 = vpack.c.bf16 %v961, %v961
        %v994 = vpack.c.bf16 %v962, %v962
        %v995 = vpack.c.bf16 %v963, %v963
        %v996 = vpack.c.bf16 %v964, %v964
        %v997 = vpack.c.bf16 %v965, %v965
        %v998 = vpack.c.bf16 %v966, %v966
        %v999 = vpack.c.bf16 %v967, %v967
        %v1000 = vpack.c.bf16 %v968, %v968
        %v1001 = vpack.c.bf16 %v969, %v969
        %v1002 = vpack.c.bf16 %v970, %v970
        %v1003 = vpack.c.bf16 %v971, %v971
        %v1004 = vpack.c.bf16 %v972, %v972
        %v1005 = vpack.c.bf16 %v973, %v973
        %v1006 = vpack.c.bf16 %v974, %v974
        %v1007 = vpack.c.bf16 %v975, %v975
        %v1008 = vunpack.c.l.bf16 %v976
        %v1009 = vunpack.c.l.bf16 %v977
        %v1010 = vunpack.c.l.bf16 %v978
        %v1011 = vunpack.c.l.bf16 %v979
        %v1012 = vunpack.c.l.bf16 %v980
        %v1013 = vunpack.c.l.bf16 %v981
        %v1014 = vunpack.c.l.bf16 %v982
        %v1015 = vunpack.c.l.bf16 %v983
        %v1016 = vunpack.c.l.bf16 %v984
        %v1017 = vunpack.c.l.bf16 %v985
        %v1018 = vunpack.c.l.bf16 %v986
        %v1019 = vunpack.c.l.bf16 %v987
        %v1020 = vunpack.c.l.bf16 %v988
        %v1021 = vunpack.c.l.bf16 %v989
        %v1022 = vunpack.c.l.bf16 %v990
        %v1023 = vunpack.c.l.bf16 %v991
        %v1024 = vunpack.c.l.bf16 %v992
        %v1025 = vunpack.c.l.bf16 %v993
        %v1026 = vunpack.c.l.bf16 %v994
        %v1027 = vunpack.c.l.bf16 %v995
        %v1028 = vunpack.c.l.bf16 %v996
        %v1029 = vunpack.c.l.bf16 %v997
        %v1030 = vunpack.c.l.bf16 %v998
        %v1031 = vunpack.c.l.bf16 %v999
        %v1032 = vunpack.c.l.bf16 %v1000
        %v1033 = vunpack.c.l.bf16 %v1001
        %v1034 = vunpack.c.l.bf16 %v1002
        %v1035 = vunpack.c.l.bf16 %v1003
        %v1036 = vunpack.c.l.bf16 %v1004
        %v1037 = vunpack.c.l.bf16 %v1005
        %v1038 = vunpack.c.l.bf16 %v1006
        %v1039 = vunpack.c.l.bf16 %v1007
        %v1040 = vmul.f32 %v1008, %v848
        %v1041 = vmul.f32 %v1009, %v849
        %v1042 = vmul.f32 %v1010, %v850
        %v1043 = vmul.f32 %v1011, %v851
        %v1044 = vmul.f32 %v1012, %v852
        %v1045 = vmul.f32 %v1013, %v853
        %v1046 = vmul.f32 %v1014, %v854
        %v1047 = vmul.f32 %v1015, %v855
        %v1048 = vmul.f32 %v1016, %v856
        %v1049 = vmul.f32 %v1017, %v857
        %v1050 = vmul.f32 %v1018, %v858
        %v1051 = vmul.f32 %v1019, %v859
        %v1052 = vmul.f32 %v1020, %v860
        %v1053 = vmul.f32 %v1021, %v861
        %v1054 = vmul.f32 %v1022, %v862
        %v1055 = vmul.f32 %v1023, %v863
        %v1056 = vmul.f32 %v1024, %v864
        %v1057 = vmul.f32 %v1025, %v865
        %v1058 = vmul.f32 %v1026, %v866
        %v1059 = vmul.f32 %v1027, %v867
        %v1060 = vmul.f32 %v1028, %v868
        %v1061 = vmul.f32 %v1029, %v869
        %v1062 = vmul.f32 %v1030, %v870
        %v1063 = vmul.f32 %v1031, %v871
        %v1064 = vmul.f32 %v1032, %v872
        %v1065 = vmul.f32 %v1033, %v873
        %v1066 = vmul.f32 %v1034, %v874
        %v1067 = vmul.f32 %v1035, %v875
        %v1068 = vmul.f32 %v1036, %v876
        %v1069 = vmul.f32 %v1037, %v877
        %v1070 = vmul.f32 %v1038, %v878
        %v1071 = vmul.f32 %v1039, %v879
        %v1072 = vpack.c.bf16 %v1040, %v1040
        %v1073 = vpack.c.bf16 %v1041, %v1041
        %v1074 = vpack.c.bf16 %v1042, %v1042
        %v1075 = vpack.c.bf16 %v1043, %v1043
        %v1076 = vpack.c.bf16 %v1044, %v1044
        %v1077 = vpack.c.bf16 %v1045, %v1045
        %v1078 = vpack.c.bf16 %v1046, %v1046
        %v1079 = vpack.c.bf16 %v1047, %v1047
        %v1080 = vpack.c.bf16 %v1048, %v1048
        %v1081 = vpack.c.bf16 %v1049, %v1049
        %v1082 = vpack.c.bf16 %v1050, %v1050
        %v1083 = vpack.c.bf16 %v1051, %v1051
        %v1084 = vpack.c.bf16 %v1052, %v1052
        %v1085 = vpack.c.bf16 %v1053, %v1053
        %v1086 = vpack.c.bf16 %v1054, %v1054
        %v1087 = vpack.c.bf16 %v1055, %v1055
        %v1088 = vpack.c.bf16 %v1056, %v1056
        %v1089 = vpack.c.bf16 %v1057, %v1057
        %v1090 = vpack.c.bf16 %v1058, %v1058
        %v1091 = vpack.c.bf16 %v1059, %v1059
        %v1092 = vpack.c.bf16 %v1060, %v1060
        %v1093 = vpack.c.bf16 %v1061, %v1061
        %v1094 = vpack.c.bf16 %v1062, %v1062
        %v1095 = vpack.c.bf16 %v1063, %v1063
        %v1096 = vpack.c.bf16 %v1064, %v1064
        %v1097 = vpack.c.bf16 %v1065, %v1065
        %v1098 = vpack.c.bf16 %v1066, %v1066
        %v1099 = vpack.c.bf16 %v1067, %v1067
        %v1100 = vpack.c.bf16 %v1068, %v1068
        %v1101 = vpack.c.bf16 %v1069, %v1069
        %v1102 = vpack.c.bf16 %v1070, %v1070
        %v1103 = vpack.c.bf16 %v1071, %v1071
        %v1104 = vunpack.c.l.bf16 %v1072
        %v1105 = vunpack.c.l.bf16 %v1073
        %v1106 = vunpack.c.l.bf16 %v1074
        %v1107 = vunpack.c.l.bf16 %v1075
        %v1108 = vunpack.c.l.bf16 %v1076
        %v1109 = vunpack.c.l.bf16 %v1077
        %v1110 = vunpack.c.l.bf16 %v1078
        %v1111 = vunpack.c.l.bf16 %v1079
        %v1112 = vunpack.c.l.bf16 %v1080
        %v1113 = vunpack.c.l.bf16 %v1081
        %v1114 = vunpack.c.l.bf16 %v1082
        %v1115 = vunpack.c.l.bf16 %v1083
        %v1116 = vunpack.c.l.bf16 %v1084
        %v1117 = vunpack.c.l.bf16 %v1085
        %v1118 = vunpack.c.l.bf16 %v1086
        %v1119 = vunpack.c.l.bf16 %v1087
        %v1120 = vunpack.c.l.bf16 %v1088
        %v1121 = vunpack.c.l.bf16 %v1089
        %v1122 = vunpack.c.l.bf16 %v1090
        %v1123 = vunpack.c.l.bf16 %v1091
        %v1124 = vunpack.c.l.bf16 %v1092
        %v1125 = vunpack.c.l.bf16 %v1093
        %v1126 = vunpack.c.l.bf16 %v1094
        %v1127 = vunpack.c.l.bf16 %v1095
        %v1128 = vunpack.c.l.bf16 %v1096
        %v1129 = vunpack.c.l.bf16 %v1097
        %v1130 = vunpack.c.l.bf16 %v1098
        %v1131 = vunpack.c.l.bf16 %v1099
        %v1132 = vunpack.c.l.bf16 %v1100
        %v1133 = vunpack.c.l.bf16 %v1101
        %v1134 = vunpack.c.l.bf16 %v1102
        %v1135 = vunpack.c.l.bf16 %v1103
        %v1136 = vmul.f32 %v1104, %v848
        %v1137 = vmul.f32 %v1105, %v849
        %v1138 = vmul.f32 %v1106, %v850
        %v1139 = vmul.f32 %v1107, %v851
        %v1140 = vmul.f32 %v1108, %v852
        %v1141 = vmul.f32 %v1109, %v853
        %v1142 = vmul.f32 %v1110, %v854
        %v1143 = vmul.f32 %v1111, %v855
        %v1144 = vmul.f32 %v1112, %v856
        %v1145 = vmul.f32 %v1113, %v857
        %v1146 = vmul.f32 %v1114, %v858
        %v1147 = vmul.f32 %v1115, %v859
        %v1148 = vmul.f32 %v1116, %v860
        %v1149 = vmul.f32 %v1117, %v861
        %v1150 = vmul.f32 %v1118, %v862
        %v1151 = vmul.f32 %v1119, %v863
        %v1152 = vmul.f32 %v1120, %v864
        %v1153 = vmul.f32 %v1121, %v865
        %v1154 = vmul.f32 %v1122, %v866
        %v1155 = vmul.f32 %v1123, %v867
        %v1156 = vmul.f32 %v1124, %v868
        %v1157 = vmul.f32 %v1125, %v869
        %v1158 = vmul.f32 %v1126, %v870
        %v1159 = vmul.f32 %v1127, %v871
        %v1160 = vmul.f32 %v1128, %v872
        %v1161 = vmul.f32 %v1129, %v873
        %v1162 = vmul.f32 %v1130, %v874
        %v1163 = vmul.f32 %v1131, %v875
        %v1164 = vmul.f32 %v1132, %v876
        %v1165 = vmul.f32 %v1133, %v877
        %v1166 = vmul.f32 %v1134, %v878
        %v1167 = vmul.f32 %v1135, %v879
        %v1168 = vpack.c.bf16 %v1136, %v1136
        %v1169 = vpack.c.bf16 %v1137, %v1137
        %v1170 = vpack.c.bf16 %v1138, %v1138
        %v1171 = vpack.c.bf16 %v1139, %v1139
        %v1172 = vpack.c.bf16 %v1140, %v1140
        %v1173 = vpack.c.bf16 %v1141, %v1141
        %v1174 = vpack.c.bf16 %v1142, %v1142
        %v1175 = vpack.c.bf16 %v1143, %v1143
        %v1176 = vpack.c.bf16 %v1144, %v1144
        %v1177 = vpack.c.bf16 %v1145, %v1145
        %v1178 = vpack.c.bf16 %v1146, %v1146
        %v1179 = vpack.c.bf16 %v1147, %v1147
        %v1180 = vpack.c.bf16 %v1148, %v1148
        %v1181 = vpack.c.bf16 %v1149, %v1149
        %v1182 = vpack.c.bf16 %v1150, %v1150
        %v1183 = vpack.c.bf16 %v1151, %v1151
        %v1184 = vpack.c.bf16 %v1152, %v1152
        %v1185 = vpack.c.bf16 %v1153, %v1153
        %v1186 = vpack.c.bf16 %v1154, %v1154
        %v1187 = vpack.c.bf16 %v1155, %v1155
        %v1188 = vpack.c.bf16 %v1156, %v1156
        %v1189 = vpack.c.bf16 %v1157, %v1157
        %v1190 = vpack.c.bf16 %v1158, %v1158
        %v1191 = vpack.c.bf16 %v1159, %v1159
        %v1192 = vpack.c.bf16 %v1160, %v1160
        %v1193 = vpack.c.bf16 %v1161, %v1161
        %v1194 = vpack.c.bf16 %v1162, %v1162
        %v1195 = vpack.c.bf16 %v1163, %v1163
        %v1196 = vpack.c.bf16 %v1164, %v1164
        %v1197 = vpack.c.bf16 %v1165, %v1165
        %v1198 = vpack.c.bf16 %v1166, %v1166
        %v1199 = vpack.c.bf16 %v1167, %v1167
        %v1200 = vunpack.c.l.bf16 %v1168
        %v1201 = vunpack.c.l.bf16 %v1169
        %v1202 = vunpack.c.l.bf16 %v1170
        %v1203 = vunpack.c.l.bf16 %v1171
        %v1204 = vunpack.c.l.bf16 %v1172
        %v1205 = vunpack.c.l.bf16 %v1173
        %v1206 = vunpack.c.l.bf16 %v1174
        %v1207 = vunpack.c.l.bf16 %v1175
        %v1208 = vunpack.c.l.bf16 %v1176
        %v1209 = vunpack.c.l.bf16 %v1177
        %v1210 = vunpack.c.l.bf16 %v1178
        %v1211 = vunpack.c.l.bf16 %v1179
        %v1212 = vunpack.c.l.bf16 %v1180
        %v1213 = vunpack.c.l.bf16 %v1181
        %v1214 = vunpack.c.l.bf16 %v1182
        %v1215 = vunpack.c.l.bf16 %v1183
        %v1216 = vunpack.c.l.bf16 %v1184
        %v1217 = vunpack.c.l.bf16 %v1185
        %v1218 = vunpack.c.l.bf16 %v1186
        %v1219 = vunpack.c.l.bf16 %v1187
        %v1220 = vunpack.c.l.bf16 %v1188
        %v1221 = vunpack.c.l.bf16 %v1189
        %v1222 = vunpack.c.l.bf16 %v1190
        %v1223 = vunpack.c.l.bf16 %v1191
        %v1224 = vunpack.c.l.bf16 %v1192
        %v1225 = vunpack.c.l.bf16 %v1193
        %v1226 = vunpack.c.l.bf16 %v1194
        %v1227 = vunpack.c.l.bf16 %v1195
        %v1228 = vunpack.c.l.bf16 %v1196
        %v1229 = vunpack.c.l.bf16 %v1197
        %v1230 = vunpack.c.l.bf16 %v1198
        %v1231 = vunpack.c.l.bf16 %v1199
        %v1232 = vadd.f32 %v848, %v1200
        %v1233 = vadd.f32 %v849, %v1201
        %v1234 = vadd.f32 %v850, %v1202
        %v1235 = vadd.f32 %v851, %v1203
        %v1236 = vadd.f32 %v852, %v1204
        %v1237 = vadd.f32 %v853, %v1205
        %v1238 = vadd.f32 %v854, %v1206
        %v1239 = vadd.f32 %v855, %v1207
        %v1240 = vadd.f32 %v856, %v1208
        %v1241 = vadd.f32 %v857, %v1209
        %v1242 = vadd.f32 %v858, %v1210
        %v1243 = vadd.f32 %v859, %v1211
        %v1244 = vadd.f32 %v860, %v1212
        %v1245 = vadd.f32 %v861, %v1213
        %v1246 = vadd.f32 %v862, %v1214
        %v1247 = vadd.f32 %v863, %v1215
        %v1248 = vadd.f32 %v864, %v1216
        %v1249 = vadd.f32 %v865, %v1217
        %v1250 = vadd.f32 %v866, %v1218
        %v1251 = vadd.f32 %v867, %v1219
        %v1252 = vadd.f32 %v868, %v1220
        %v1253 = vadd.f32 %v869, %v1221
        %v1254 = vadd.f32 %v870, %v1222
        %v1255 = vadd.f32 %v871, %v1223
        %v1256 = vadd.f32 %v872, %v1224
        %v1257 = vadd.f32 %v873, %v1225
        %v1258 = vadd.f32 %v874, %v1226
        %v1259 = vadd.f32 %v875, %v1227
        %v1260 = vadd.f32 %v876, %v1228
        %v1261 = vadd.f32 %v877, %v1229
        %v1262 = vadd.f32 %v878, %v1230
        %v1263 = vadd.f32 %v879, %v1231
        %v1264 = vpack.c.bf16 %v1232, %v1232
        %v1265 = vpack.c.bf16 %v1233, %v1233
        %v1266 = vpack.c.bf16 %v1234, %v1234
        %v1267 = vpack.c.bf16 %v1235, %v1235
        %v1268 = vpack.c.bf16 %v1236, %v1236
        %v1269 = vpack.c.bf16 %v1237, %v1237
        %v1270 = vpack.c.bf16 %v1238, %v1238
        %v1271 = vpack.c.bf16 %v1239, %v1239
        %v1272 = vpack.c.bf16 %v1240, %v1240
        %v1273 = vpack.c.bf16 %v1241, %v1241
        %v1274 = vpack.c.bf16 %v1242, %v1242
        %v1275 = vpack.c.bf16 %v1243, %v1243
        %v1276 = vpack.c.bf16 %v1244, %v1244
        %v1277 = vpack.c.bf16 %v1245, %v1245
        %v1278 = vpack.c.bf16 %v1246, %v1246
        %v1279 = vpack.c.bf16 %v1247, %v1247
        %v1280 = vpack.c.bf16 %v1248, %v1248
        %v1281 = vpack.c.bf16 %v1249, %v1249
        %v1282 = vpack.c.bf16 %v1250, %v1250
        %v1283 = vpack.c.bf16 %v1251, %v1251
        %v1284 = vpack.c.bf16 %v1252, %v1252
        %v1285 = vpack.c.bf16 %v1253, %v1253
        %v1286 = vpack.c.bf16 %v1254, %v1254
        %v1287 = vpack.c.bf16 %v1255, %v1255
        %v1288 = vpack.c.bf16 %v1256, %v1256
        %v1289 = vpack.c.bf16 %v1257, %v1257
        %v1290 = vpack.c.bf16 %v1258, %v1258
        %v1291 = vpack.c.bf16 %v1259, %v1259
        %v1292 = vpack.c.bf16 %v1260, %v1260
        %v1293 = vpack.c.bf16 %v1261, %v1261
        %v1294 = vpack.c.bf16 %v1262, %v1262
        %v1295 = vpack.c.bf16 %v1263, %v1263
        %v1296 = vunpack.c.l.bf16 %v1264
        %v1297 = vunpack.c.l.bf16 %v1265
        %v1298 = vunpack.c.l.bf16 %v1266
        %v1299 = vunpack.c.l.bf16 %v1267
        %v1300 = vunpack.c.l.bf16 %v1268
        %v1301 = vunpack.c.l.bf16 %v1269
        %v1302 = vunpack.c.l.bf16 %v1270
        %v1303 = vunpack.c.l.bf16 %v1271
        %v1304 = vunpack.c.l.bf16 %v1272
        %v1305 = vunpack.c.l.bf16 %v1273
        %v1306 = vunpack.c.l.bf16 %v1274
        %v1307 = vunpack.c.l.bf16 %v1275
        %v1308 = vunpack.c.l.bf16 %v1276
        %v1309 = vunpack.c.l.bf16 %v1277
        %v1310 = vunpack.c.l.bf16 %v1278
        %v1311 = vunpack.c.l.bf16 %v1279
        %v1312 = vunpack.c.l.bf16 %v1280
        %v1313 = vunpack.c.l.bf16 %v1281
        %v1314 = vunpack.c.l.bf16 %v1282
        %v1315 = vunpack.c.l.bf16 %v1283
        %v1316 = vunpack.c.l.bf16 %v1284
        %v1317 = vunpack.c.l.bf16 %v1285
        %v1318 = vunpack.c.l.bf16 %v1286
        %v1319 = vunpack.c.l.bf16 %v1287
        %v1320 = vunpack.c.l.bf16 %v1288
        %v1321 = vunpack.c.l.bf16 %v1289
        %v1322 = vunpack.c.l.bf16 %v1290
        %v1323 = vunpack.c.l.bf16 %v1291
        %v1324 = vunpack.c.l.bf16 %v1292
        %v1325 = vunpack.c.l.bf16 %v1293
        %v1326 = vunpack.c.l.bf16 %v1294
        %v1327 = vunpack.c.l.bf16 %v1295
        %v1328 = vmul.f32 %v1296, 0.796875
        %v1329 = vmul.f32 %v1297, 0.796875
        %v1330 = vmul.f32 %v1298, 0.796875
        %v1331 = vmul.f32 %v1299, 0.796875
        %v1332 = vmul.f32 %v1300, 0.796875
        %v1333 = vmul.f32 %v1301, 0.796875
        %v1334 = vmul.f32 %v1302, 0.796875
        %v1335 = vmul.f32 %v1303, 0.796875
        %v1336 = vmul.f32 %v1304, 0.796875
        %v1337 = vmul.f32 %v1305, 0.796875
        %v1338 = vmul.f32 %v1306, 0.796875
        %v1339 = vmul.f32 %v1307, 0.796875
        %v1340 = vmul.f32 %v1308, 0.796875
        %v1341 = vmul.f32 %v1309, 0.796875
        %v1342 = vmul.f32 %v1310, 0.796875
        %v1343 = vmul.f32 %v1311, 0.796875
        %v1344 = vmul.f32 %v1312, 0.796875
        %v1345 = vmul.f32 %v1313, 0.796875
        %v1346 = vmul.f32 %v1314, 0.796875
        %v1347 = vmul.f32 %v1315, 0.796875
        %v1348 = vmul.f32 %v1316, 0.796875
        %v1349 = vmul.f32 %v1317, 0.796875
        %v1350 = vmul.f32 %v1318, 0.796875
        %v1351 = vmul.f32 %v1319, 0.796875
        %v1352 = vmul.f32 %v1320, 0.796875
        %v1353 = vmul.f32 %v1321, 0.796875
        %v1354 = vmul.f32 %v1322, 0.796875
        %v1355 = vmul.f32 %v1323, 0.796875
        %v1356 = vmul.f32 %v1324, 0.796875
        %v1357 = vmul.f32 %v1325, 0.796875
        %v1358 = vmul.f32 %v1326, 0.796875
        %v1359 = vmul.f32 %v1327, 0.796875
        %v1360 = vpack.c.bf16 %v1328, %v1328
        %v1361 = vpack.c.bf16 %v1329, %v1329
        %v1362 = vpack.c.bf16 %v1330, %v1330
        %v1363 = vpack.c.bf16 %v1331, %v1331
        %v1364 = vpack.c.bf16 %v1332, %v1332
        %v1365 = vpack.c.bf16 %v1333, %v1333
        %v1366 = vpack.c.bf16 %v1334, %v1334
        %v1367 = vpack.c.bf16 %v1335, %v1335
        %v1368 = vpack.c.bf16 %v1336, %v1336
        %v1369 = vpack.c.bf16 %v1337, %v1337
        %v1370 = vpack.c.bf16 %v1338, %v1338
        %v1371 = vpack.c.bf16 %v1339, %v1339
        %v1372 = vpack.c.bf16 %v1340, %v1340
        %v1373 = vpack.c.bf16 %v1341, %v1341
        %v1374 = vpack.c.bf16 %v1342, %v1342
        %v1375 = vpack.c.bf16 %v1343, %v1343
        %v1376 = vpack.c.bf16 %v1344, %v1344
        %v1377 = vpack.c.bf16 %v1345, %v1345
        %v1378 = vpack.c.bf16 %v1346, %v1346
        %v1379 = vpack.c.bf16 %v1347, %v1347
        %v1380 = vpack.c.bf16 %v1348, %v1348
        %v1381 = vpack.c.bf16 %v1349, %v1349
        %v1382 = vpack.c.bf16 %v1350, %v1350
        %v1383 = vpack.c.bf16 %v1351, %v1351
        %v1384 = vpack.c.bf16 %v1352, %v1352
        %v1385 = vpack.c.bf16 %v1353, %v1353
        %v1386 = vpack.c.bf16 %v1354, %v1354
        %v1387 = vpack.c.bf16 %v1355, %v1355
        %v1388 = vpack.c.bf16 %v1356, %v1356
        %v1389 = vpack.c.bf16 %v1357, %v1357
        %v1390 = vpack.c.bf16 %v1358, %v1358
        %v1391 = vpack.c.bf16 %v1359, %v1359
        %v1392 = vunpack.c.l.bf16 %v1360
        %v1393 = vunpack.c.l.bf16 %v1361
        %v1394 = vunpack.c.l.bf16 %v1362
        %v1395 = vunpack.c.l.bf16 %v1363
        %v1396 = vunpack.c.l.bf16 %v1364
        %v1397 = vunpack.c.l.bf16 %v1365
        %v1398 = vunpack.c.l.bf16 %v1366
        %v1399 = vunpack.c.l.bf16 %v1367
        %v1400 = vunpack.c.l.bf16 %v1368
        %v1401 = vunpack.c.l.bf16 %v1369
        %v1402 = vunpack.c.l.bf16 %v1370
        %v1403 = vunpack.c.l.bf16 %v1371
        %v1404 = vunpack.c.l.bf16 %v1372
        %v1405 = vunpack.c.l.bf16 %v1373
        %v1406 = vunpack.c.l.bf16 %v1374
        %v1407 = vunpack.c.l.bf16 %v1375
        %v1408 = vunpack.c.l.bf16 %v1376
        %v1409 = vunpack.c.l.bf16 %v1377
        %v1410 = vunpack.c.l.bf16 %v1378
        %v1411 = vunpack.c.l.bf16 %v1379
        %v1412 = vunpack.c.l.bf16 %v1380
        %v1413 = vunpack.c.l.bf16 %v1381
        %v1414 = vunpack.c.l.bf16 %v1382
        %v1415 = vunpack.c.l.bf16 %v1383
        %v1416 = vunpack.c.l.bf16 %v1384
        %v1417 = vunpack.c.l.bf16 %v1385
        %v1418 = vunpack.c.l.bf16 %v1386
        %v1419 = vunpack.c.l.bf16 %v1387
        %v1420 = vunpack.c.l.bf16 %v1388
        %v1421 = vunpack.c.l.bf16 %v1389
        %v1422 = vunpack.c.l.bf16 %v1390
        %v1423 = vunpack.c.l.bf16 %v1391
        %v1424 = vtanh.pop %v1392
        %v1425 = vtanh.pop %v1393
        %v1426 = vtanh.pop %v1394
        %v1427 = vtanh.pop %v1395
        %v1428 = vtanh.pop %v1396
        %v1429 = vtanh.pop %v1397
        %v1430 = vtanh.pop %v1398
        %v1431 = vtanh.pop %v1399
        %v1432 = vtanh.pop %v1400
        %v1433 = vtanh.pop %v1401
        %v1434 = vtanh.pop %v1402
        %v1435 = vtanh.pop %v1403
        %v1436 = vtanh.pop %v1404
        %v1437 = vtanh.pop %v1405
        %v1438 = vtanh.pop %v1406
        %v1439 = vtanh.pop %v1407
        %v1440 = vtanh.pop %v1408
        %v1441 = vtanh.pop %v1409
        %v1442 = vtanh.pop %v1410
        %v1443 = vtanh.pop %v1411
        %v1444 = vtanh.pop %v1412
        %v1445 = vtanh.pop %v1413
        %v1446 = vtanh.pop %v1414
        %v1447 = vtanh.pop %v1415
        %v1448 = vtanh.pop %v1416
        %v1449 = vtanh.pop %v1417
        %v1450 = vtanh.pop %v1418
        %v1451 = vtanh.pop %v1419
        %v1452 = vtanh.pop %v1420
        %v1453 = vtanh.pop %v1421
        %v1454 = vtanh.pop %v1422
        %v1455 = vtanh.pop %v1423
        %v1456 = vpack.c.bf16 %v1424, %v1424
        %v1457 = vpack.c.bf16 %v1425, %v1425
        %v1458 = vpack.c.bf16 %v1426, %v1426
        %v1459 = vpack.c.bf16 %v1427, %v1427
        %v1460 = vpack.c.bf16 %v1428, %v1428
        %v1461 = vpack.c.bf16 %v1429, %v1429
        %v1462 = vpack.c.bf16 %v1430, %v1430
        %v1463 = vpack.c.bf16 %v1431, %v1431
        %v1464 = vpack.c.bf16 %v1432, %v1432
        %v1465 = vpack.c.bf16 %v1433, %v1433
        %v1466 = vpack.c.bf16 %v1434, %v1434
        %v1467 = vpack.c.bf16 %v1435, %v1435
        %v1468 = vpack.c.bf16 %v1436, %v1436
        %v1469 = vpack.c.bf16 %v1437, %v1437
        %v1470 = vpack.c.bf16 %v1438, %v1438
        %v1471 = vpack.c.bf16 %v1439, %v1439
        %v1472 = vpack.c.bf16 %v1440, %v1440
        %v1473 = vpack.c.bf16 %v1441, %v1441
        %v1474 = vpack.c.bf16 %v1442, %v1442
        %v1475 = vpack.c.bf16 %v1443, %v1443
        %v1476 = vpack.c.bf16 %v1444, %v1444
        %v1477 = vpack.c.bf16 %v1445, %v1445
        %v1478 = vpack.c.bf16 %v1446, %v1446
        %v1479 = vpack.c.bf16 %v1447, %v1447
        %v1480 = vpack.c.bf16 %v1448, %v1448
        %v1481 = vpack.c.bf16 %v1449, %v1449
        %v1482 = vpack.c.bf16 %v1450, %v1450
        %v1483 = vpack.c.bf16 %v1451, %v1451
        %v1484 = vpack.c.bf16 %v1452, %v1452
        %v1485 = vpack.c.bf16 %v1453, %v1453
        %v1486 = vpack.c.bf16 %v1454, %v1454
        %v1487 = vpack.c.bf16 %v1455, %v1455
        %v1488 = vunpack.c.l.bf16 %v1456
        %v1489 = vunpack.c.l.bf16 %v1457
        %v1490 = vunpack.c.l.bf16 %v1458
        %v1491 = vunpack.c.l.bf16 %v1459
        %v1492 = vunpack.c.l.bf16 %v1460
        %v1493 = vunpack.c.l.bf16 %v1461
        %v1494 = vunpack.c.l.bf16 %v1462
        %v1495 = vunpack.c.l.bf16 %v1463
        %v1496 = vunpack.c.l.bf16 %v1464
        %v1497 = vunpack.c.l.bf16 %v1465
        %v1498 = vunpack.c.l.bf16 %v1466
        %v1499 = vunpack.c.l.bf16 %v1467
        %v1500 = vunpack.c.l.bf16 %v1468
        %v1501 = vunpack.c.l.bf16 %v1469
        %v1502 = vunpack.c.l.bf16 %v1470
        %v1503 = vunpack.c.l.bf16 %v1471
        %v1504 = vunpack.c.l.bf16 %v1472
        %v1505 = vunpack.c.l.bf16 %v1473
        %v1506 = vunpack.c.l.bf16 %v1474
        %v1507 = vunpack.c.l.bf16 %v1475
        %v1508 = vunpack.c.l.bf16 %v1476
        %v1509 = vunpack.c.l.bf16 %v1477
        %v1510 = vunpack.c.l.bf16 %v1478
        %v1511 = vunpack.c.l.bf16 %v1479
        %v1512 = vunpack.c.l.bf16 %v1480
        %v1513 = vunpack.c.l.bf16 %v1481
        %v1514 = vunpack.c.l.bf16 %v1482
        %v1515 = vunpack.c.l.bf16 %v1483
        %v1516 = vunpack.c.l.bf16 %v1484
        %v1517 = vunpack.c.l.bf16 %v1485
        %v1518 = vunpack.c.l.bf16 %v1486
        %v1519 = vunpack.c.l.bf16 %v1487
        %v1520 = vadd.f32 %v1488, 1.0
        %v1521 = vadd.f32 %v1489, 1.0
        %v1522 = vadd.f32 %v1490, 1.0
        %v1523 = vadd.f32 %v1491, 1.0
        %v1524 = vadd.f32 %v1492, 1.0
        %v1525 = vadd.f32 %v1493, 1.0
        %v1526 = vadd.f32 %v1494, 1.0
        %v1527 = vadd.f32 %v1495, 1.0
        %v1528 = vadd.f32 %v1496, 1.0
        %v1529 = vadd.f32 %v1497, 1.0
        %v1530 = vadd.f32 %v1498, 1.0
        %v1531 = vadd.f32 %v1499, 1.0
        %v1532 = vadd.f32 %v1500, 1.0
        %v1533 = vadd.f32 %v1501, 1.0
        %v1534 = vadd.f32 %v1502, 1.0
        %v1535 = vadd.f32 %v1503, 1.0
        %v1536 = vadd.f32 %v1504, 1.0
        %v1537 = vadd.f32 %v1505, 1.0
        %v1538 = vadd.f32 %v1506, 1.0
        %v1539 = vadd.f32 %v1507, 1.0
        %v1540 = vadd.f32 %v1508, 1.0
        %v1541 = vadd.f32 %v1509, 1.0
        %v1542 = vadd.f32 %v1510, 1.0
        %v1543 = vadd.f32 %v1511, 1.0
        %v1544 = vadd.f32 %v1512, 1.0
        %v1545 = vadd.f32 %v1513, 1.0
        %v1546 = vadd.f32 %v1514, 1.0
        %v1547 = vadd.f32 %v1515, 1.0
        %v1548 = vadd.f32 %v1516, 1.0
        %v1549 = vadd.f32 %v1517, 1.0
        %v1550 = vadd.f32 %v1518, 1.0
        %v1551 = vadd.f32 %v1519, 1.0
        %v1552 = vpack.c.bf16 %v1520, %v1520
        %v1553 = vpack.c.bf16 %v1521, %v1521
        %v1554 = vpack.c.bf16 %v1522, %v1522
        %v1555 = vpack.c.bf16 %v1523, %v1523
        %v1556 = vpack.c.bf16 %v1524, %v1524
        %v1557 = vpack.c.bf16 %v1525, %v1525
        %v1558 = vpack.c.bf16 %v1526, %v1526
        %v1559 = vpack.c.bf16 %v1527, %v1527
        %v1560 = vpack.c.bf16 %v1528, %v1528
        %v1561 = vpack.c.bf16 %v1529, %v1529
        %v1562 = vpack.c.bf16 %v1530, %v1530
        %v1563 = vpack.c.bf16 %v1531, %v1531
        %v1564 = vpack.c.bf16 %v1532, %v1532
        %v1565 = vpack.c.bf16 %v1533, %v1533
        %v1566 = vpack.c.bf16 %v1534, %v1534
        %v1567 = vpack.c.bf16 %v1535, %v1535
        %v1568 = vpack.c.bf16 %v1536, %v1536
        %v1569 = vpack.c.bf16 %v1537, %v1537
        %v1570 = vpack.c.bf16 %v1538, %v1538
        %v1571 = vpack.c.bf16 %v1539, %v1539
        %v1572 = vpack.c.bf16 %v1540, %v1540
        %v1573 = vpack.c.bf16 %v1541, %v1541
        %v1574 = vpack.c.bf16 %v1542, %v1542
        %v1575 = vpack.c.bf16 %v1543, %v1543
        %v1576 = vpack.c.bf16 %v1544, %v1544
        %v1577 = vpack.c.bf16 %v1545, %v1545
        %v1578 = vpack.c.bf16 %v1546, %v1546
        %v1579 = vpack.c.bf16 %v1547, %v1547
        %v1580 = vpack.c.bf16 %v1548, %v1548
        %v1581 = vpack.c.bf16 %v1549, %v1549
        %v1582 = vpack.c.bf16 %v1550, %v1550
        %v1583 = vpack.c.bf16 %v1551, %v1551
        %v1584 = vunpack.c.l.bf16 %v912
        %v1585 = vunpack.c.l.bf16 %v913
        %v1586 = vunpack.c.l.bf16 %v914
        %v1587 = vunpack.c.l.bf16 %v915
        %v1588 = vunpack.c.l.bf16 %v916
        %v1589 = vunpack.c.l.bf16 %v917
        %v1590 = vunpack.c.l.bf16 %v918
        %v1591 = vunpack.c.l.bf16 %v919
        %v1592 = vunpack.c.l.bf16 %v920
        %v1593 = vunpack.c.l.bf16 %v921
        %v1594 = vunpack.c.l.bf16 %v922
        %v1595 = vunpack.c.l.bf16 %v923
        %v1596 = vunpack.c.l.bf16 %v924
        %v1597 = vunpack.c.l.bf16 %v925
        %v1598 = vunpack.c.l.bf16 %v926
        %v1599 = vunpack.c.l.bf16 %v927
        %v1600 = vunpack.c.l.bf16 %v928
        %v1601 = vunpack.c.l.bf16 %v929
        %v1602 = vunpack.c.l.bf16 %v930
        %v1603 = vunpack.c.l.bf16 %v931
        %v1604 = vunpack.c.l.bf16 %v932
        %v1605 = vunpack.c.l.bf16 %v933
        %v1606 = vunpack.c.l.bf16 %v934
        %v1607 = vunpack.c.l.bf16 %v935
        %v1608 = vunpack.c.l.bf16 %v936
        %v1609 = vunpack.c.l.bf16 %v937
        %v1610 = vunpack.c.l.bf16 %v938
        %v1611 = vunpack.c.l.bf16 %v939
        %v1612 = vunpack.c.l.bf16 %v940
        %v1613 = vunpack.c.l.bf16 %v941
        %v1614 = vunpack.c.l.bf16 %v942
        %v1615 = vunpack.c.l.bf16 %v943
        %v1616 = vunpack.c.l.bf16 %v1552
        %v1617 = vunpack.c.l.bf16 %v1553
        %v1618 = vunpack.c.l.bf16 %v1554
        %v1619 = vunpack.c.l.bf16 %v1555
        %v1620 = vunpack.c.l.bf16 %v1556
        %v1621 = vunpack.c.l.bf16 %v1557
        %v1622 = vunpack.c.l.bf16 %v1558
        %v1623 = vunpack.c.l.bf16 %v1559
        %v1624 = vunpack.c.l.bf16 %v1560
        %v1625 = vunpack.c.l.bf16 %v1561
        %v1626 = vunpack.c.l.bf16 %v1562
        %v1627 = vunpack.c.l.bf16 %v1563
        %v1628 = vunpack.c.l.bf16 %v1564
        %v1629 = vunpack.c.l.bf16 %v1565
        %v1630 = vunpack.c.l.bf16 %v1566
        %v1631 = vunpack.c.l.bf16 %v1567
        %v1632 = vunpack.c.l.bf16 %v1568
        %v1633 = vunpack.c.l.bf16 %v1569
        %v1634 = vunpack.c.l.bf16 %v1570
        %v1635 = vunpack.c.l.bf16 %v1571
        %v1636 = vunpack.c.l.bf16 %v1572
        %v1637 = vunpack.c.l.bf16 %v1573
        %v1638 = vunpack.c.l.bf16 %v1574
        %v1639 = vunpack.c.l.bf16 %v1575
        %v1640 = vunpack.c.l.bf16 %v1576
        %v1641 = vunpack.c.l.bf16 %v1577
        %v1642 = vunpack.c.l.bf16 %v1578
        %v1643 = vunpack.c.l.bf16 %v1579
        %v1644 = vunpack.c.l.bf16 %v1580
        %v1645 = vunpack.c.l.bf16 %v1581
        %v1646 = vunpack.c.l.bf16 %v1582
        %v1647 = vunpack.c.l.bf16 %v1583
        %v1648 = vmul.f32 %v1584, %v1616
        %v1649 = vmul.f32 %v1585, %v1617
        %v1650 = vmul.f32 %v1586, %v1618
        %v1651 = vmul.f32 %v1587, %v1619
        %v1652 = vmul.f32 %v1588, %v1620
        %v1653 = vmul.f32 %v1589, %v1621
        %v1654 = vmul.f32 %v1590, %v1622
        %v1655 = vmul.f32 %v1591, %v1623
        %v1656 = vmul.f32 %v1592, %v1624
        %v1657 = vmul.f32 %v1593, %v1625
        %v1658 = vmul.f32 %v1594, %v1626
        %v1659 = vmul.f32 %v1595, %v1627
        %v1660 = vmul.f32 %v1596, %v1628
        %v1661 = vmul.f32 %v1597, %v1629
        %v1662 = vmul.f32 %v1598, %v1630
        %v1663 = vmul.f32 %v1599, %v1631
        %v1664 = vmul.f32 %v1600, %v1632
        %v1665 = vmul.f32 %v1601, %v1633
        %v1666 = vmul.f32 %v1602, %v1634
        %v1667 = vmul.f32 %v1603, %v1635
        %v1668 = vmul.f32 %v1604, %v1636
        %v1669 = vmul.f32 %v1605, %v1637
        %v1670 = vmul.f32 %v1606, %v1638
        %v1671 = vmul.f32 %v1607, %v1639
        %v1672 = vmul.f32 %v1608, %v1640
        %v1673 = vmul.f32 %v1609, %v1641
        %v1674 = vmul.f32 %v1610, %v1642
        %v1675 = vmul.f32 %v1611, %v1643
        %v1676 = vmul.f32 %v1612, %v1644
        %v1677 = vmul.f32 %v1613, %v1645
        %v1678 = vmul.f32 %v1614, %v1646
        %v1679 = vmul.f32 %v1615, %v1647
        %v1680 = vpack.c.bf16 %v1648, %v1648
        %v1681 = vpack.c.bf16 %v1649, %v1649
        %v1682 = vpack.c.bf16 %v1650, %v1650
        %v1683 = vpack.c.bf16 %v1651, %v1651
        %v1684 = vpack.c.bf16 %v1652, %v1652
        %v1685 = vpack.c.bf16 %v1653, %v1653
        %v1686 = vpack.c.bf16 %v1654, %v1654
        %v1687 = vpack.c.bf16 %v1655, %v1655
        %v1688 = vpack.c.bf16 %v1656, %v1656
        %v1689 = vpack.c.bf16 %v1657, %v1657
        %v1690 = vpack.c.bf16 %v1658, %v1658
        %v1691 = vpack.c.bf16 %v1659, %v1659
        %v1692 = vpack.c.bf16 %v1660, %v1660
        %v1693 = vpack.c.bf16 %v1661, %v1661
        %v1694 = vpack.c.bf16 %v1662, %v1662
        %v1695 = vpack.c.bf16 %v1663, %v1663
        %v1696 = vpack.c.bf16 %v1664, %v1664
        %v1697 = vpack.c.bf16 %v1665, %v1665
        %v1698 = vpack.c.bf16 %v1666, %v1666
        %v1699 = vpack.c.bf16 %v1667, %v1667
        %v1700 = vpack.c.bf16 %v1668, %v1668
        %v1701 = vpack.c.bf16 %v1669, %v1669
        %v1702 = vpack.c.bf16 %v1670, %v1670
        %v1703 = vpack.c.bf16 %v1671, %v1671
        %v1704 = vpack.c.bf16 %v1672, %v1672
        %v1705 = vpack.c.bf16 %v1673, %v1673
        %v1706 = vpack.c.bf16 %v1674, %v1674
        %v1707 = vpack.c.bf16 %v1675, %v1675
        %v1708 = vpack.c.bf16 %v1676, %v1676
        %v1709 = vpack.c.bf16 %v1677, %v1677
        %v1710 = vpack.c.bf16 %v1678, %v1678
        %v1711 = vpack.c.bf16 %v1679, %v1679
        %v1712 = vld [vmem:[%s4] sm:$0xf]
        %v1713 = vld [vmem:[%s4 + $0x4] sm:$0xf]
        %v1714 = vld [vmem:[%s5] sm:$0xff]
        %v1715 = vld [vmem:[%s5 + $0x8] sm:$0xff]
        %1717 = vset.pattern.permute.xlu0 0
        %1718 = vperm.xlu0 %1717, %v1714
        %v1719 = vpop.permute.xlu0 %1718
        %1722 = vset.pattern.permute.xlu0 0
        %1723 = vperm.xlu0 %1722, %v1715
        %v1724 = vpop.permute.xlu0 %1723
        %v1728 = vunpack.c.l.b16 %v1712
        %v1729 = vunpack.c.l.b16 %v1713
        %v1730 = vpack.c.b16 %v1729, %v1728
        %v1748 = vunpack.c.l.b16 %v1680
        %v1749 = vunpack.c.l.b16 %v1681
        %v1750 = vunpack.c.l.b16 %v1682
        %v1751 = vunpack.c.l.b16 %v1683
        %v1752 = vunpack.c.l.b16 %v1684
        %v1753 = vunpack.c.l.b16 %v1685
        %v1754 = vunpack.c.l.b16 %v1686
        %v1755 = vunpack.c.l.b16 %v1687
        %v1756 = vunpack.c.l.b16 %v1688
        %v1757 = vunpack.c.l.b16 %v1689
        %v1758 = vunpack.c.l.b16 %v1690
        %v1759 = vunpack.c.l.b16 %v1691
        %v1760 = vunpack.c.l.b16 %v1692
        %v1761 = vunpack.c.l.b16 %v1693
        %v1762 = vunpack.c.l.b16 %v1694
        %v1763 = vunpack.c.l.b16 %v1695
        %v1764 = vpack.c.b16 %v1749, %v1748
        %v1765 = vpack.c.b16 %v1751, %v1750
        %v1766 = vpack.c.b16 %v1753, %v1752
        %v1767 = vpack.c.b16 %v1755, %v1754
        %v1768 = vpack.c.b16 %v1757, %v1756
        %v1769 = vpack.c.b16 %v1759, %v1758
        %v1770 = vpack.c.b16 %v1761, %v1760
        %v1771 = vpack.c.b16 %v1763, %v1762
        %1780 = vmatpush.bf16.msra.mxu0 %v1771
        %1781 = vmatpush.bf16.msra.mxu0 %v1770
        %1782 = vmatpush.bf16.msra.mxu0 %v1769
        %1783 = vmatpush.bf16.msra.mxu0 %v1768
        %1784 = vmatpush.bf16.msra.mxu0 %v1767
        %1785 = vmatpush.bf16.msra.mxu0 %v1766
        %1786 = vmatpush.bf16.msra.mxu0 %v1765
        %1787 = vmatpush.bf16.msra.mxu0 %v1764
        %1788 = vmatmul.bf16.gmra.mxu0 %v1730
        %v1789 = vpop.f32.mrf.mxu0
        %v1790 = vadd.f32 %v1719, %v1789
        %v1791 = vpop.f32.mrf.mxu0
        %v1792 = vadd.f32 %v1724, %v1791
        %1793 = vdwg.mxu0
        %v1810 = vunpack.c.l.b16 %v1696
        %v1811 = vunpack.c.l.b16 %v1697
        %v1812 = vunpack.c.l.b16 %v1698
        %v1813 = vunpack.c.l.b16 %v1699
        %v1814 = vunpack.c.l.b16 %v1700
        %v1815 = vunpack.c.l.b16 %v1701
        %v1816 = vunpack.c.l.b16 %v1702
        %v1817 = vunpack.c.l.b16 %v1703
        %v1818 = vunpack.c.l.b16 %v1704
        %v1819 = vunpack.c.l.b16 %v1705
        %v1820 = vunpack.c.l.b16 %v1706
        %v1821 = vunpack.c.l.b16 %v1707
        %v1822 = vunpack.c.l.b16 %v1708
        %v1823 = vunpack.c.l.b16 %v1709
        %v1824 = vunpack.c.l.b16 %v1710
        %v1825 = vunpack.c.l.b16 %v1711
        %v1826 = vpack.c.b16 %v1811, %v1810
        %v1827 = vpack.c.b16 %v1813, %v1812
        %v1828 = vpack.c.b16 %v1815, %v1814
        %v1829 = vpack.c.b16 %v1817, %v1816
        %v1830 = vpack.c.b16 %v1819, %v1818
        %v1831 = vpack.c.b16 %v1821, %v1820
        %v1832 = vpack.c.b16 %v1823, %v1822
        %v1833 = vpack.c.b16 %v1825, %v1824
        %1842 = vmatpush.bf16.msra.mxu0 %v1833
        %1843 = vmatpush.bf16.msra.mxu0 %v1832
        %1844 = vmatpush.bf16.msra.mxu0 %v1831
        %1845 = vmatpush.bf16.msra.mxu0 %v1830
        %1846 = vmatpush.bf16.msra.mxu0 %v1829
        %1847 = vmatpush.bf16.msra.mxu0 %v1828
        %1848 = vmatpush.bf16.msra.mxu0 %v1827
        %1849 = vmatpush.bf16.msra.mxu0 %v1826
        %1850 = vmatmul.bf16.gmra.mxu0 %v1730
        %v1851 = vpop.f32.mrf.mxu0
        %v1852 = vadd.f32 %v1719, %v1851
        %v1853 = vpop.f32.mrf.mxu0
        %v1854 = vadd.f32 %v1724, %v1853
        %1855 = vdwg.mxu0
        %v1856 = vadd.f32 %v517, %v1790
        %v1857 = vadd.f32 %v518, %v1792
        %v1858 = vadd.f32 %v519, %v1852
        %v1859 = vadd.f32 %v520, %v1854
        %1860 = vadd.xlane.f32.xlu0 %v1856
        %v1861 = vpop.xlane.xlu0 %1860
        %1862 = vadd.xlane.f32.xlu0 %v1857
        %v1863 = vpop.xlane.xlu0 %1862
        %1864 = vadd.xlane.f32.xlu0 %v1858
        %v1865 = vpop.xlane.xlu0 %1864
        %1866 = vadd.xlane.f32.xlu0 %v1859
        %v1867 = vpop.xlane.xlu0 %1866
        %v1868 = vrcp.pop 128.0
        %v1869 = vmul.f32 128.0, %v1868
        %v1870 = vsub.f32 1.0, %v1869
        %v1871 = vmul.f32 %v1868, %v1870
        %v1872 = vadd.f32 %v1868, %v1871
        %vm1873 = vweird.f32 %v1868
        %v1874 = vsel %vm1873, %v1868, %v1872
        %v1875 = vmul.f32 %v1861, %v1874
        %v1876 = vmul.f32 %v1863, %v1874
        %v1877 = vmul.f32 %v1865, %v1874
        %v1878 = vmul.f32 %v1867, %v1874
        %v1879 = vmul.f32 %v1856, %v1856
        %v1880 = vmul.f32 %v1857, %v1857
        %v1881 = vmul.f32 %v1858, %v1858
        %v1882 = vmul.f32 %v1859, %v1859
        %1883 = vadd.xlane.f32.xlu0 %v1879
        %v1884 = vpop.xlane.xlu0 %1883
        %1885 = vadd.xlane.f32.xlu0 %v1880
        %v1886 = vpop.xlane.xlu0 %1885
        %1887 = vadd.xlane.f32.xlu0 %v1881
        %v1888 = vpop.xlane.xlu0 %1887
        %1889 = vadd.xlane.f32.xlu0 %v1882
        %v1890 = vpop.xlane.xlu0 %1889
        %v1891 = vmul.f32 %v1884, %v1874
        %v1892 = vmul.f32 %v1886, %v1874
        %v1893 = vmul.f32 %v1888, %v1874
        %v1894 = vmul.f32 %v1890, %v1874
        %v1895 = vmul.f32 %v1875, %v1875
        %v1896 = vmul.f32 %v1876, %v1876
        %v1897 = vmul.f32 %v1877, %v1877
        %v1898 = vmul.f32 %v1878, %v1878
        %v1899 = vsub.f32 %v1891, %v1895
        %v1900 = vsub.f32 %v1892, %v1896
        %v1901 = vsub.f32 %v1893, %v1897
        %v1902 = vsub.f32 %v1894, %v1898
        %v1903 = vmax.f32 %v1899, 0.0
        %v1904 = vmax.f32 %v1900, 0.0
        %v1905 = vmax.f32 %v1901, 0.0
        %v1906 = vmax.f32 %v1902, 0.0
        %v1907 = vsub.f32 %v1856, %v1875
        %v1908 = vsub.f32 %v1857, %v1876
        %v1909 = vsub.f32 %v1858, %v1877
        %v1910 = vsub.f32 %v1859, %v1878
        %v1911 = vadd.f32 %v1903, 1e-05
        %v1912 = vadd.f32 %v1904, 1e-05
        %v1913 = vadd.f32 %v1905, 1e-05
        %v1914 = vadd.f32 %v1906, 1e-05
        %v1915 = vrsqrt.pop %v1911
        %v1916 = vmul.f32 %v1915, %v1911
        %v1917 = vmul.f32 %v1916, %v1915
        %v1918 = vmul.f32 0.5, %v1917
        %v1919 = vsub.f32 1.5, %v1918
        %v1920 = vmul.f32 %v1915, %v1919
        %vm1921 = vweird.f32 %v1911
        %vm1922 = vweird.f32 %v1915
        %vm1923 = vmor %vm1921, %vm1922
        %v1924 = vsel %vm1923, %v1915, %v1920
        %v1925 = vrsqrt.pop %v1912
        %v1926 = vmul.f32 %v1925, %v1912
        %v1927 = vmul.f32 %v1926, %v1925
        %v1928 = vmul.f32 0.5, %v1927
        %v1929 = vsub.f32 1.5, %v1928
        %v1930 = vmul.f32 %v1925, %v1929
        %vm1931 = vweird.f32 %v1912
        %vm1932 = vweird.f32 %v1925
        %vm1933 = vmor %vm1931, %vm1932
        %v1934 = vsel %vm1933, %v1925, %v1930
        %v1935 = vrsqrt.pop %v1913
        %v1936 = vmul.f32 %v1935, %v1913
        %v1937 = vmul.f32 %v1936, %v1935
        %v1938 = vmul.f32 0.5, %v1937
        %v1939 = vsub.f32 1.5, %v1938
        %v1940 = vmul.f32 %v1935, %v1939
        %vm1941 = vweird.f32 %v1913
        %vm1942 = vweird.f32 %v1935
        %vm1943 = vmor %vm1941, %vm1942
        %v1944 = vsel %vm1943, %v1935, %v1940
        %v1945 = vrsqrt.pop %v1914
        %v1946 = vmul.f32 %v1945, %v1914
        %v1947 = vmul.f32 %v1946, %v1945
        %v1948 = vmul.f32 0.5, %v1947
        %v1949 = vsub.f32 1.5, %v1948
        %v1950 = vmul.f32 %v1945, %v1949
        %vm1951 = vweird.f32 %v1914
        %vm1952 = vweird.f32 %v1945
        %vm1953 = vmor %vm1951, %vm1952
        %v1954 = vsel %vm1953, %v1945, %v1950
        %v1955 = vmul.f32 %v1907, %v1924
        %v1956 = vmul.f32 %v1908, %v1934
        %v1957 = vmul.f32 %v1909, %v1944
        %v1958 = vmul.f32 %v1910, %v1954
        %v1960 = vperm.slane %v521, 0
        %v1962 = vmul.f32 %v1955, %v1960
        %v1963 = vmul.f32 %v1956, %v1960
        %v1964 = vmul.f32 %v1957, %v1960
        %v1965 = vmul.f32 %v1958, %v1960
        %v1967 = vperm.slane %v522, 0
        %v1969 = vadd.f32 %v1962, %v1967
        %v1970 = vadd.f32 %v1963, %v1967
        %v1971 = vadd.f32 %v1964, %v1967
        %v1972 = vadd.f32 %v1965, %v1967
        %v1973 = vpack.c.bf16 %v1970, %v1969
        %v1974 = vpack.c.bf16 %v1972, %v1971
        %v1975 = vld [vmem:[%s8] sm:$0xff]
        %v1976 = vld [vmem:[%s8 + $0x8] sm:$0xff]
        %v1977 = vld [vmem:[%s8 + $0x10] sm:$0xff]
        %v1978 = vld [vmem:[%s8 + $0x18] sm:$0xff]
        %v1979 = vld [vmem:[%s8 + $0x20] sm:$0xff]
        %v1980 = vld [vmem:[%s8 + $0x28] sm:$0xff]
        %v1981 = vld [vmem:[%s8 + $0x30] sm:$0xff]
        %v1982 = vld [vmem:[%s8 + $0x38] sm:$0xff]
        %v1983 = vld [vmem:[%s8 + $0x40] sm:$0xff]
        %v1984 = vld [vmem:[%s8 + $0x48] sm:$0xff]
        %v1985 = vld [vmem:[%s8 + $0x50] sm:$0xff]
        %v1986 = vld [vmem:[%s8 + $0x58] sm:$0xff]
        %v1987 = vld [vmem:[%s8 + $0x60] sm:$0xff]
        %v1988 = vld [vmem:[%s8 + $0x68] sm:$0xff]
        %v1989 = vld [vmem:[%s8 + $0x70] sm:$0xff]
        %v1990 = vld [vmem:[%s8 + $0x78] sm:$0xff]
        %v1991 = vld [vmem:[%s9] sm:$0x3]
        %v1993 = vperm.slane %v1991, 0
        %v1994 = vperm.slane %v1991, 1
        %v2013 = vunpack.c.l.b16 %v1975
        %v2014 = vunpack.c.h.b16 %v1975
        %v2015 = vunpack.c.l.b16 %v1976
        %v2016 = vunpack.c.h.b16 %v1976
        %v2017 = vunpack.c.l.b16 %v1977
        %v2018 = vunpack.c.h.b16 %v1977
        %v2019 = vunpack.c.l.b16 %v1978
        %v2020 = vunpack.c.h.b16 %v1978
        %v2021 = vunpack.c.l.b16 %v1979
        %v2022 = vunpack.c.h.b16 %v1979
        %v2023 = vunpack.c.l.b16 %v1980
        %v2024 = vunpack.c.h.b16 %v1980
        %v2025 = vunpack.c.l.b16 %v1981
        %v2026 = vunpack.c.h.b16 %v1981
        %v2027 = vunpack.c.l.b16 %v1982
        %v2028 = vunpack.c.h.b16 %v1982
        %v2029 = vunpack.c.l.b16 %v1983
        %v2030 = vunpack.c.h.b16 %v1983
        %v2031 = vunpack.c.l.b16 %v1984
        %v2032 = vunpack.c.h.b16 %v1984
        %v2033 = vunpack.c.l.b16 %v1985
        %v2034 = vunpack.c.h.b16 %v1985
        %v2035 = vunpack.c.l.b16 %v1986
        %v2036 = vunpack.c.h.b16 %v1986
        %v2037 = vunpack.c.l.b16 %v1987
        %v2038 = vunpack.c.h.b16 %v1987
        %v2039 = vunpack.c.l.b16 %v1988
        %v2040 = vunpack.c.h.b16 %v1988
        %v2041 = vunpack.c.l.b16 %v1989
        %v2042 = vunpack.c.h.b16 %v1989
        %v2043 = vunpack.c.l.b16 %v1990
        %v2044 = vunpack.c.h.b16 %v1990
        %v2045 = vpack.c.b16 %v2015, %v2013
        %v2046 = vpack.c.b16 %v2016, %v2014
        %v2047 = vpack.c.b16 %v2019, %v2017
        %v2048 = vpack.c.b16 %v2020, %v2018
        %v2049 = vpack.c.b16 %v2023, %v2021
        %v2050 = vpack.c.b16 %v2024, %v2022
        %v2051 = vpack.c.b16 %v2027, %v2025
        %v2052 = vpack.c.b16 %v2028, %v2026
        %v2053 = vpack.c.b16 %v2031, %v2029
        %v2054 = vpack.c.b16 %v2032, %v2030
        %v2055 = vpack.c.b16 %v2035, %v2033
        %v2056 = vpack.c.b16 %v2036, %v2034
        %v2057 = vpack.c.b16 %v2039, %v2037
        %v2058 = vpack.c.b16 %v2040, %v2038
        %v2059 = vpack.c.b16 %v2043, %v2041
        %v2060 = vpack.c.b16 %v2044, %v2042
        %2077 = vmatpush.bf16.msra.mxu0 %v2059
        %2078 = vmatpush.bf16.msra.mxu0 %v2057
        %2079 = vmatpush.bf16.msra.mxu0 %v2055
        %2080 = vmatpush.bf16.msra.mxu0 %v2053
        %2081 = vmatpush.bf16.msra.mxu0 %v2051
        %2082 = vmatpush.bf16.msra.mxu0 %v2049
        %2083 = vmatpush.bf16.msra.mxu0 %v2047
        %2084 = vmatpush.bf16.msra.mxu0 %v2045
        %2085 = vmatmul.bf16.gmra.mxu0 %v1973
        %v2086 = vpop.f32.mrf.mxu0
        %v2087 = vadd.f32 %v1993, %v2086
        %v2088 = vpop.f32.mrf.mxu0
        %v2089 = vadd.f32 %v1993, %v2088
        %2090 = vmatmul.bf16.gmra.mxu0 %v1974
        %v2091 = vpop.f32.mrf.mxu0
        %v2092 = vadd.f32 %v1993, %v2091
        %v2093 = vpop.f32.mrf.mxu0
        %v2094 = vadd.f32 %v1993, %v2093
        %2095 = vdwg.mxu0
        %2096 = vmatpush.bf16.msra.mxu0 %v2060
        %2097 = vmatpush.bf16.msra.mxu0 %v2058
        %2098 = vmatpush.bf16.msra.mxu0 %v2056
        %2099 = vmatpush.bf16.msra.mxu0 %v2054
        %2100 = vmatpush.bf16.msra.mxu0 %v2052
        %2101 = vmatpush.bf16.msra.mxu0 %v2050
        %2102 = vmatpush.bf16.msra.mxu0 %v2048
        %2103 = vmatpush.bf16.msra.mxu0 %v2046
        %2104 = vmatmul.bf16.gmra.mxu0 %v1973
        %v2105 = vpop.f32.mrf.mxu0
        %v2106 = vadd.f32 %v1994, %v2105
        %v2107 = vpop.f32.mrf.mxu0
        %v2108 = vadd.f32 %v1994, %v2107
        %2109 = vmatmul.bf16.gmra.mxu0 %v1974
        %v2110 = vpop.f32.mrf.mxu0
        %v2111 = vadd.f32 %v1994, %v2110
        %v2112 = vpop.f32.mrf.mxu0
        %v2113 = vadd.f32 %v1994, %v2112
        %2114 = vdwg.mxu0
        %v2115 = vpack.c.bf16 %v2106, %v2087
        %v2116 = vpack.c.bf16 %v2108, %v2089
        %v2117 = vpack.c.bf16 %v2111, %v2092
        %v2118 = vpack.c.bf16 %v2113, %v2094
        %v2119 = vunpack.c.l.bf16 %v2115
        %v2120 = vunpack.c.h.bf16 %v2115
        %v2121 = vunpack.c.l.bf16 %v2116
        %v2122 = vunpack.c.h.bf16 %v2116
        %v2123 = vunpack.c.l.bf16 %v2117
        %v2124 = vunpack.c.h.bf16 %v2117
        %v2125 = vunpack.c.l.bf16 %v2118
        %v2126 = vunpack.c.h.bf16 %v2118
        %v2127 = vmax.f32 %v2119, 0.0
        %v2128 = vmax.f32 %v2120, 0.0
        %v2129 = vmax.f32 %v2121, 0.0
        %v2130 = vmax.f32 %v2122, 0.0
        %v2131 = vmax.f32 %v2123, 0.0
        %v2132 = vmax.f32 %v2124, 0.0
        %v2133 = vmax.f32 %v2125, 0.0
        %v2134 = vmax.f32 %v2126, 0.0
        %v2135 = vpack.c.bf16 %v2129, %v2127
        %v2136 = vpack.c.bf16 %v2130, %v2128
        %v2137 = vpack.c.bf16 %v2133, %v2131
        %v2138 = vpack.c.bf16 %v2134, %v2132
        %v2139 = vld [vmem:[%s10] sm:$0xf]
        %v2140 = vld [vmem:[%s10 + $0x4] sm:$0xf]
        %v2141 = vld [vmem:[%s10 + $0x8] sm:$0xf]
        %v2142 = vld [vmem:[%s10 + $0xc] sm:$0xf]
        %v2143 = vld [vmem:[%s10 + $0x10] sm:$0xf]
        %v2144 = vld [vmem:[%s10 + $0x14] sm:$0xf]
        %v2145 = vld [vmem:[%s10 + $0x18] sm:$0xf]
        %v2146 = vld [vmem:[%s10 + $0x1c] sm:$0xf]
        %v2147 = vld [vmem:[%s10 + $0x20] sm:$0xf]
        %v2148 = vld [vmem:[%s10 + $0x24] sm:$0xf]
        %v2149 = vld [vmem:[%s10 + $0x28] sm:$0xf]
        %v2150 = vld [vmem:[%s10 + $0x2c] sm:$0xf]
        %v2151 = vld [vmem:[%s10 + $0x30] sm:$0xf]
        %v2152 = vld [vmem:[%s10 + $0x34] sm:$0xf]
        %v2153 = vld [vmem:[%s10 + $0x38] sm:$0xf]
        %v2154 = vld [vmem:[%s10 + $0x3c] sm:$0xf]
        %v2155 = vld [vmem:[%s10 + $0x40] sm:$0xf]
        %v2156 = vld [vmem:[%s10 + $0x44] sm:$0xf]
        %v2157 = vld [vmem:[%s10 + $0x48] sm:$0xf]
        %v2158 = vld [vmem:[%s10 + $0x4c] sm:$0xf]
        %v2159 = vld [vmem:[%s10 + $0x50] sm:$0xf]
        %v2160 = vld [vmem:[%s10 + $0x54] sm:$0xf]
        %v2161 = vld [vmem:[%s10 + $0x58] sm:$0xf]
        %v2162 = vld [vmem:[%s10 + $0x5c] sm:$0xf]
        %v2163 = vld [vmem:[%s10 + $0x60] sm:$0xf]
        %v2164 = vld [vmem:[%s10 + $0x64] sm:$0xf]
        %v2165 = vld [vmem:[%s10 + $0x68] sm:$0xf]
        %v2166 = vld [vmem:[%s10 + $0x6c] sm:$0xf]
        %v2167 = vld [vmem:[%s10 + $0x70] sm:$0xf]
        %v2168 = vld [vmem:[%s10 + $0x74] sm:$0xf]
        %v2169 = vld [vmem:[%s10 + $0x78] sm:$0xf]
        %v2170 = vld [vmem:[%s10 + $0x7c] sm:$0xf]
        %v2171 = vld [vmem:[%s11] sm:$0x1]
        %v2173 = vperm.slane %v2171, 0
        %v2207 = vunpack.c.l.b16 %v2139
        %v2208 = vunpack.c.l.b16 %v2140
        %v2209 = vunpack.c.l.b16 %v2141
        %v2210 = vunpack.c.l.b16 %v2142
        %v2211 = vunpack.c.l.b16 %v2143
        %v2212 = vunpack.c.l.b16 %v2144
        %v2213 = vunpack.c.l.b16 %v2145
        %v2214 = vunpack.c.l.b16 %v2146
        %v2215 = vunpack.c.l.b16 %v2147
        %v2216 = vunpack.c.l.b16 %v2148
        %v2217 = vunpack.c.l.b16 %v2149
        %v2218 = vunpack.c.l.b16 %v2150
        %v2219 = vunpack.c.l.b16 %v2151
        %v2220 = vunpack.c.l.b16 %v2152
        %v2221 = vunpack.c.l.b16 %v2153
        %v2222 = vunpack.c.l.b16 %v2154
        %v2223 = vunpack.c.l.b16 %v2155
        %v2224 = vunpack.c.l.b16 %v2156
        %v2225 = vunpack.c.l.b16 %v2157
        %v2226 = vunpack.c.l.b16 %v2158
        %v2227 = vunpack.c.l.b16 %v2159
        %v2228 = vunpack.c.l.b16 %v2160
        %v2229 = vunpack.c.l.b16 %v2161
        %v2230 = vunpack.c.l.b16 %v2162
        %v2231 = vunpack.c.l.b16 %v2163
        %v2232 = vunpack.c.l.b16 %v2164
        %v2233 = vunpack.c.l.b16 %v2165
        %v2234 = vunpack.c.l.b16 %v2166
        %v2235 = vunpack.c.l.b16 %v2167
        %v2236 = vunpack.c.l.b16 %v2168
        %v2237 = vunpack.c.l.b16 %v2169
        %v2238 = vunpack.c.l.b16 %v2170
        %v2239 = vpack.c.b16 %v2208, %v2207
        %v2240 = vpack.c.b16 %v2210, %v2209
        %v2241 = vpack.c.b16 %v2212, %v2211
        %v2242 = vpack.c.b16 %v2214, %v2213
        %v2243 = vpack.c.b16 %v2216, %v2215
        %v2244 = vpack.c.b16 %v2218, %v2217
        %v2245 = vpack.c.b16 %v2220, %v2219
        %v2246 = vpack.c.b16 %v2222, %v2221
        %v2247 = vpack.c.b16 %v2224, %v2223
        %v2248 = vpack.c.b16 %v2226, %v2225
        %v2249 = vpack.c.b16 %v2228, %v2227
        %v2250 = vpack.c.b16 %v2230, %v2229
        %v2251 = vpack.c.b16 %v2232, %v2231
        %v2252 = vpack.c.b16 %v2234, %v2233
        %v2253 = vpack.c.b16 %v2236, %v2235
        %v2254 = vpack.c.b16 %v2238, %v2237
        %2271 = vmatpush.bf16.msra.mxu0 %v2246
        %2272 = vmatpush.bf16.msra.mxu0 %v2245
        %2273 = vmatpush.bf16.msra.mxu0 %v2244
        %2274 = vmatpush.bf16.msra.mxu0 %v2243
        %2275 = vmatpush.bf16.msra.mxu0 %v2242
        %2276 = vmatpush.bf16.msra.mxu0 %v2241
        %2277 = vmatpush.bf16.msra.mxu0 %v2240
        %2278 = vmatpush.bf16.msra.mxu0 %v2239
        %2279 = vmatmul.bf16.gmra.mxu0 %v2135
        %v2280 = vpop.f32.mrf.mxu0
        %v2281 = vadd.f32 %v2173, %v2280
        %v2282 = vpop.f32.mrf.mxu0
        %v2283 = vadd.f32 %v2173, %v2282
        %2284 = vmatmul.bf16.gmra.mxu0 %v2137
        %v2285 = vpop.f32.mrf.mxu0
        %v2286 = vadd.f32 %v2173, %v2285
        %v2287 = vpop.f32.mrf.mxu0
        %v2288 = vadd.f32 %v2173, %v2287
        %2289 = vdwg.mxu0
        %2290 = vmatpush.bf16.msra.mxu0 %v2254
        %2291 = vmatpush.bf16.msra.mxu0 %v2253
        %2292 = vmatpush.bf16.msra.mxu0 %v2252
        %2293 = vmatpush.bf16.msra.mxu0 %v2251
        %2294 = vmatpush.bf16.msra.mxu0 %v2250
        %2295 = vmatpush.bf16.msra.mxu0 %v2249
        %2296 = vmatpush.bf16.msra.mxu0 %v2248
        %2297 = vmatpush.bf16.msra.mxu0 %v2247
        %2298 = vmatmul.bf16.gmra.mxu0 %v2136
        %v2299 = vpop.f32.mrf.mxu0
        %v2300 = vadd.f32 %v2281, %v2299
        %v2301 = vpop.f32.mrf.mxu0
        %v2302 = vadd.f32 %v2283, %v2301
        %2303 = vmatmul.bf16.gmra.mxu0 %v2138
        %v2304 = vpop.f32.mrf.mxu0
        %v2305 = vadd.f32 %v2286, %v2304
        %v2306 = vpop.f32.mrf.mxu0
        %v2307 = vadd.f32 %v2288, %v2306
        %2308 = vdwg.mxu0
        %v2309 = vadd.f32 %v1969, %v2300
        %v2310 = vadd.f32 %v1970, %v2302
        %v2311 = vadd.f32 %v1971, %v2305
        %v2312 = vadd.f32 %v1972, %v2307
        %2313 = vadd.xlane.f32.xlu0 %v2309
        %v2314 = vpop.xlane.xlu0 %2313
        %2315 = vadd.xlane.f32.xlu0 %v2310
        %v2316 = vpop.xlane.xlu0 %2315
        %2317 = vadd.xlane.f32.xlu0 %v2311
        %v2318 = vpop.xlane.xlu0 %2317
        %2319 = vadd.xlane.f32.xlu0 %v2312
        %v2320 = vpop.xlane.xlu0 %2319
        %v2321 = vmul.f32 %v2314, %v1874
        %v2322 = vmul.f32 %v2316, %v1874
        %v2323 = vmul.f32 %v2318, %v1874
        %v2324 = vmul.f32 %v2320, %v1874
        %v2325 = vmul.f32 %v2309, %v2309
        %v2326 = vmul.f32 %v2310, %v2310
        %v2327 = vmul.f32 %v2311, %v2311
        %v2328 = vmul.f32 %v2312, %v2312
        %2329 = vadd.xlane.f32.xlu0 %v2325
        %v2330 = vpop.xlane.xlu0 %2329
        %2331 = vadd.xlane.f32.xlu0 %v2326
        %v2332 = vpop.xlane.xlu0 %2331
        %2333 = vadd.xlane.f32.xlu0 %v2327
        %v2334 = vpop.xlane.xlu0 %2333
        %2335 = vadd.xlane.f32.xlu0 %v2328
        %v2336 = vpop.xlane.xlu0 %2335
        %v2337 = vmul.f32 %v2330, %v1874
        %v2338 = vmul.f32 %v2332, %v1874
        %v2339 = vmul.f32 %v2334, %v1874
        %v2340 = vmul.f32 %v2336, %v1874
        %v2341 = vmul.f32 %v2321, %v2321
        %v2342 = vmul.f32 %v2322, %v2322
        %v2343 = vmul.f32 %v2323, %v2323
        %v2344 = vmul.f32 %v2324, %v2324
        %v2345 = vsub.f32 %v2337, %v2341
        %v2346 = vsub.f32 %v2338, %v2342
        %v2347 = vsub.f32 %v2339, %v2343
        %v2348 = vsub.f32 %v2340, %v2344
        %v2349 = vmax.f32 %v2345, 0.0
        %v2350 = vmax.f32 %v2346, 0.0
        %v2351 = vmax.f32 %v2347, 0.0
        %v2352 = vmax.f32 %v2348, 0.0
        %v2353 = vsub.f32 %v2309, %v2321
        %v2354 = vsub.f32 %v2310, %v2322
        %v2355 = vsub.f32 %v2311, %v2323
        %v2356 = vsub.f32 %v2312, %v2324
        %v2357 = vadd.f32 %v2349, 1e-05
        %v2358 = vadd.f32 %v2350, 1e-05
        %v2359 = vadd.f32 %v2351, 1e-05
        %v2360 = vadd.f32 %v2352, 1e-05
        %v2361 = vrsqrt.pop %v2357
        %v2362 = vmul.f32 %v2361, %v2357
        %v2363 = vmul.f32 %v2362, %v2361
        %v2364 = vmul.f32 0.5, %v2363
        %v2365 = vsub.f32 1.5, %v2364
        %v2366 = vmul.f32 %v2361, %v2365
        %vm2367 = vweird.f32 %v2357
        %vm2368 = vweird.f32 %v2361
        %vm2369 = vmor %vm2367, %vm2368
        %v2370 = vsel %vm2369, %v2361, %v2366
        %v2371 = vrsqrt.pop %v2358
        %v2372 = vmul.f32 %v2371, %v2358
        %v2373 = vmul.f32 %v2372, %v2371
        %v2374 = vmul.f32 0.5, %v2373
        %v2375 = vsub.f32 1.5, %v2374
        %v2376 = vmul.f32 %v2371, %v2375
        %vm2377 = vweird.f32 %v2358
        %vm2378 = vweird.f32 %v2371
        %vm2379 = vmor %vm2377, %vm2378
        %v2380 = vsel %vm2379, %v2371, %v2376
        %v2381 = vrsqrt.pop %v2359
        %v2382 = vmul.f32 %v2381, %v2359
        %v2383 = vmul.f32 %v2382, %v2381
        %v2384 = vmul.f32 0.5, %v2383
        %v2385 = vsub.f32 1.5, %v2384
        %v2386 = vmul.f32 %v2381, %v2385
        %vm2387 = vweird.f32 %v2359
        %vm2388 = vweird.f32 %v2381
        %vm2389 = vmor %vm2387, %vm2388
        %v2390 = vsel %vm2389, %v2381, %v2386
        %v2391 = vrsqrt.pop %v2360
        %v2392 = vmul.f32 %v2391, %v2360
        %v2393 = vmul.f32 %v2392, %v2391
        %v2394 = vmul.f32 0.5, %v2393
        %v2395 = vsub.f32 1.5, %v2394
        %v2396 = vmul.f32 %v2391, %v2395
        %vm2397 = vweird.f32 %v2360
        %vm2398 = vweird.f32 %v2391
        %vm2399 = vmor %vm2397, %vm2398
        %v2400 = vsel %vm2399, %v2391, %v2396
        %v2401 = vmul.f32 %v2353, %v2370
        %v2402 = vmul.f32 %v2354, %v2380
        %v2403 = vmul.f32 %v2355, %v2390
        %v2404 = vmul.f32 %v2356, %v2400
        %v2406 = vperm.slane %v523, 0
        %v2408 = vmul.f32 %v2401, %v2406
        %v2409 = vmul.f32 %v2402, %v2406
        %v2410 = vmul.f32 %v2403, %v2406
        %v2411 = vmul.f32 %v2404, %v2406
        %v2413 = vperm.slane %v524, 0
        %v2415 = vadd.f32 %v2408, %v2413
        %v2416 = vadd.f32 %v2409, %v2413
        %v2417 = vadd.f32 %v2410, %v2413
        %v2418 = vadd.f32 %v2411, %v2413
        %v2419 = vld [vmem:[%s513] sm:$0xff]
        %v2420 = vld [vmem:[%s513 + $0x8] sm:$0xff]
        %v2421 = vld [vmem:[%s513 + $0x10] sm:$0xff]
        %v2422 = vld [vmem:[%s513 + $0x18] sm:$0xff]
        %2424 = vset.pattern.permute.xlu0 0
        %2425 = vperm.xlu0 %2424, %v2419
        %v2426 = vpop.permute.xlu0 %2425
        %2429 = vset.pattern.permute.xlu0 0
        %2430 = vperm.xlu0 %2429, %v2420
        %v2431 = vpop.permute.xlu0 %2430
        %2434 = vset.pattern.permute.xlu0 0
        %2435 = vperm.xlu0 %2434, %v2421
        %v2436 = vpop.permute.xlu0 %2435
        %2439 = vset.pattern.permute.xlu0 0
        %2440 = vperm.xlu0 %2439, %v2422
        %v2441 = vpop.permute.xlu0 %2440
        %v2443 = vmul.f32 %v2415, %v2426
        %v2444 = vmul.f32 %v2416, %v2431
        %v2445 = vmul.f32 %v2417, %v2436
        %v2446 = vmul.f32 %v2418, %v2441
        %2447 = vst [vmem:[%s506] sm:$0xff] %v2443
        %2448 = vst [vmem:[%s506 + $0x8] sm:$0xff] %v2444
        %2449 = vst [vmem:[%s506 + $0x10] sm:$0xff] %v2445
        %2450 = vst [vmem:[%s506 + $0x18] sm:$0xff] %v2446
        %s2451 = sand.u32 %s343, 1
        %s2452 = scalar_lea.sflag [#allocation4], %s2451
        %s2453 = sand.u32 %s343, 1
        %s2454 = smul.addr %s2453, 32
        %s2455 = scalar_lea.vmem [#allocation5], %s2454
        // Predicated region
        $region81: #{tpu_custom_call.1} parent=75 // pred_check
          %p2456 = pneg %p353
        $region82: #{tpu_custom_call.1} parent=75 // pred_check_branch
          %2458 = sbr.rel (%p2456) target = $region84
        $region83: #{tpu_custom_call.1} parent=75 // pred_region
          %s2459 = smul.u32 2, %s31
          %2461 = vsyncadd %s2452, 0
          %s2462 = smul.addr %s2459, 2
          %s2463 = smul.addr %s2462, 8
          %s2464 = scalar_lea.hbm %s14, %s2463
          %s2465 = sshll.u32 %s2455, 4
          %s2466 = int_to_ptr.vmem [resolvable:$true] %s2465
          %s2467 = sshll.u32 %s2464, 4
          %s2468 = int_to_ptr.hbm [resolvable:$true] %s2467
          %2473 = dma.vmem_to_hbm [thread:$0]  %s2466, 512, %s2468, %s2452, 128, 128, 8
        $region84: #{tpu_custom_call.1} parent=75 // pred_fallthru
          _
      $region76: #{tpu_custom_call.1} parent=5 // pred_fallthru
        _
      %p2474 = scmp.le.s32.totalorder 2, %s26
      // Predicated region
      $region85: #{tpu_custom_call.1} parent=5 // pred_check
        %p2475 = pneg %p2474
      $region86: #{tpu_custom_call.1} parent=5 // pred_check_branch
        %2477 = sbr.rel (%p2475) target = $region88
      $region87: #{tpu_custom_call.1} parent=5 // pred_region
        %s2478 = ssub.s32 %s26, 2
        // Predicated region
        $region89: #{tpu_custom_call.1} parent=87 // pred_check
          %p2479 = pneg %p359
        $region90: #{tpu_custom_call.1} parent=87 // pred_check_branch
          %2481 = sbr.rel (%p2479) target = $region92
        $region91: #{tpu_custom_call.1} parent=87 // pred_region
          %s2482 = sand.u32 %s344, 1
          %s2483 = scalar_lea.sflag [#allocation4], %s2482
          %s2484 = sand.u32 %s344, 1
          %s2485 = smul.addr %s2484, 32
          %s2486 = scalar_lea.vmem [#allocation5], %s2485
          %2488 = dma.done %s2483, 512
        $region92: #{tpu_custom_call.1} parent=87 // pred_fallthru
          _
      $region88: #{tpu_custom_call.1} parent=5 // pred_fallthru
        _
    $region6: #{tpu_custom_call.1} parent=1 // loop_footer
      %s30 = sadd.s32 1, %s26
    $region7: #{tpu_custom_call.1} parent=1 // loop_footer_branch
      %25 = sbr.rel target = $region3
    $region8: #{tpu_custom_call.1} parent=1 // loop_exit
      _
    %2489 = vsyncpa [#allocation3], 1
    %s2490 = scalar_lea.sflag [#allocation3], 1
    %2491 = vsyncpa %s2490, 1
    %2492 = vsyncpa [#allocation4], 1
    %s2493 = scalar_lea.sflag [#allocation4], 1
    %2494 = vsyncpa %s2493, 1

// kernel: tpu_custom_call.1
$region0: #{tpu_custom_call.1}
  #allocation0 [shape = 'u32[]', space=smem, size = 0x4, offset = 0x4, fixed_abs, tag = 'smem constant byte address 0x4 - core index']
  #allocation1 [shape = 'u32[72,128]{1,0:T(1,128)}', space=vmem, size = 0x9000, scoped, tag = 'internal scratch']
  %s0 = inlined_call_operand.hbm [shape: f32[4,16,128], index: 0, kind: input, shape index: {}]
  %s1 = inlined_call_operand.vmem [shape: f32[4,16,1], index: 1, kind: input, shape index: {}]
  %s2 = inlined_call_operand.vmem [shape: bf16[128,16], index: 2, kind: input, shape index: {}]
  %s3 = inlined_call_operand.vmem [shape: f32[1,128,1], index: 3, kind: input, shape index: {}]
  %s4 = inlined_call_operand.vmem [shape: bf16[16,128], index: 4, kind: input, shape index: {}]
  %s5 = inlined_call_operand.vmem [shape: f32[1,16,1], index: 5, kind: input, shape index: {}]
  %s6 = inlined_call_operand.vmem [shape: f32[1,128], index: 6, kind: input, shape index: {}]
  %s7 = inlined_call_operand.vmem [shape: f32[1,128], index: 7, kind: input, shape index: {}]
  %s8 = inlined_call_operand.vmem [shape: bf16[128,256], index: 8, kind: input, shape index: {}]
  %s9 = inlined_call_operand.vmem [shape: f32[1,256], index: 9, kind: input, shape index: {}]
  %s10 = inlined_call_operand.vmem [shape: bf16[256,128], index: 10, kind: input, shape index: {}]
  %s11 = inlined_call_operand.vmem [shape: f32[1,128], index: 11, kind: input, shape index: {}]
  %s12 = inlined_call_operand.vmem [shape: f32[1,128], index: 12, kind: input, shape index: {}]
  %s13 = inlined_call_operand.vmem [shape: f32[1,128], index: 13, kind: input, shape index: {}]
  %s14 = inlined_call_operand.hbm [shape: f32[4,16,128], index: 14, kind: output, shape index: {}]
  %s15 = sld [smem:[#allocation0]]
  $region93: #{tpu_custom_call.1} parent=0
    _
  %s17 = ssub.s32 1, %s15
  %s18 = scalar_select 0, %s17, %s15
  $region1: #{tpu_custom_call.1} parent=0
    #allocation2 [shape = 'u8[32768]{0}', space=vmem, size = 0x8000, scoped, tag = 'input window, operand 0']
    #allocation3 [shape = 's32[2]{0}', space=sflag, size = 0x8, scoped, tag = 'scoped memory for tpu_custom_call.1']
    #allocation4 [shape = 's32[2]{0}', space=sflag, size = 0x8, scoped, tag = 'scoped memory for tpu_custom_call.1']
    #allocation5 [shape = 'u8[32768]{0}', space=vmem, size = 0x8000, scoped, tag = 'output window, operand 0']
    %19 = vsyncpa [#allocation3], 0
    %s20 = scalar_lea.sflag [#allocation3], 1
    %21 = vsyncpa %s20, 0
    %22 = vsyncpa [#allocation4], 0
    %s23 = scalar_lea.sflag [#allocation4], 1
    %24 = vsyncpa %s23, 0
    loop: start=0, step=1, limit=4
    $region2: #{tpu_custom_call.1} parent=1 // loop_pre_header
      _
    $region3: #{tpu_custom_call.1} parent=1 // loop_header
      %s26 = sphi 0, %s30
      %p27 = scmp.ge.s32.totalorder %s26, 4
      %s36 = sphi 0, %s38
      %s39 = sphi 0, %s36
      %s40 = sphi 0, %s39
      %s56 = sphi 0, %s40
      %s62 = sphi 0, %s64
      %s65 = sphi 0, %s62
      %s66 = sphi 0, %s65
      %s82 = sphi 0, %s66
      %s86 = sphi 0, %s86
      %s88 = sphi 0, %s86
      %s89 = sphi 0, %s88
      %s103 = sphi 0, %s89
      %s107 = sphi 0, %s107
      %s109 = sphi 0, %s107
      %s110 = sphi 0, %s109
      %s124 = sphi 0, %s110
      %s128 = sphi 0, %s128
      %s130 = sphi 0, %s128
      %s131 = sphi 0, %s130
      %s145 = sphi 0, %s131
      %s149 = sphi 0, %s149
      %s151 = sphi 0, %s149
      %s152 = sphi 0, %s151
      %s166 = sphi 0, %s152
      %s170 = sphi 0, %s170
      %s172 = sphi 0, %s170
      %s173 = sphi 0, %s172
      %s187 = sphi 0, %s173
      %s191 = sphi 0, %s191
      %s193 = sphi 0, %s191
      %s194 = sphi 0, %s193
      %s208 = sphi 0, %s194
      %s212 = sphi 0, %s212
      %s214 = sphi 0, %s212
      %s215 = sphi 0, %s214
      %s229 = sphi 0, %s215
      %s233 = sphi 0, %s233
      %s235 = sphi 0, %s233
      %s236 = sphi 0, %s235
      %s250 = sphi 0, %s236
      %s254 = sphi 0, %s254
      %s256 = sphi 0, %s254
      %s257 = sphi 0, %s256
      %s271 = sphi 0, %s257
      %s275 = sphi 0, %s275
      %s277 = sphi 0, %s275
      %s278 = sphi 0, %s277
      %s292 = sphi 0, %s278
      %s296 = sphi 0, %s296
      %s298 = sphi 0, %s296
      %s299 = sphi 0, %s298
      %s313 = sphi 0, %s299
      %s317 = sphi 0, %s317
      %s319 = sphi 0, %s317
      %s320 = sphi 0, %s319
      %s334 = sphi 0, %s320
      %s340 = sphi 0, %s342
      %s343 = sphi 0, %s340
      %s344 = sphi 0, %s343
      %s360 = sphi 0, %s344
    $region4: #{tpu_custom_call.1} parent=1 // loop_header_branch
      %29 = sbr.rel (%p27) target = $region8
    $region5: #{tpu_custom_call.1} parent=1 // loop_body
      %s31 = ssub.s32 %s26, 1
      %s32 = ssub.s32 %s26, 2
      %s33 = sadd.s32 %s26, 1
      %s34 = ssub.s32 %s26, %s33
      %p35 = scmp.eq.s32.totalorder %s34, 0
      %s37 = sadd.s32 %s36, 1
      %s38 = scalar_select %p35, %s36, %s37
      %p41 = pneg %p35
      %p42 = scmp.eq.s32.totalorder %s26, 1
      %p43 = por %p41, %p42
      %p44 = scmp.ne.s32.totalorder %s36, %s39
      %p45 = scmp.eq.s32.totalorder %s26, 0
      %p46 = por %p44, %p45
      %p47 = scmp.ne.s32.totalorder %s36, %s39
      %p48 = scmp.eq.s32.totalorder %s31, 1
      %p49 = por %p47, %p48
      %p50 = scmp.ne.s32.totalorder %s39, %s40
      %p51 = scmp.eq.s32.totalorder %s31, 0
      %p52 = por %p50, %p51
      %p53 = scmp.ne.s32.totalorder %s39, %s40
      %p54 = scmp.eq.s32.totalorder %s32, 1
      %p55 = por %p53, %p54
      %p57 = scmp.ne.s32.totalorder %s40, %s56
      %p58 = scmp.eq.s32.totalorder %s32, 0
      %p59 = por %p57, %p58
      %s60 = ssub.s32 %s26, %s33
      %p61 = scmp.eq.s32.totalorder %s60, 0
      %s63 = sadd.s32 %s62, 1
      %s64 = scalar_select %p61, %s62, %s63
      %p67 = pneg %p61
      %p68 = scmp.eq.s32.totalorder %s26, 1
      %p69 = por %p67, %p68
      %p70 = scmp.ne.s32.totalorder %s62, %s65
      %p71 = scmp.eq.s32.totalorder %s26, 0
      %p72 = por %p70, %p71
      %p73 = scmp.ne.s32.totalorder %s62, %s65
      %p74 = scmp.eq.s32.totalorder %s31, 1
      %p75 = por %p73, %p74
      %p76 = scmp.ne.s32.totalorder %s65, %s66
      %p77 = scmp.eq.s32.totalorder %s31, 0
      %p78 = por %p76, %p77
      %p79 = scmp.ne.s32.totalorder %s65, %s66
      %p80 = scmp.eq.s32.totalorder %s32, 1
      %p81 = por %p79, %p80
      %p83 = scmp.ne.s32.totalorder %s66, %s82
      %p84 = scmp.eq.s32.totalorder %s32, 0
      %p85 = por %p83, %p84
      %s87 = sadd.s32 %s86, 1
      %p90 = scmp.eq.s32.totalorder %s26, 1
      %p91 = scmp.ne.s32.totalorder %s86, %s88
      %p92 = scmp.eq.s32.totalorder %s26, 0
      %p93 = por %p91, %p92
      %p94 = scmp.ne.s32.totalorder %s86, %s88
      %p95 = scmp.eq.s32.totalorder %s31, 1
      %p96 = por %p94, %p95
      %p97 = scmp.ne.s32.totalorder %s88, %s89
      %p98 = scmp.eq.s32.totalorder %s31, 0
      %p99 = por %p97, %p98
      %p100 = scmp.ne.s32.totalorder %s88, %s89
      %p101 = scmp.eq.s32.totalorder %s32, 1
      %p102 = por %p100, %p101
      %p104 = scmp.ne.s32.totalorder %s89, %s103
      %p105 = scmp.eq.s32.totalorder %s32, 0
      %p106 = por %p104, %p105
      %s108 = sadd.s32 %s107, 1
      %p111 = scmp.eq.s32.totalorder %s26, 1
      %p112 = scmp.ne.s32.totalorder %s107, %s109
      %p113 = scmp.eq.s32.totalorder %s26, 0
      %p114 = por %p112, %p113
      %p115 = scmp.ne.s32.totalorder %s107, %s109
      %p116 = scmp.eq.s32.totalorder %s31, 1
      %p117 = por %p115, %p116
      %p118 = scmp.ne.s32.totalorder %s109, %s110
      %p119 = scmp.eq.s32.totalorder %s31, 0
      %p120 = por %p118, %p119
      %p121 = scmp.ne.s32.totalorder %s109, %s110
      %p122 = scmp.eq.s32.totalorder %s32, 1
      %p123 = por %p121, %p122
      %p125 = scmp.ne.s32.totalorder %s110, %s124
      %p126 = scmp.eq.s32.totalorder %s32, 0
      %p127 = por %p125, %p126
      %s129 = sadd.s32 %s128, 1
      %p132 = scmp.eq.s32.totalorder %s26, 1
      %p133 = scmp.ne.s32.totalorder %s128, %s130
      %p134 = scmp.eq.s32.totalorder %s26, 0
      %p135 = por %p133, %p134
      %p136 = scmp.ne.s32.totalorder %s128, %s130
      %p137 = scmp.eq.s32.totalorder %s31, 1
      %p138 = por %p136, %p137
      %p139 = scmp.ne.s32.totalorder %s130, %s131
      %p140 = scmp.eq.s32.totalorder %s31, 0
      %p141 = por %p139, %p140
      %p142 = scmp.ne.s32.totalorder %s130, %s131
      %p143 = scmp.eq.s32.totalorder %s32, 1
      %p144 = por %p142, %p143
      %p146 = scmp.ne.s32.totalorder %s131, %s145
      %p147 = scmp.eq.s32.totalorder %s32, 0
      %p148 = por %p146, %p147
      %s150 = sadd.s32 %s149, 1
      %p153 = scmp.eq.s32.totalorder %s26, 1
      %p154 = scmp.ne.s32.totalorder %s149, %s151
      %p155 = scmp.eq.s32.totalorder %s26, 0
      %p156 = por %p154, %p155
      %p157 = scmp.ne.s32.totalorder %s149, %s151
      %p158 = scmp.eq.s32.totalorder %s31, 1
      %p159 = por %p157, %p158
      %p160 = scmp.ne.s32.totalorder %s151, %s152
      %p161 = scmp.eq.s32.totalorder %s31, 0
      %p162 = por %p160, %p161
      %p163 = scmp.ne.s32.totalorder %s151, %s152
      %p164 = scmp.eq.s32.totalorder %s32, 1
      %p165 = por %p163, %p164
      %p167 = scmp.ne.s32.totalorder %s152, %s166
      %p168 = scmp.eq.s32.totalorder %s32, 0
      %p169 = por %p167, %p168
      %s171 = sadd.s32 %s170, 1
      %p174 = scmp.eq.s32.totalorder %s26, 1
      %p175 = scmp.ne.s32.totalorder %s170, %s172
      %p176 = scmp.eq.s32.totalorder %s26, 0
      %p177 = por %p175, %p176
      %p178 = scmp.ne.s32.totalorder %s170, %s172
      %p179 = scmp.eq.s32.totalorder %s31, 1
      %p180 = por %p178, %p179
      %p181 = scmp.ne.s32.totalorder %s172, %s173
      %p182 = scmp.eq.s32.totalorder %s31, 0
      %p183 = por %p181, %p182
      %p184 = scmp.ne.s32.totalorder %s172, %s173
      %p185 = scmp.eq.s32.totalorder %s32, 1
      %p186 = por %p184, %p185
      %p188 = scmp.ne.s32.totalorder %s173, %s187
      %p189 = scmp.eq.s32.totalorder %s32, 0
      %p190 = por %p188, %p189
      %s192 = sadd.s32 %s191, 1
      %p195 = scmp.eq.s32.totalorder %s26, 1
      %p196 = scmp.ne.s32.totalorder %s191, %s193
      %p197 = scmp.eq.s32.totalorder %s26, 0
      %p198 = por %p196, %p197
      %p199 = scmp.ne.s32.totalorder %s191, %s193
      %p200 = scmp.eq.s32.totalorder %s31, 1
      %p201 = por %p199, %p200
      %p202 = scmp.ne.s32.totalorder %s193, %s194
      %p203 = scmp.eq.s32.totalorder %s31, 0
      %p204 = por %p202, %p203
      %p205 = scmp.ne.s32.totalorder %s193, %s194
      %p206 = scmp.eq.s32.totalorder %s32, 1
      %p207 = por %p205, %p206
      %p209 = scmp.ne.s32.totalorder %s194, %s208
      %p210 = scmp.eq.s32.totalorder %s32, 0
      %p211 = por %p209, %p210
      %s213 = sadd.s32 %s212, 1
      %p216 = scmp.eq.s32.totalorder %s26, 1
      %p217 = scmp.ne.s32.totalorder %s212, %s214
      %p218 = scmp.eq.s32.totalorder %s26, 0
      %p219 = por %p217, %p218
      %p220 = scmp.ne.s32.totalorder %s212, %s214
      %p221 = scmp.eq.s32.totalorder %s31, 1
      %p222 = por %p220, %p221
      %p223 = scmp.ne.s32.totalorder %s214, %s215
      %p224 = scmp.eq.s32.totalorder %s31, 0
      %p225 = por %p223, %p224
      %p226 = scmp.ne.s32.totalorder %s214, %s215
      %p227 = scmp.eq.s32.totalorder %s32, 1
      %p228 = por %p226, %p227
      %p230 = scmp.ne.s32.totalorder %s215, %s229
      %p231 = scmp.eq.s32.totalorder %s32, 0
      %p232 = por %p230, %p231
      %s234 = sadd.s32 %s233, 1
      %p237 = scmp.eq.s32.totalorder %s26, 1
      %p238 = scmp.ne.s32.totalorder %s233, %s235
      %p239 = scmp.eq.s32.totalorder %s26, 0
      %p240 = por %p238, %p239
      %p241 = scmp.ne.s32.totalorder %s233, %s235
      %p242 = scmp.eq.s32.totalorder %s31, 1
      %p243 = por %p241, %p242
      %p244 = scmp.ne.s32.totalorder %s235, %s236
      %p245 = scmp.eq.s32.totalorder %s31, 0
      %p246 = por %p244, %p245
      %p247 = scmp.ne.s32.totalorder %s235, %s236
      %p248 = scmp.eq.s32.totalorder %s32, 1
      %p249 = por %p247, %p248
      %p251 = scmp.ne.s32.totalorder %s236, %s250
      %p252 = scmp.eq.s32.totalorder %s32, 0
      %p253 = por %p251, %p252
      %s255 = sadd.s32 %s254, 1
      %p258 = scmp.eq.s32.totalorder %s26, 1
      %p259 = scmp.ne.s32.totalorder %s254, %s256
      %p260 = scmp.eq.s32.totalorder %s26, 0
      %p261 = por %p259, %p260
      %p262 = scmp.ne.s32.totalorder %s254, %s256
      %p263 = scmp.eq.s32.totalorder %s31, 1
      %p264 = por %p262, %p263
      %p265 = scmp.ne.s32.totalorder %s256, %s257
      %p266 = scmp.eq.s32.totalorder %s31, 0
      %p267 = por %p265, %p266
      %p268 = scmp.ne.s32.totalorder %s256, %s257
      %p269 = scmp.eq.s32.totalorder %s32, 1
      %p270 = por %p268, %p269
      %p272 = scmp.ne.s32.totalorder %s257, %s271
      %p273 = scmp.eq.s32.totalorder %s32, 0
      %p274 = por %p272, %p273
      %s276 = sadd.s32 %s275, 1
      %p279 = scmp.eq.s32.totalorder %s26, 1
      %p280 = scmp.ne.s32.totalorder %s275, %s277
      %p281 = scmp.eq.s32.totalorder %s26, 0
      %p282 = por %p280, %p281
      %p283 = scmp.ne.s32.totalorder %s275, %s277
      %p284 = scmp.eq.s32.totalorder %s31, 1
      %p285 = por %p283, %p284
      %p286 = scmp.ne.s32.totalorder %s277, %s278
      %p287 = scmp.eq.s32.totalorder %s31, 0
      %p288 = por %p286, %p287
      %p289 = scmp.ne.s32.totalorder %s277, %s278
      %p290 = scmp.eq.s32.totalorder %s32, 1
      %p291 = por %p289, %p290
      %p293 = scmp.ne.s32.totalorder %s278, %s292
      %p294 = scmp.eq.s32.totalorder %s32, 0
      %p295 = por %p293, %p294
      %s297 = sadd.s32 %s296, 1
      %p300 = scmp.eq.s32.totalorder %s26, 1
      %p301 = scmp.ne.s32.totalorder %s296, %s298
      %p302 = scmp.eq.s32.totalorder %s26, 0
      %p303 = por %p301, %p302
      %p304 = scmp.ne.s32.totalorder %s296, %s298
      %p305 = scmp.eq.s32.totalorder %s31, 1
      %p306 = por %p304, %p305
      %p307 = scmp.ne.s32.totalorder %s298, %s299
      %p308 = scmp.eq.s32.totalorder %s31, 0
      %p309 = por %p307, %p308
      %p310 = scmp.ne.s32.totalorder %s298, %s299
      %p311 = scmp.eq.s32.totalorder %s32, 1
      %p312 = por %p310, %p311
      %p314 = scmp.ne.s32.totalorder %s299, %s313
      %p315 = scmp.eq.s32.totalorder %s32, 0
      %p316 = por %p314, %p315
      %s318 = sadd.s32 %s317, 1
      %p321 = scmp.eq.s32.totalorder %s26, 1
      %p322 = scmp.ne.s32.totalorder %s317, %s319
      %p323 = scmp.eq.s32.totalorder %s26, 0
      %p324 = por %p322, %p323
      %p325 = scmp.ne.s32.totalorder %s317, %s319
      %p326 = scmp.eq.s32.totalorder %s31, 1
      %p327 = por %p325, %p326
      %p328 = scmp.ne.s32.totalorder %s319, %s320
      %p329 = scmp.eq.s32.totalorder %s31, 0
      %p330 = por %p328, %p329
      %p331 = scmp.ne.s32.totalorder %s319, %s320
      %p332 = scmp.eq.s32.totalorder %s32, 1
      %p333 = por %p331, %p332
      %p335 = scmp.ne.s32.totalorder %s320, %s334
      %p336 = scmp.eq.s32.totalorder %s32, 0
      %p337 = por %p335, %p336
      %s338 = ssub.s32 %s26, %s33
      %p339 = scmp.eq.s32.totalorder %s338, 0
      %s341 = sadd.s32 %s340, 1
      %s342 = scalar_select %p339, %s340, %s341
      %p345 = pneg %p339
      %p346 = scmp.eq.s32.totalorder %s26, 1
      %p347 = por %p345, %p346
      %p348 = scmp.ne.s32.totalorder %s340, %s343
      %p349 = scmp.eq.s32.totalorder %s26, 0
      %p350 = por %p348, %p349
      %p351 = scmp.ne.s32.totalorder %s340, %s343
      %p352 = scmp.eq.s32.totalorder %s31, 1
      %p353 = por %p351, %p352
      %p354 = scmp.ne.s32.totalorder %s343, %s344
      %p355 = scmp.eq.s32.totalorder %s31, 0
      %p356 = por %p354, %p355
      %p357 = scmp.ne.s32.totalorder %s343, %s344
      %p358 = scmp.eq.s32.totalorder %s32, 1
      %p359 = por %p357, %p358
      %p361 = scmp.ne.s32.totalorder %s344, %s360
      %p362 = scmp.eq.s32.totalorder %s32, 0
      %p363 = por %p361, %p362
      %p364 = scmp.le.s32.totalorder 1, %s26
      %p365 = scmp.lt.s32.totalorder %s26, 3
      %p366 = pnand %p364, %p365
      %p367 = pneg %p366
      // Predicated region
      $region9: #{tpu_custom_call.1} parent=5 // pred_check
        _
      $region10: #{tpu_custom_call.1} parent=5 // pred_check_branch
        %369 = sbr.rel (%p366) target = $region12
      $region11: #{tpu_custom_call.1} parent=5 // pred_region
        %s370 = ssub.s32 %s26, 1
        // Predicated region
        $region13: #{tpu_custom_call.1} parent=11 // pred_check
          %p371 = pneg %p99
        $region14: #{tpu_custom_call.1} parent=11 // pred_check_branch
          %373 = sbr.rel (%p371) target = $region16
        $region15: #{tpu_custom_call.1} parent=11 // pred_region
          _
        $region16: #{tpu_custom_call.1} parent=11 // pred_fallthru
          _
        // Predicated region
        $region17: #{tpu_custom_call.1} parent=11 // pred_check
          %p374 = pneg %p120
        $region18: #{tpu_custom_call.1} parent=11 // pred_check_branch
          %376 = sbr.rel (%p374) target = $region20
        $region19: #{tpu_custom_call.1} parent=11 // pred_region
          _
        $region20: #{tpu_custom_call.1} parent=11 // pred_fallthru
          _
        // Predicated region
        $region21: #{tpu_custom_call.1} parent=11 // pred_check
          %p377 = pneg %p141
        $region22: #{tpu_custom_call.1} parent=11 // pred_check_branch
          %379 = sbr.rel (%p377) target = $region24
        $region23: #{tpu_custom_call.1} parent=11 // pred_region
          _
        $region24: #{tpu_custom_call.1} parent=11 // pred_fallthru
          _
        // Predicated region
        $region25: #{tpu_custom_call.1} parent=11 // pred_check
          %p380 = pneg %p162
        $region26: #{tpu_custom_call.1} parent=11 // pred_check_branch
          %382 = sbr.rel (%p380) target = $region28
        $region27: #{tpu_custom_call.1} parent=11 // pred_region
          _
        $region28: #{tpu_custom_call.1} parent=11 // pred_fallthru
          _
        // Predicated region
        $region29: #{tpu_custom_call.1} parent=11 // pred_check
          %p383 = pneg %p183
        $region30: #{tpu_custom_call.1} parent=11 // pred_check_branch
          %385 = sbr.rel (%p383) target = $region32
        $region31: #{tpu_custom_call.1} parent=11 // pred_region
          _
        $region32: #{tpu_custom_call.1} parent=11 // pred_fallthru
          _
        // Predicated region
        $region33: #{tpu_custom_call.1} parent=11 // pred_check
          %p386 = pneg %p204
        $region34: #{tpu_custom_call.1} parent=11 // pred_check_branch
          %388 = sbr.rel (%p386) target = $region36
        $region35: #{tpu_custom_call.1} parent=11 // pred_region
          _
        $region36: #{tpu_custom_call.1} parent=11 // pred_fallthru
          _
        // Predicated region
        $region37: #{tpu_custom_call.1} parent=11 // pred_check
          %p389 = pneg %p225
        $region38: #{tpu_custom_call.1} parent=11 // pred_check_branch
          %391 = sbr.rel (%p389) target = $region40
        $region39: #{tpu_custom_call.1} parent=11 // pred_region
          _
        $region40: #{tpu_custom_call.1} parent=11 // pred_fallthru
          _
        // Predicated region
        $region41: #{tpu_custom_call.1} parent=11 // pred_check
          %p392 = pneg %p246
        $region42: #{tpu_custom_call.1} parent=11 // pred_check_branch
          %394 = sbr.rel (%p392) target = $region44
        $region43: #{tpu_custom_call.1} parent=11 // pred_region
          _
        $region44: #{tpu_custom_call.1} parent=11 // pred_fallthru
          _
        // Predicated region
        $region45: #{tpu_custom_call.1} parent=11 // pred_check
          %p395 = pneg %p267
        $region46: #{tpu_custom_call.1} parent=11 // pred_check_branch
          %397 = sbr.rel (%p395) target = $region48
        $region47: #{tpu_custom_call.1} parent=11 // pred_region
          _
        $region48: #{tpu_custom_call.1} parent=11 // pred_fallthru
          _
        // Predicated region
        $region49: #{tpu_custom_call.1} parent=11 // pred_check
          %p398 = pneg %p288
        $region50: #{tpu_custom_call.1} parent=11 // pred_check_branch
          %400 = sbr.rel (%p398) target = $region52
        $region51: #{tpu_custom_call.1} parent=11 // pred_region
          _
        $region52: #{tpu_custom_call.1} parent=11 // pred_fallthru
          _
        // Predicated region
        $region53: #{tpu_custom_call.1} parent=11 // pred_check
          %p401 = pneg %p309
        $region54: #{tpu_custom_call.1} parent=11 // pred_check_branch
          %403 = sbr.rel (%p401) target = $region56
        $region55: #{tpu_custom_call.1} parent=11 // pred_region
          _
        $region56: #{tpu_custom_call.1} parent=11 // pred_fallthru
          _
        // Predicated region
        $region57: #{tpu_custom_call.1} parent=11 // pred_check
          %p404 = pneg %p330
        $region58: #{tpu_custom_call.1} parent=11 // pred_check_branch
          %406 = sbr.rel (%p404) target = $region60
        $region59: #{tpu_custom_call.1} parent=11 // pred_region
          _
        $region60: #{tpu_custom_call.1} parent=11 // pred_fallthru
          _
      $region12: #{tpu_custom_call.1} parent=5 // pred_fallthru
        _
      %p407 = scmp.lt.s32.totalorder %s26, 2
      // Predicated region
      $region61: #{tpu_custom_call.1} parent=5 // pred_check
        %p408 = pneg %p407
      $region62: #{tpu_custom_call.1} parent=5 // pred_check_branch
        %410 = sbr.rel (%p408) target = $region64
      $region63: #{tpu_custom_call.1} parent=5 // pred_region
        // Predicated region
        $region65: #{tpu_custom_call.1} parent=63 // pred_check
          %p411 = pneg %p46
        $region66: #{tpu_custom_call.1} parent=63 // pred_check_branch
          %413 = sbr.rel (%p411) target = $region68
        $region67: #{tpu_custom_call.1} parent=63 // pred_region
          %s414 = sand.u32 %s36, 1
          %s415 = scalar_lea.sflag [#allocation3], %s414
          %s416 = sand.u32 %s36, 1
          %s417 = smul.addr %s416, 32
          %s418 = scalar_lea.vmem [#allocation2], %s417
          %s419 = smul.u32 2, %s26
          %421 = vsyncadd %s415, 0
          %s422 = smul.addr %s419, 2
          %s423 = smul.addr %s422, 8
          %s424 = scalar_lea.hbm %s0, %s423
          %s425 = sshll.u32 %s424, 4
          %s426 = int_to_ptr.hbm [resolvable:$true] %s425
          %s427 = sshll.u32 %s418, 4
          %s428 = int_to_ptr.vmem [resolvable:$true] %s427
          %433 = dma.hbm_to_vmem [thread:$0]  %s426, 512, %s428, %s415, 128, 128, 8
        $region68: #{tpu_custom_call.1} parent=63 // pred_fallthru
          _
        // Predicated region
        $region69: #{tpu_custom_call.1} parent=63 // pred_check
          %p434 = pneg %p72
        $region70: #{tpu_custom_call.1} parent=63 // pred_check_branch
          %436 = sbr.rel (%p434) target = $region72
        $region71: #{tpu_custom_call.1} parent=63 // pred_region
          %s437 = smul.u32 2, %s26
          %p438 = scmp.lt.s32.totalorder %s437, 3
          %s439 = scalar_select %p438, %s437, 3
          %s440 = smul.addr %s439, 2
          %s441 = smul.addr %s440, 8
          %s442 = scalar_lea.vmem %s1, %s441
          %s443 = smul.u32 2, %s26
        $region72: #{tpu_custom_call.1} parent=63 // pred_fallthru
          _
      $region64: #{tpu_custom_call.1} parent=5 // pred_fallthru
        _
      %p444 = scmp.le.s32.totalorder 1, %s26
      %p445 = scmp.lt.s32.totalorder %s26, 3
      %p446 = pnand %p444, %p445
      %p447 = pneg %p446
      // Predicated region
      $region73: #{tpu_custom_call.1} parent=5 // pred_check
        _
      $region74: #{tpu_custom_call.1} parent=5 // pred_check_branch
        %449 = sbr.rel (%p446) target = $region76
      $region75: #{tpu_custom_call.1} parent=5 // pred_region
        %s450 = ssub.s32 %s26, 1
        %s451 = sand.u32 %s39, 1
        %s452 = scalar_lea.sflag [#allocation3], %s451
        %s453 = sand.u32 %s39, 1
        %s454 = smul.addr %s453, 32
        %s455 = scalar_lea.vmem [#allocation2], %s454
        // Predicated region
        $region77: #{tpu_custom_call.1} parent=75 // pred_check
          %p456 = pneg %p52
        $region78: #{tpu_custom_call.1} parent=75 // pred_check_branch
          %458 = sbr.rel (%p456) target = $region80
        $region79: #{tpu_custom_call.1} parent=75 // pred_region
          %460 = dma.done %s452, 512
        $region80: #{tpu_custom_call.1} parent=75 // pred_fallthru
          _
        %s461 = sand.u32 %s39, 1
        %s462 = scalar_lea.sflag [#allocation3], %s461
        %s463 = sand.u32 %s39, 1
        %s464 = smul.addr %s463, 32
        %s465 = scalar_lea.vmem [#allocation2], %s464
        %p466 = pneg %p52
        %p467 = pneg %p49
        %s468 = smul.u32 2, %s31
        %p469 = scmp.lt.s32.totalorder %s468, 3
        %s470 = scalar_select %p469, %s468, 3
        %s471 = smul.addr %s470, 2
        %s472 = smul.addr %s471, 8
        %s473 = scalar_lea.vmem %s1, %s472
        %p474 = pneg %p78
        %p475 = pneg %p75
        %p476 = pneg %p99
        %p477 = pneg %p96
        %p478 = pneg %p120
        %p479 = pneg %p117
        %p480 = pneg %p141
        %p481 = pneg %p138
        %p482 = pneg %p162
        %p483 = pneg %p159
        %p484 = pneg %p183
        %p485 = pneg %p180
        %p486 = pneg %p204
        %p487 = pneg %p201
        %p488 = pneg %p225
        %p489 = pneg %p222
        %p490 = pneg %p246
        %p491 = pneg %p243
        %p492 = pneg %p267
        %p493 = pneg %p264
        %p494 = pneg %p288
        %p495 = pneg %p285
        %p496 = pneg %p309
        %p497 = pneg %p306
        %p498 = pneg %p330
        %p499 = pneg %p327
        %p500 = pneg %p356
        %p501 = pneg %p353
        %s502 = sand.u32 %s343, 1
        %s503 = scalar_lea.sflag [#allocation4], %s502
        %s504 = sand.u32 %s343, 1
        %s505 = smul.addr %s504, 32
        %s506 = scalar_lea.vmem [#allocation5], %s505
        %s507 = smul.u32 2, %s31
        %s508 = smul.u32 2, %s31
        %p509 = scmp.lt.s32.totalorder %s508, 3
        %s510 = scalar_select %p509, %s508, 3
        %s511 = smul.addr %s510, 2
        %s512 = smul.addr %s511, 8
        %s513 = scalar_lea.vmem %s1, %s512
        %s514 = smul.u32 2, %s31
        %s515 = smul.u32 2, %s31
        %v517 = vld [vmem:[%s455] sm:$0xff]
        %v518 = vld [vmem:[%s455 + $0x8] sm:$0xff]
        %v519 = vld [vmem:[%s455 + $0x10] sm:$0xff]
        %v520 = vld [vmem:[%s455 + $0x18] sm:$0xff]
        %v521 = vld [vmem:[%s6] sm:$0x1]
        %v522 = vld [vmem:[%s7] sm:$0x1]
        %v523 = vld [vmem:[%s12] sm:$0x1]
        %v524 = vld [vmem:[%s13] sm:$0x1]
        %v525 = vpack.c.bf16 %v517, %v517
        %v526 = vpack.c.bf16 %v518, %v518
        %v527 = vpack.c.bf16 %v519, %v519
        %v528 = vpack.c.bf16 %v520, %v520
        %v529 = vld [vmem:[%s2] sm:$0xf]
        %v530 = vld [vmem:[%s2 + $0x4] sm:$0xf]
        %v531 = vld [vmem:[%s2 + $0x8] sm:$0xf]
        %v532 = vld [vmem:[%s2 + $0xc] sm:$0xf]
        %v533 = vld [vmem:[%s2 + $0x10] sm:$0xf]
        %v534 = vld [vmem:[%s2 + $0x14] sm:$0xf]
        %v535 = vld [vmem:[%s2 + $0x18] sm:$0xf]
        %v536 = vld [vmem:[%s2 + $0x1c] sm:$0xf]
        %v537 = vld [vmem:[%s2 + $0x20] sm:$0xf]
        %v538 = vld [vmem:[%s2 + $0x24] sm:$0xf]
        %v539 = vld [vmem:[%s2 + $0x28] sm:$0xf]
        %v540 = vld [vmem:[%s2 + $0x2c] sm:$0xf]
        %v541 = vld [vmem:[%s2 + $0x30] sm:$0xf]
        %v542 = vld [vmem:[%s2 + $0x34] sm:$0xf]
        %v543 = vld [vmem:[%s2 + $0x38] sm:$0xf]
        %v544 = vld [vmem:[%s2 + $0x3c] sm:$0xf]
        %v545 = vld [vmem:[%s3] sm:$0xff]
        %v546 = vld [vmem:[%s3 + $0x8] sm:$0xff]
        %v547 = vld [vmem:[%s3 + $0x10] sm:$0xff]
        %v548 = vld [vmem:[%s3 + $0x18] sm:$0xff]
        %v549 = vld [vmem:[%s3 + $0x20] sm:$0xff]
        %v550 = vld [vmem:[%s3 + $0x28] sm:$0xff]
        %v551 = vld [vmem:[%s3 + $0x30] sm:$0xff]
        %v552 = vld [vmem:[%s3 + $0x38] sm:$0xff]
        %v553 = vld [vmem:[%s3 + $0x40] sm:$0xff]
        %v554 = vld [vmem:[%s3 + $0x48] sm:$0xff]
        %v555 = vld [vmem:[%s3 + $0x50] sm:$0xff]
        %v556 = vld [vmem:[%s3 + $0x58] sm:$0xff]
        %v557 = vld [vmem:[%s3 + $0x60] sm:$0xff]
        %v558 = vld [vmem:[%s3 + $0x68] sm:$0xff]
        %v559 = vld [vmem:[%s3 + $0x70] sm:$0xff]
        %v560 = vld [vmem:[%s3 + $0x78] sm:$0xff]
        %562 = vset.pattern.permute.xlu0 0
        %563 = vperm.xlu0 %562, %v545
        %v564 = vpop.permute.xlu0 %563
        %567 = vset.pattern.permute.xlu0 0
        %568 = vperm.xlu0 %567, %v546
        %v569 = vpop.permute.xlu0 %568
        %572 = vset.pattern.permute.xlu0 0
        %573 = vperm.xlu0 %572, %v547
        %v574 = vpop.permute.xlu0 %573
        %577 = vset.pattern.permute.xlu0 0
        %578 = vperm.xlu0 %577, %v548
        %v579 = vpop.permute.xlu0 %578
        %582 = vset.pattern.permute.xlu0 0
        %583 = vperm.xlu0 %582, %v549
        %v584 = vpop.permute.xlu0 %583
        %587 = vset.pattern.permute.xlu0 0
        %588 = vperm.xlu0 %587, %v550
        %v589 = vpop.permute.xlu0 %588
        %592 = vset.pattern.permute.xlu0 0
        %593 = vperm.xlu0 %592, %v551
        %v594 = vpop.permute.xlu0 %593
        %597 = vset.pattern.permute.xlu0 0
        %598 = vperm.xlu0 %597, %v552
        %v599 = vpop.permute.xlu0 %598
        %602 = vset.pattern.permute.xlu0 0
        %603 = vperm.xlu0 %602, %v553
        %v604 = vpop.permute.xlu0 %603
        %607 = vset.pattern.permute.xlu0 0
        %608 = vperm.xlu0 %607, %v554
        %v609 = vpop.permute.xlu0 %608
        %612 = vset.pattern.permute.xlu0 0
        %613 = vperm.xlu0 %612, %v555
        %v614 = vpop.permute.xlu0 %613
        %617 = vset.pattern.permute.xlu0 0
        %618 = vperm.xlu0 %617, %v556
        %v619 = vpop.permute.xlu0 %618
        %622 = vset.pattern.permute.xlu0 0
        %623 = vperm.xlu0 %622, %v557
        %v624 = vpop.permute.xlu0 %623
        %627 = vset.pattern.permute.xlu0 0
        %628 = vperm.xlu0 %627, %v558
        %v629 = vpop.permute.xlu0 %628
        %632 = vset.pattern.permute.xlu0 0
        %633 = vperm.xlu0 %632, %v559
        %v634 = vpop.permute.xlu0 %633
        %637 = vset.pattern.permute.xlu0 0
        %638 = vperm.xlu0 %637, %v560
        %v639 = vpop.permute.xlu0 %638
        %v657 = vunpack.c.l.b16 %v529
        %v658 = vunpack.c.l.b16 %v530
        %v659 = vunpack.c.l.b16 %v531
        %v660 = vunpack.c.l.b16 %v532
        %v661 = vunpack.c.l.b16 %v533
        %v662 = vunpack.c.l.b16 %v534
        %v663 = vunpack.c.l.b16 %v535
        %v664 = vunpack.c.l.b16 %v536
        %v665 = vunpack.c.l.b16 %v537
        %v666 = vunpack.c.l.b16 %v538
        %v667 = vunpack.c.l.b16 %v539
        %v668 = vunpack.c.l.b16 %v540
        %v669 = vunpack.c.l.b16 %v541
        %v670 = vunpack.c.l.b16 %v542
        %v671 = vunpack.c.l.b16 %v543
        %v672 = vunpack.c.l.b16 %v544
        %v673 = vpack.c.b16 %v658, %v657
        %v674 = vpack.c.b16 %v660, %v659
        %v675 = vpack.c.b16 %v662, %v661
        %v676 = vpack.c.b16 %v664, %v663
        %v677 = vpack.c.b16 %v666, %v665
        %v678 = vpack.c.b16 %v668, %v667
        %v679 = vpack.c.b16 %v670, %v669
        %v680 = vpack.c.b16 %v672, %v671
        %v683 = vunpack.c.l.b16 %v525
        %v684 = vunpack.c.l.b16 %v526
        %v685 = vpack.c.b16 %v684, %v683
        %vm687 = vcmask 130048
        %v689 = vsel %vm687, %v673, 0
        %v692 = vsel %vm687, %v674, 0
        %v695 = vsel %vm687, %v675, 0
        %v698 = vsel %vm687, %v676, 0
        %v701 = vsel %vm687, %v677, 0
        %v704 = vsel %vm687, %v678, 0
        %v707 = vsel %vm687, %v679, 0
        %v710 = vsel %vm687, %v680, 0
        %712 = vmatpush.bf16.msra.mxu0 0
        %713 = vmatpush.bf16.msra.mxu0 0
        %714 = vmatpush.bf16.msra.mxu0 0
        %715 = vmatpush.bf16.msra.mxu0 0
        %716 = vmatpush.bf16.msra.mxu0 0
        %717 = vmatpush.bf16.msra.mxu0 0
        %718 = vmatpush.bf16.msra.mxu0 0
        %719 = vmatpush.bf16.msra.mxu0 %v685
        %720 = vmatmul.bf16.gmra.mxu0 %v689
        %v721 = vpop.f32.mrf.mxu0
        %v722 = vadd.f32 %v564, %v721
        %v723 = vpop.f32.mrf.mxu0
        %v724 = vadd.f32 %v569, %v723
        %725 = vmatmul.bf16.gmra.mxu0 %v692
        %v726 = vpop.f32.mrf.mxu0
        %v727 = vadd.f32 %v574, %v726
        %v728 = vpop.f32.mrf.mxu0
        %v729 = vadd.f32 %v579, %v728
        %730 = vmatmul.bf16.gmra.mxu0 %v695
        %v731 = vpop.f32.mrf.mxu0
        %v732 = vadd.f32 %v584, %v731
        %v733 = vpop.f32.mrf.mxu0
        %v734 = vadd.f32 %v589, %v733
        %735 = vmatmul.bf16.gmra.mxu0 %v698
        %v736 = vpop.f32.mrf.mxu0
        %v737 = vadd.f32 %v594, %v736
        %v738 = vpop.f32.mrf.mxu0
        %v739 = vadd.f32 %v599, %v738
        %740 = vmatmul.bf16.gmra.mxu0 %v701
        %v741 = vpop.f32.mrf.mxu0
        %v742 = vadd.f32 %v604, %v741
        %v743 = vpop.f32.mrf.mxu0
        %v744 = vadd.f32 %v609, %v743
        %745 = vmatmul.bf16.gmra.mxu0 %v704
        %v746 = vpop.f32.mrf.mxu0
        %v747 = vadd.f32 %v614, %v746
        %v748 = vpop.f32.mrf.mxu0
        %v749 = vadd.f32 %v619, %v748
        %750 = vmatmul.bf16.gmra.mxu0 %v707
        %v751 = vpop.f32.mrf.mxu0
        %v752 = vadd.f32 %v624, %v751
        %v753 = vpop.f32.mrf.mxu0
        %v754 = vadd.f32 %v629, %v753
        %755 = vmatmul.bf16.gmra.mxu0 %v710
        %v756 = vpop.f32.mrf.mxu0
        %v757 = vadd.f32 %v634, %v756
        %v758 = vpop.f32.mrf.mxu0
        %v759 = vadd.f32 %v639, %v758
        %760 = vdwg.mxu0
        %v763 = vunpack.c.l.b16 %v527
        %v764 = vunpack.c.l.b16 %v528
        %v765 = vpack.c.b16 %v764, %v763
        %767 = vmatpush.bf16.msra.mxu0 0
        %768 = vmatpush.bf16.msra.mxu0 0
        %769 = vmatpush.bf16.msra.mxu0 0
        %770 = vmatpush.bf16.msra.mxu0 0
        %771 = vmatpush.bf16.msra.mxu0 0
        %772 = vmatpush.bf16.msra.mxu0 0
        %773 = vmatpush.bf16.msra.mxu0 0
        %774 = vmatpush.bf16.msra.mxu0 %v765
        %775 = vmatmul.bf16.gmra.mxu0 %v689
        %v776 = vpop.f32.mrf.mxu0
        %v777 = vadd.f32 %v564, %v776
        %v778 = vpop.f32.mrf.mxu0
        %v779 = vadd.f32 %v569, %v778
        %780 = vmatmul.bf16.gmra.mxu0 %v692
        %v781 = vpop.f32.mrf.mxu0
        %v782 = vadd.f32 %v574, %v781
        %v783 = vpop.f32.mrf.mxu0
        %v784 = vadd.f32 %v579, %v783
        %785 = vmatmul.bf16.gmra.mxu0 %v695
        %v786 = vpop.f32.mrf.mxu0
        %v787 = vadd.f32 %v584, %v786
        %v788 = vpop.f32.mrf.mxu0
        %v789 = vadd.f32 %v589, %v788
        %790 = vmatmul.bf16.gmra.mxu0 %v698
        %v791 = vpop.f32.mrf.mxu0
        %v792 = vadd.f32 %v594, %v791
        %v793 = vpop.f32.mrf.mxu0
        %v794 = vadd.f32 %v599, %v793
        %795 = vmatmul.bf16.gmra.mxu0 %v701
        %v796 = vpop.f32.mrf.mxu0
        %v797 = vadd.f32 %v604, %v796
        %v798 = vpop.f32.mrf.mxu0
        %v799 = vadd.f32 %v609, %v798
        %800 = vmatmul.bf16.gmra.mxu0 %v704
        %v801 = vpop.f32.mrf.mxu0
        %v802 = vadd.f32 %v614, %v801
        %v803 = vpop.f32.mrf.mxu0
        %v804 = vadd.f32 %v619, %v803
        %805 = vmatmul.bf16.gmra.mxu0 %v707
        %v806 = vpop.f32.mrf.mxu0
        %v807 = vadd.f32 %v624, %v806
        %v808 = vpop.f32.mrf.mxu0
        %v809 = vadd.f32 %v629, %v808
        %810 = vmatmul.bf16.gmra.mxu0 %v710
        %v811 = vpop.f32.mrf.mxu0
        %v812 = vadd.f32 %v634, %v811
        %v813 = vpop.f32.mrf.mxu0
        %v814 = vadd.f32 %v639, %v813
        %815 = vdwg.mxu0
        %v816 = vpack.c.bf16 %v722, %v722
        %v817 = vpack.c.bf16 %v724, %v724
        %v818 = vpack.c.bf16 %v727, %v727
        %v819 = vpack.c.bf16 %v729, %v729
        %v820 = vpack.c.bf16 %v732, %v732
        %v821 = vpack.c.bf16 %v734, %v734
        %v822 = vpack.c.bf16 %v737, %v737
        %v823 = vpack.c.bf16 %v739, %v739
        %v824 = vpack.c.bf16 %v742, %v742
        %v825 = vpack.c.bf16 %v744, %v744
        %v826 = vpack.c.bf16 %v747, %v747
        %v827 = vpack.c.bf16 %v749, %v749
        %v828 = vpack.c.bf16 %v752, %v752
        %v829 = vpack.c.bf16 %v754, %v754
        %v830 = vpack.c.bf16 %v757, %v757
        %v831 = vpack.c.bf16 %v759, %v759
        %v832 = vpack.c.bf16 %v777, %v777
        %v833 = vpack.c.bf16 %v779, %v779
        %v834 = vpack.c.bf16 %v782, %v782
        %v835 = vpack.c.bf16 %v784, %v784
        %v836 = vpack.c.bf16 %v787, %v787
        %v837 = vpack.c.bf16 %v789, %v789
        %v838 = vpack.c.bf16 %v792, %v792
        %v839 = vpack.c.bf16 %v794, %v794
        %v840 = vpack.c.bf16 %v797, %v797
        %v841 = vpack.c.bf16 %v799, %v799
        %v842 = vpack.c.bf16 %v802, %v802
        %v843 = vpack.c.bf16 %v804, %v804
        %v844 = vpack.c.bf16 %v807, %v807
        %v845 = vpack.c.bf16 %v809, %v809
        %v846 = vpack.c.bf16 %v812, %v812
        %v847 = vpack.c.bf16 %v814, %v814
        %v848 = vunpack.c.l.bf16 %v816
        %v849 = vunpack.c.l.bf16 %v817
        %v850 = vunpack.c.l.bf16 %v818
        %v851 = vunpack.c.l.bf16 %v819
        %v852 = vunpack.c.l.bf16 %v820
        %v853 = vunpack.c.l.bf16 %v821
        %v854 = vunpack.c.l.bf16 %v822
        %v855 = vunpack.c.l.bf16 %v823
        %v856 = vunpack.c.l.bf16 %v824
        %v857 = vunpack.c.l.bf16 %v825
        %v858 = vunpack.c.l.bf16 %v826
        %v859 = vunpack.c.l.bf16 %v827
        %v860 = vunpack.c.l.bf16 %v828
        %v861 = vunpack.c.l.bf16 %v829
        %v862 = vunpack.c.l.bf16 %v830
        %v863 = vunpack.c.l.bf16 %v831
        %v864 = vunpack.c.l.bf16 %v832
        %v865 = vunpack.c.l.bf16 %v833
        %v866 = vunpack.c.l.bf16 %v834
        %v867 = vunpack.c.l.bf16 %v835
        %v868 = vunpack.c.l.bf16 %v836
        %v869 = vunpack.c.l.bf16 %v837
        %v870 = vunpack.c.l.bf16 %v838
        %v871 = vunpack.c.l.bf16 %v839
        %v872 = vunpack.c.l.bf16 %v840
        %v873 = vunpack.c.l.bf16 %v841
        %v874 = vunpack.c.l.bf16 %v842
        %v875 = vunpack.c.l.bf16 %v843
        %v876 = vunpack.c.l.bf16 %v844
        %v877 = vunpack.c.l.bf16 %v845
        %v878 = vunpack.c.l.bf16 %v846
        %v879 = vunpack.c.l.bf16 %v847
        %v880 = vmul.f32 %v848, 0.5
        %v881 = vmul.f32 %v849, 0.5
        %v882 = vmul.f32 %v850, 0.5
        %v883 = vmul.f32 %v851, 0.5
        %v884 = vmul.f32 %v852, 0.5
        %v885 = vmul.f32 %v853, 0.5
        %v886 = vmul.f32 %v854, 0.5
        %v887 = vmul.f32 %v855, 0.5
        %v888 = vmul.f32 %v856, 0.5
        %v889 = vmul.f32 %v857, 0.5
        %v890 = vmul.f32 %v858, 0.5
        %v891 = vmul.f32 %v859, 0.5
        %v892 = vmul.f32 %v860, 0.5
        %v893 = vmul.f32 %v861, 0.5
        %v894 = vmul.f32 %v862, 0.5
        %v895 = vmul.f32 %v863, 0.5
        %v896 = vmul.f32 %v864, 0.5
        %v897 = vmul.f32 %v865, 0.5
        %v898 = vmul.f32 %v866, 0.5
        %v899 = vmul.f32 %v867, 0.5
        %v900 = vmul.f32 %v868, 0.5
        %v901 = vmul.f32 %v869, 0.5
        %v902 = vmul.f32 %v870, 0.5
        %v903 = vmul.f32 %v871, 0.5
        %v904 = vmul.f32 %v872, 0.5
        %v905 = vmul.f32 %v873, 0.5
        %v906 = vmul.f32 %v874, 0.5
        %v907 = vmul.f32 %v875, 0.5
        %v908 = vmul.f32 %v876, 0.5
        %v909 = vmul.f32 %v877, 0.5
        %v910 = vmul.f32 %v878, 0.5
        %v911 = vmul.f32 %v879, 0.5
        %v912 = vpack.c.bf16 %v880, %v880
        %v913 = vpack.c.bf16 %v881, %v881
        %v914 = vpack.c.bf16 %v882, %v882
        %v915 = vpack.c.bf16 %v883, %v883
        %v916 = vpack.c.bf16 %v884, %v884
        %v917 = vpack.c.bf16 %v885, %v885
        %v918 = vpack.c.bf16 %v886, %v886
        %v919 = vpack.c.bf16 %v887, %v887
        %v920 = vpack.c.bf16 %v888, %v888
        %v921 = vpack.c.bf16 %v889, %v889
        %v922 = vpack.c.bf16 %v890, %v890
        %v923 = vpack.c.bf16 %v891, %v891
        %v924 = vpack.c.bf16 %v892, %v892
        %v925 = vpack.c.bf16 %v893, %v893
        %v926 = vpack.c.bf16 %v894, %v894
        %v927 = vpack.c.bf16 %v895, %v895
        %v928 = vpack.c.bf16 %v896, %v896
        %v929 = vpack.c.bf16 %v897, %v897
        %v930 = vpack.c.bf16 %v898, %v898
        %v931 = vpack.c.bf16 %v899, %v899
        %v932 = vpack.c.bf16 %v900, %v900
        %v933 = vpack.c.bf16 %v901, %v901
        %v934 = vpack.c.bf16 %v902, %v902
        %v935 = vpack.c.bf16 %v903, %v903
        %v936 = vpack.c.bf16 %v904, %v904
        %v937 = vpack.c.bf16 %v905, %v905
        %v938 = vpack.c.bf16 %v906, %v906
        %v939 = vpack.c.bf16 %v907, %v907
        %v940 = vpack.c.bf16 %v908, %v908
        %v941 = vpack.c.bf16 %v909, %v909
        %v942 = vpack.c.bf16 %v910, %v910
        %v943 = vpack.c.bf16 %v911, %v911
        %v944 = vmul.f32 %v848, 0.044677734
        %v945 = vmul.f32 %v849, 0.044677734
        %v946 = vmul.f32 %v850, 0.044677734
        %v947 = vmul.f32 %v851, 0.044677734
        %v948 = vmul.f32 %v852, 0.044677734
        %v949 = vmul.f32 %v853, 0.044677734
        %v950 = vmul.f32 %v854, 0.044677734
        %v951 = vmul.f32 %v855, 0.044677734
        %v952 = vmul.f32 %v856, 0.044677734
        %v953 = vmul.f32 %v857, 0.044677734
        %v954 = vmul.f32 %v858, 0.044677734
        %v955 = vmul.f32 %v859, 0.044677734
        %v956 = vmul.f32 %v860, 0.044677734
        %v957 = vmul.f32 %v861, 0.044677734
        %v958 = vmul.f32 %v862, 0.044677734
        %v959 = vmul.f32 %v863, 0.044677734
        %v960 = vmul.f32 %v864, 0.044677734
        %v961 = vmul.f32 %v865, 0.044677734
        %v962 = vmul.f32 %v866, 0.044677734
        %v963 = vmul.f32 %v867, 0.044677734
        %v964 = vmul.f32 %v868, 0.044677734
        %v965 = vmul.f32 %v869, 0.044677734
        %v966 = vmul.f32 %v870, 0.044677734
        %v967 = vmul.f32 %v871, 0.044677734
        %v968 = vmul.f32 %v872, 0.044677734
        %v969 = vmul.f32 %v873, 0.044677734
        %v970 = vmul.f32 %v874, 0.044677734
        %v971 = vmul.f32 %v875, 0.044677734
        %v972 = vmul.f32 %v876, 0.044677734
        %v973 = vmul.f32 %v877, 0.044677734
        %v974 = vmul.f32 %v878, 0.044677734
        %v975 = vmul.f32 %v879, 0.044677734
        %v976 = vpack.c.bf16 %v944, %v944
        %v977 = vpack.c.bf16 %v945, %v945
        %v978 = vpack.c.bf16 %v946, %v946
        %v979 = vpack.c.bf16 %v947, %v947
        %v980 = vpack.c.bf16 %v948, %v948
        %v981 = vpack.c.bf16 %v949, %v949
        %v982 = vpack.c.bf16 %v950, %v950
        %v983 = vpack.c.bf16 %v951, %v951
        %v984 = vpack.c.bf16 %v952, %v952
        %v985 = vpack.c.bf16 %v953, %v953
        %v986 = vpack.c.bf16 %v954, %v954
        %v987 = vpack.c.bf16 %v955, %v955
        %v988 = vpack.c.bf16 %v956, %v956
        %v989 = vpack.c.bf16 %v957, %v957
        %v990 = vpack.c.bf16 %v958, %v958
        %v991 = vpack.c.bf16 %v959, %v959
        %v992 = vpack.c.bf16 %v960, %v960
        %v993 = vpack.c.bf16 %v961, %v961
        %v994 = vpack.c.bf16 %v962, %v962
        %v995 = vpack.c.bf16 %v963, %v963
        %v996 = vpack.c.bf16 %v964, %v964
        %v997 = vpack.c.bf16 %v965, %v965
        %v998 = vpack.c.bf16 %v966, %v966
        %v999 = vpack.c.bf16 %v967, %v967
        %v1000 = vpack.c.bf16 %v968, %v968
        %v1001 = vpack.c.bf16 %v969, %v969
        %v1002 = vpack.c.bf16 %v970, %v970
        %v1003 = vpack.c.bf16 %v971, %v971
        %v1004 = vpack.c.bf16 %v972, %v972
        %v1005 = vpack.c.bf16 %v973, %v973
        %v1006 = vpack.c.bf16 %v974, %v974
        %v1007 = vpack.c.bf16 %v975, %v975
        %v1008 = vunpack.c.l.bf16 %v976
        %v1009 = vunpack.c.l.bf16 %v977
        %v1010 = vunpack.c.l.bf16 %v978
        %v1011 = vunpack.c.l.bf16 %v979
        %v1012 = vunpack.c.l.bf16 %v980
        %v1013 = vunpack.c.l.bf16 %v981
        %v1014 = vunpack.c.l.bf16 %v982
        %v1015 = vunpack.c.l.bf16 %v983
        %v1016 = vunpack.c.l.bf16 %v984
        %v1017 = vunpack.c.l.bf16 %v985
        %v1018 = vunpack.c.l.bf16 %v986
        %v1019 = vunpack.c.l.bf16 %v987
        %v1020 = vunpack.c.l.bf16 %v988
        %v1021 = vunpack.c.l.bf16 %v989
        %v1022 = vunpack.c.l.bf16 %v990
        %v1023 = vunpack.c.l.bf16 %v991
        %v1024 = vunpack.c.l.bf16 %v992
        %v1025 = vunpack.c.l.bf16 %v993
        %v1026 = vunpack.c.l.bf16 %v994
        %v1027 = vunpack.c.l.bf16 %v995
        %v1028 = vunpack.c.l.bf16 %v996
        %v1029 = vunpack.c.l.bf16 %v997
        %v1030 = vunpack.c.l.bf16 %v998
        %v1031 = vunpack.c.l.bf16 %v999
        %v1032 = vunpack.c.l.bf16 %v1000
        %v1033 = vunpack.c.l.bf16 %v1001
        %v1034 = vunpack.c.l.bf16 %v1002
        %v1035 = vunpack.c.l.bf16 %v1003
        %v1036 = vunpack.c.l.bf16 %v1004
        %v1037 = vunpack.c.l.bf16 %v1005
        %v1038 = vunpack.c.l.bf16 %v1006
        %v1039 = vunpack.c.l.bf16 %v1007
        %v1040 = vmul.f32 %v1008, %v848
        %v1041 = vmul.f32 %v1009, %v849
        %v1042 = vmul.f32 %v1010, %v850
        %v1043 = vmul.f32 %v1011, %v851
        %v1044 = vmul.f32 %v1012, %v852
        %v1045 = vmul.f32 %v1013, %v853
        %v1046 = vmul.f32 %v1014, %v854
        %v1047 = vmul.f32 %v1015, %v855
        %v1048 = vmul.f32 %v1016, %v856
        %v1049 = vmul.f32 %v1017, %v857
        %v1050 = vmul.f32 %v1018, %v858
        %v1051 = vmul.f32 %v1019, %v859
        %v1052 = vmul.f32 %v1020, %v860
        %v1053 = vmul.f32 %v1021, %v861
        %v1054 = vmul.f32 %v1022, %v862
        %v1055 = vmul.f32 %v1023, %v863
        %v1056 = vmul.f32 %v1024, %v864
        %v1057 = vmul.f32 %v1025, %v865
        %v1058 = vmul.f32 %v1026, %v866
        %v1059 = vmul.f32 %v1027, %v867
        %v1060 = vmul.f32 %v1028, %v868
        %v1061 = vmul.f32 %v1029, %v869
        %v1062 = vmul.f32 %v1030, %v870
        %v1063 = vmul.f32 %v1031, %v871
        %v1064 = vmul.f32 %v1032, %v872
        %v1065 = vmul.f32 %v1033, %v873
        %v1066 = vmul.f32 %v1034, %v874
        %v1067 = vmul.f32 %v1035, %v875
        %v1068 = vmul.f32 %v1036, %v876
        %v1069 = vmul.f32 %v1037, %v877
        %v1070 = vmul.f32 %v1038, %v878
        %v1071 = vmul.f32 %v1039, %v879
        %v1072 = vpack.c.bf16 %v1040, %v1040
        %v1073 = vpack.c.bf16 %v1041, %v1041
        %v1074 = vpack.c.bf16 %v1042, %v1042
        %v1075 = vpack.c.bf16 %v1043, %v1043
        %v1076 = vpack.c.bf16 %v1044, %v1044
        %v1077 = vpack.c.bf16 %v1045, %v1045
        %v1078 = vpack.c.bf16 %v1046, %v1046
        %v1079 = vpack.c.bf16 %v1047, %v1047
        %v1080 = vpack.c.bf16 %v1048, %v1048
        %v1081 = vpack.c.bf16 %v1049, %v1049
        %v1082 = vpack.c.bf16 %v1050, %v1050
        %v1083 = vpack.c.bf16 %v1051, %v1051
        %v1084 = vpack.c.bf16 %v1052, %v1052
        %v1085 = vpack.c.bf16 %v1053, %v1053
        %v1086 = vpack.c.bf16 %v1054, %v1054
        %v1087 = vpack.c.bf16 %v1055, %v1055
        %v1088 = vpack.c.bf16 %v1056, %v1056
        %v1089 = vpack.c.bf16 %v1057, %v1057
        %v1090 = vpack.c.bf16 %v1058, %v1058
        %v1091 = vpack.c.bf16 %v1059, %v1059
        %v1092 = vpack.c.bf16 %v1060, %v1060
        %v1093 = vpack.c.bf16 %v1061, %v1061
        %v1094 = vpack.c.bf16 %v1062, %v1062
        %v1095 = vpack.c.bf16 %v1063, %v1063
        %v1096 = vpack.c.bf16 %v1064, %v1064
        %v1097 = vpack.c.bf16 %v1065, %v1065
        %v1098 = vpack.c.bf16 %v1066, %v1066
        %v1099 = vpack.c.bf16 %v1067, %v1067
        %v1100 = vpack.c.bf16 %v1068, %v1068
        %v1101 = vpack.c.bf16 %v1069, %v1069
        %v1102 = vpack.c.bf16 %v1070, %v1070
        %v1103 = vpack.c.bf16 %v1071, %v1071
        %v1104 = vunpack.c.l.bf16 %v1072
        %v1105 = vunpack.c.l.bf16 %v1073
        %v1106 = vunpack.c.l.bf16 %v1074
        %v1107 = vunpack.c.l.bf16 %v1075
        %v1108 = vunpack.c.l.bf16 %v1076
        %v1109 = vunpack.c.l.bf16 %v1077
        %v1110 = vunpack.c.l.bf16 %v1078
        %v1111 = vunpack.c.l.bf16 %v1079
        %v1112 = vunpack.c.l.bf16 %v1080
        %v1113 = vunpack.c.l.bf16 %v1081
        %v1114 = vunpack.c.l.bf16 %v1082
        %v1115 = vunpack.c.l.bf16 %v1083
        %v1116 = vunpack.c.l.bf16 %v1084
        %v1117 = vunpack.c.l.bf16 %v1085
        %v1118 = vunpack.c.l.bf16 %v1086
        %v1119 = vunpack.c.l.bf16 %v1087
        %v1120 = vunpack.c.l.bf16 %v1088
        %v1121 = vunpack.c.l.bf16 %v1089
        %v1122 = vunpack.c.l.bf16 %v1090
        %v1123 = vunpack.c.l.bf16 %v1091
        %v1124 = vunpack.c.l.bf16 %v1092
        %v1125 = vunpack.c.l.bf16 %v1093
        %v1126 = vunpack.c.l.bf16 %v1094
        %v1127 = vunpack.c.l.bf16 %v1095
        %v1128 = vunpack.c.l.bf16 %v1096
        %v1129 = vunpack.c.l.bf16 %v1097
        %v1130 = vunpack.c.l.bf16 %v1098
        %v1131 = vunpack.c.l.bf16 %v1099
        %v1132 = vunpack.c.l.bf16 %v1100
        %v1133 = vunpack.c.l.bf16 %v1101
        %v1134 = vunpack.c.l.bf16 %v1102
        %v1135 = vunpack.c.l.bf16 %v1103
        %v1136 = vmul.f32 %v1104, %v848
        %v1137 = vmul.f32 %v1105, %v849
        %v1138 = vmul.f32 %v1106, %v850
        %v1139 = vmul.f32 %v1107, %v851
        %v1140 = vmul.f32 %v1108, %v852
        %v1141 = vmul.f32 %v1109, %v853
        %v1142 = vmul.f32 %v1110, %v854
        %v1143 = vmul.f32 %v1111, %v855
        %v1144 = vmul.f32 %v1112, %v856
        %v1145 = vmul.f32 %v1113, %v857
        %v1146 = vmul.f32 %v1114, %v858
        %v1147 = vmul.f32 %v1115, %v859
        %v1148 = vmul.f32 %v1116, %v860
        %v1149 = vmul.f32 %v1117, %v861
        %v1150 = vmul.f32 %v1118, %v862
        %v1151 = vmul.f32 %v1119, %v863
        %v1152 = vmul.f32 %v1120, %v864
        %v1153 = vmul.f32 %v1121, %v865
        %v1154 = vmul.f32 %v1122, %v866
        %v1155 = vmul.f32 %v1123, %v867
        %v1156 = vmul.f32 %v1124, %v868
        %v1157 = vmul.f32 %v1125, %v869
        %v1158 = vmul.f32 %v1126, %v870
        %v1159 = vmul.f32 %v1127, %v871
        %v1160 = vmul.f32 %v1128, %v872
        %v1161 = vmul.f32 %v1129, %v873
        %v1162 = vmul.f32 %v1130, %v874
        %v1163 = vmul.f32 %v1131, %v875
        %v1164 = vmul.f32 %v1132, %v876
        %v1165 = vmul.f32 %v1133, %v877
        %v1166 = vmul.f32 %v1134, %v878
        %v1167 = vmul.f32 %v1135, %v879
        %v1168 = vpack.c.bf16 %v1136, %v1136
        %v1169 = vpack.c.bf16 %v1137, %v1137
        %v1170 = vpack.c.bf16 %v1138, %v1138
        %v1171 = vpack.c.bf16 %v1139, %v1139
        %v1172 = vpack.c.bf16 %v1140, %v1140
        %v1173 = vpack.c.bf16 %v1141, %v1141
        %v1174 = vpack.c.bf16 %v1142, %v1142
        %v1175 = vpack.c.bf16 %v1143, %v1143
        %v1176 = vpack.c.bf16 %v1144, %v1144
        %v1177 = vpack.c.bf16 %v1145, %v1145
        %v1178 = vpack.c.bf16 %v1146, %v1146
        %v1179 = vpack.c.bf16 %v1147, %v1147
        %v1180 = vpack.c.bf16 %v1148, %v1148
        %v1181 = vpack.c.bf16 %v1149, %v1149
        %v1182 = vpack.c.bf16 %v1150, %v1150
        %v1183 = vpack.c.bf16 %v1151, %v1151
        %v1184 = vpack.c.bf16 %v1152, %v1152
        %v1185 = vpack.c.bf16 %v1153, %v1153
        %v1186 = vpack.c.bf16 %v1154, %v1154
        %v1187 = vpack.c.bf16 %v1155, %v1155
        %v1188 = vpack.c.bf16 %v1156, %v1156
        %v1189 = vpack.c.bf16 %v1157, %v1157
        %v1190 = vpack.c.bf16 %v1158, %v1158
        %v1191 = vpack.c.bf16 %v1159, %v1159
        %v1192 = vpack.c.bf16 %v1160, %v1160
        %v1193 = vpack.c.bf16 %v1161, %v1161
        %v1194 = vpack.c.bf16 %v1162, %v1162
        %v1195 = vpack.c.bf16 %v1163, %v1163
        %v1196 = vpack.c.bf16 %v1164, %v1164
        %v1197 = vpack.c.bf16 %v1165, %v1165
        %v1198 = vpack.c.bf16 %v1166, %v1166
        %v1199 = vpack.c.bf16 %v1167, %v1167
        %v1200 = vunpack.c.l.bf16 %v1168
        %v1201 = vunpack.c.l.bf16 %v1169
        %v1202 = vunpack.c.l.bf16 %v1170
        %v1203 = vunpack.c.l.bf16 %v1171
        %v1204 = vunpack.c.l.bf16 %v1172
        %v1205 = vunpack.c.l.bf16 %v1173
        %v1206 = vunpack.c.l.bf16 %v1174
        %v1207 = vunpack.c.l.bf16 %v1175
        %v1208 = vunpack.c.l.bf16 %v1176
        %v1209 = vunpack.c.l.bf16 %v1177
        %v1210 = vunpack.c.l.bf16 %v1178
        %v1211 = vunpack.c.l.bf16 %v1179
        %v1212 = vunpack.c.l.bf16 %v1180
        %v1213 = vunpack.c.l.bf16 %v1181
        %v1214 = vunpack.c.l.bf16 %v1182
        %v1215 = vunpack.c.l.bf16 %v1183
        %v1216 = vunpack.c.l.bf16 %v1184
        %v1217 = vunpack.c.l.bf16 %v1185
        %v1218 = vunpack.c.l.bf16 %v1186
        %v1219 = vunpack.c.l.bf16 %v1187
        %v1220 = vunpack.c.l.bf16 %v1188
        %v1221 = vunpack.c.l.bf16 %v1189
        %v1222 = vunpack.c.l.bf16 %v1190
        %v1223 = vunpack.c.l.bf16 %v1191
        %v1224 = vunpack.c.l.bf16 %v1192
        %v1225 = vunpack.c.l.bf16 %v1193
        %v1226 = vunpack.c.l.bf16 %v1194
        %v1227 = vunpack.c.l.bf16 %v1195
        %v1228 = vunpack.c.l.bf16 %v1196
        %v1229 = vunpack.c.l.bf16 %v1197
        %v1230 = vunpack.c.l.bf16 %v1198
        %v1231 = vunpack.c.l.bf16 %v1199
        %v1232 = vadd.f32 %v848, %v1200
        %v1233 = vadd.f32 %v849, %v1201
        %v1234 = vadd.f32 %v850, %v1202
        %v1235 = vadd.f32 %v851, %v1203
        %v1236 = vadd.f32 %v852, %v1204
        %v1237 = vadd.f32 %v853, %v1205
        %v1238 = vadd.f32 %v854, %v1206
        %v1239 = vadd.f32 %v855, %v1207
        %v1240 = vadd.f32 %v856, %v1208
        %v1241 = vadd.f32 %v857, %v1209
        %v1242 = vadd.f32 %v858, %v1210
        %v1243 = vadd.f32 %v859, %v1211
        %v1244 = vadd.f32 %v860, %v1212
        %v1245 = vadd.f32 %v861, %v1213
        %v1246 = vadd.f32 %v862, %v1214
        %v1247 = vadd.f32 %v863, %v1215
        %v1248 = vadd.f32 %v864, %v1216
        %v1249 = vadd.f32 %v865, %v1217
        %v1250 = vadd.f32 %v866, %v1218
        %v1251 = vadd.f32 %v867, %v1219
        %v1252 = vadd.f32 %v868, %v1220
        %v1253 = vadd.f32 %v869, %v1221
        %v1254 = vadd.f32 %v870, %v1222
        %v1255 = vadd.f32 %v871, %v1223
        %v1256 = vadd.f32 %v872, %v1224
        %v1257 = vadd.f32 %v873, %v1225
        %v1258 = vadd.f32 %v874, %v1226
        %v1259 = vadd.f32 %v875, %v1227
        %v1260 = vadd.f32 %v876, %v1228
        %v1261 = vadd.f32 %v877, %v1229
        %v1262 = vadd.f32 %v878, %v1230
        %v1263 = vadd.f32 %v879, %v1231
        %v1264 = vpack.c.bf16 %v1232, %v1232
        %v1265 = vpack.c.bf16 %v1233, %v1233
        %v1266 = vpack.c.bf16 %v1234, %v1234
        %v1267 = vpack.c.bf16 %v1235, %v1235
        %v1268 = vpack.c.bf16 %v1236, %v1236
        %v1269 = vpack.c.bf16 %v1237, %v1237
        %v1270 = vpack.c.bf16 %v1238, %v1238
        %v1271 = vpack.c.bf16 %v1239, %v1239
        %v1272 = vpack.c.bf16 %v1240, %v1240
        %v1273 = vpack.c.bf16 %v1241, %v1241
        %v1274 = vpack.c.bf16 %v1242, %v1242
        %v1275 = vpack.c.bf16 %v1243, %v1243
        %v1276 = vpack.c.bf16 %v1244, %v1244
        %v1277 = vpack.c.bf16 %v1245, %v1245
        %v1278 = vpack.c.bf16 %v1246, %v1246
        %v1279 = vpack.c.bf16 %v1247, %v1247
        %v1280 = vpack.c.bf16 %v1248, %v1248
        %v1281 = vpack.c.bf16 %v1249, %v1249
        %v1282 = vpack.c.bf16 %v1250, %v1250
        %v1283 = vpack.c.bf16 %v1251, %v1251
        %v1284 = vpack.c.bf16 %v1252, %v1252
        %v1285 = vpack.c.bf16 %v1253, %v1253
        %v1286 = vpack.c.bf16 %v1254, %v1254
        %v1287 = vpack.c.bf16 %v1255, %v1255
        %v1288 = vpack.c.bf16 %v1256, %v1256
        %v1289 = vpack.c.bf16 %v1257, %v1257
        %v1290 = vpack.c.bf16 %v1258, %v1258
        %v1291 = vpack.c.bf16 %v1259, %v1259
        %v1292 = vpack.c.bf16 %v1260, %v1260
        %v1293 = vpack.c.bf16 %v1261, %v1261
        %v1294 = vpack.c.bf16 %v1262, %v1262
        %v1295 = vpack.c.bf16 %v1263, %v1263
        %v1296 = vunpack.c.l.bf16 %v1264
        %v1297 = vunpack.c.l.bf16 %v1265
        %v1298 = vunpack.c.l.bf16 %v1266
        %v1299 = vunpack.c.l.bf16 %v1267
        %v1300 = vunpack.c.l.bf16 %v1268
        %v1301 = vunpack.c.l.bf16 %v1269
        %v1302 = vunpack.c.l.bf16 %v1270
        %v1303 = vunpack.c.l.bf16 %v1271
        %v1304 = vunpack.c.l.bf16 %v1272
        %v1305 = vunpack.c.l.bf16 %v1273
        %v1306 = vunpack.c.l.bf16 %v1274
        %v1307 = vunpack.c.l.bf16 %v1275
        %v1308 = vunpack.c.l.bf16 %v1276
        %v1309 = vunpack.c.l.bf16 %v1277
        %v1310 = vunpack.c.l.bf16 %v1278
        %v1311 = vunpack.c.l.bf16 %v1279
        %v1312 = vunpack.c.l.bf16 %v1280
        %v1313 = vunpack.c.l.bf16 %v1281
        %v1314 = vunpack.c.l.bf16 %v1282
        %v1315 = vunpack.c.l.bf16 %v1283
        %v1316 = vunpack.c.l.bf16 %v1284
        %v1317 = vunpack.c.l.bf16 %v1285
        %v1318 = vunpack.c.l.bf16 %v1286
        %v1319 = vunpack.c.l.bf16 %v1287
        %v1320 = vunpack.c.l.bf16 %v1288
        %v1321 = vunpack.c.l.bf16 %v1289
        %v1322 = vunpack.c.l.bf16 %v1290
        %v1323 = vunpack.c.l.bf16 %v1291
        %v1324 = vunpack.c.l.bf16 %v1292
        %v1325 = vunpack.c.l.bf16 %v1293
        %v1326 = vunpack.c.l.bf16 %v1294
        %v1327 = vunpack.c.l.bf16 %v1295
        %v1328 = vmul.f32 %v1296, 0.796875
        %v1329 = vmul.f32 %v1297, 0.796875
        %v1330 = vmul.f32 %v1298, 0.796875
        %v1331 = vmul.f32 %v1299, 0.796875
        %v1332 = vmul.f32 %v1300, 0.796875
        %v1333 = vmul.f32 %v1301, 0.796875
        %v1334 = vmul.f32 %v1302, 0.796875
        %v1335 = vmul.f32 %v1303, 0.796875
        %v1336 = vmul.f32 %v1304, 0.796875
        %v1337 = vmul.f32 %v1305, 0.796875
        %v1338 = vmul.f32 %v1306, 0.796875
        %v1339 = vmul.f32 %v1307, 0.796875
        %v1340 = vmul.f32 %v1308, 0.796875
        %v1341 = vmul.f32 %v1309, 0.796875
        %v1342 = vmul.f32 %v1310, 0.796875
        %v1343 = vmul.f32 %v1311, 0.796875
        %v1344 = vmul.f32 %v1312, 0.796875
        %v1345 = vmul.f32 %v1313, 0.796875
        %v1346 = vmul.f32 %v1314, 0.796875
        %v1347 = vmul.f32 %v1315, 0.796875
        %v1348 = vmul.f32 %v1316, 0.796875
        %v1349 = vmul.f32 %v1317, 0.796875
        %v1350 = vmul.f32 %v1318, 0.796875
        %v1351 = vmul.f32 %v1319, 0.796875
        %v1352 = vmul.f32 %v1320, 0.796875
        %v1353 = vmul.f32 %v1321, 0.796875
        %v1354 = vmul.f32 %v1322, 0.796875
        %v1355 = vmul.f32 %v1323, 0.796875
        %v1356 = vmul.f32 %v1324, 0.796875
        %v1357 = vmul.f32 %v1325, 0.796875
        %v1358 = vmul.f32 %v1326, 0.796875
        %v1359 = vmul.f32 %v1327, 0.796875
        %v1360 = vpack.c.bf16 %v1328, %v1328
        %v1361 = vpack.c.bf16 %v1329, %v1329
        %v1362 = vpack.c.bf16 %v1330, %v1330
        %v1363 = vpack.c.bf16 %v1331, %v1331
        %v1364 = vpack.c.bf16 %v1332, %v1332
        %v1365 = vpack.c.bf16 %v1333, %v1333
        %v1366 = vpack.c.bf16 %v1334, %v1334
        %v1367 = vpack.c.bf16 %v1335, %v1335
        %v1368 = vpack.c.bf16 %v1336, %v1336
        %v1369 = vpack.c.bf16 %v1337, %v1337
        %v1370 = vpack.c.bf16 %v1338, %v1338
        %v1371 = vpack.c.bf16 %v1339, %v1339
        %v1372 = vpack.c.bf16 %v1340, %v1340
        %v1373 = vpack.c.bf16 %v1341, %v1341
        %v1374 = vpack.c.bf16 %v1342, %v1342
        %v1375 = vpack.c.bf16 %v1343, %v1343
        %v1376 = vpack.c.bf16 %v1344, %v1344
        %v1377 = vpack.c.bf16 %v1345, %v1345
        %v1378 = vpack.c.bf16 %v1346, %v1346
        %v1379 = vpack.c.bf16 %v1347, %v1347
        %v1380 = vpack.c.bf16 %v1348, %v1348
        %v1381 = vpack.c.bf16 %v1349, %v1349
        %v1382 = vpack.c.bf16 %v1350, %v1350
        %v1383 = vpack.c.bf16 %v1351, %v1351
        %v1384 = vpack.c.bf16 %v1352, %v1352
        %v1385 = vpack.c.bf16 %v1353, %v1353
        %v1386 = vpack.c.bf16 %v1354, %v1354
        %v1387 = vpack.c.bf16 %v1355, %v1355
        %v1388 = vpack.c.bf16 %v1356, %v1356
        %v1389 = vpack.c.bf16 %v1357, %v1357
        %v1390 = vpack.c.bf16 %v1358, %v1358
        %v1391 = vpack.c.bf16 %v1359, %v1359
        %v1392 = vunpack.c.l.bf16 %v1360
        %v1393 = vunpack.c.l.bf16 %v1361
        %v1394 = vunpack.c.l.bf16 %v1362
        %v1395 = vunpack.c.l.bf16 %v1363
        %v1396 = vunpack.c.l.bf16 %v1364
        %v1397 = vunpack.c.l.bf16 %v1365
        %v1398 = vunpack.c.l.bf16 %v1366
        %v1399 = vunpack.c.l.bf16 %v1367
        %v1400 = vunpack.c.l.bf16 %v1368
        %v1401 = vunpack.c.l.bf16 %v1369
        %v1402 = vunpack.c.l.bf16 %v1370
        %v1403 = vunpack.c.l.bf16 %v1371
        %v1404 = vunpack.c.l.bf16 %v1372
        %v1405 = vunpack.c.l.bf16 %v1373
        %v1406 = vunpack.c.l.bf16 %v1374
        %v1407 = vunpack.c.l.bf16 %v1375
        %v1408 = vunpack.c.l.bf16 %v1376
        %v1409 = vunpack.c.l.bf16 %v1377
        %v1410 = vunpack.c.l.bf16 %v1378
        %v1411 = vunpack.c.l.bf16 %v1379
        %v1412 = vunpack.c.l.bf16 %v1380
        %v1413 = vunpack.c.l.bf16 %v1381
        %v1414 = vunpack.c.l.bf16 %v1382
        %v1415 = vunpack.c.l.bf16 %v1383
        %v1416 = vunpack.c.l.bf16 %v1384
        %v1417 = vunpack.c.l.bf16 %v1385
        %v1418 = vunpack.c.l.bf16 %v1386
        %v1419 = vunpack.c.l.bf16 %v1387
        %v1420 = vunpack.c.l.bf16 %v1388
        %v1421 = vunpack.c.l.bf16 %v1389
        %v1422 = vunpack.c.l.bf16 %v1390
        %v1423 = vunpack.c.l.bf16 %v1391
        %v1424 = vtanh.pop %v1392
        %v1425 = vtanh.pop %v1393
        %v1426 = vtanh.pop %v1394
        %v1427 = vtanh.pop %v1395
        %v1428 = vtanh.pop %v1396
        %v1429 = vtanh.pop %v1397
        %v1430 = vtanh.pop %v1398
        %v1431 = vtanh.pop %v1399
        %v1432 = vtanh.pop %v1400
        %v1433 = vtanh.pop %v1401
        %v1434 = vtanh.pop %v1402
        %v1435 = vtanh.pop %v1403
        %v1436 = vtanh.pop %v1404
        %v1437 = vtanh.pop %v1405
        %v1438 = vtanh.pop %v1406
        %v1439 = vtanh.pop %v1407
        %v1440 = vtanh.pop %v1408
        %v1441 = vtanh.pop %v1409
        %v1442 = vtanh.pop %v1410
        %v1443 = vtanh.pop %v1411
        %v1444 = vtanh.pop %v1412
        %v1445 = vtanh.pop %v1413
        %v1446 = vtanh.pop %v1414
        %v1447 = vtanh.pop %v1415
        %v1448 = vtanh.pop %v1416
        %v1449 = vtanh.pop %v1417
        %v1450 = vtanh.pop %v1418
        %v1451 = vtanh.pop %v1419
        %v1452 = vtanh.pop %v1420
        %v1453 = vtanh.pop %v1421
        %v1454 = vtanh.pop %v1422
        %v1455 = vtanh.pop %v1423
        %v1456 = vpack.c.bf16 %v1424, %v1424
        %v1457 = vpack.c.bf16 %v1425, %v1425
        %v1458 = vpack.c.bf16 %v1426, %v1426
        %v1459 = vpack.c.bf16 %v1427, %v1427
        %v1460 = vpack.c.bf16 %v1428, %v1428
        %v1461 = vpack.c.bf16 %v1429, %v1429
        %v1462 = vpack.c.bf16 %v1430, %v1430
        %v1463 = vpack.c.bf16 %v1431, %v1431
        %v1464 = vpack.c.bf16 %v1432, %v1432
        %v1465 = vpack.c.bf16 %v1433, %v1433
        %v1466 = vpack.c.bf16 %v1434, %v1434
        %v1467 = vpack.c.bf16 %v1435, %v1435
        %v1468 = vpack.c.bf16 %v1436, %v1436
        %v1469 = vpack.c.bf16 %v1437, %v1437
        %v1470 = vpack.c.bf16 %v1438, %v1438
        %v1471 = vpack.c.bf16 %v1439, %v1439
        %v1472 = vpack.c.bf16 %v1440, %v1440
        %v1473 = vpack.c.bf16 %v1441, %v1441
        %v1474 = vpack.c.bf16 %v1442, %v1442
        %v1475 = vpack.c.bf16 %v1443, %v1443
        %v1476 = vpack.c.bf16 %v1444, %v1444
        %v1477 = vpack.c.bf16 %v1445, %v1445
        %v1478 = vpack.c.bf16 %v1446, %v1446
        %v1479 = vpack.c.bf16 %v1447, %v1447
        %v1480 = vpack.c.bf16 %v1448, %v1448
        %v1481 = vpack.c.bf16 %v1449, %v1449
        %v1482 = vpack.c.bf16 %v1450, %v1450
        %v1483 = vpack.c.bf16 %v1451, %v1451
        %v1484 = vpack.c.bf16 %v1452, %v1452
        %v1485 = vpack.c.bf16 %v1453, %v1453
        %v1486 = vpack.c.bf16 %v1454, %v1454
        %v1487 = vpack.c.bf16 %v1455, %v1455
        %v1488 = vunpack.c.l.bf16 %v1456
        %v1489 = vunpack.c.l.bf16 %v1457
        %v1490 = vunpack.c.l.bf16 %v1458
        %v1491 = vunpack.c.l.bf16 %v1459
        %v1492 = vunpack.c.l.bf16 %v1460
        %v1493 = vunpack.c.l.bf16 %v1461
        %v1494 = vunpack.c.l.bf16 %v1462
        %v1495 = vunpack.c.l.bf16 %v1463
        %v1496 = vunpack.c.l.bf16 %v1464
        %v1497 = vunpack.c.l.bf16 %v1465
        %v1498 = vunpack.c.l.bf16 %v1466
        %v1499 = vunpack.c.l.bf16 %v1467
        %v1500 = vunpack.c.l.bf16 %v1468
        %v1501 = vunpack.c.l.bf16 %v1469
        %v1502 = vunpack.c.l.bf16 %v1470
        %v1503 = vunpack.c.l.bf16 %v1471
        %v1504 = vunpack.c.l.bf16 %v1472
        %v1505 = vunpack.c.l.bf16 %v1473
        %v1506 = vunpack.c.l.bf16 %v1474
        %v1507 = vunpack.c.l.bf16 %v1475
        %v1508 = vunpack.c.l.bf16 %v1476
        %v1509 = vunpack.c.l.bf16 %v1477
        %v1510 = vunpack.c.l.bf16 %v1478
        %v1511 = vunpack.c.l.bf16 %v1479
        %v1512 = vunpack.c.l.bf16 %v1480
        %v1513 = vunpack.c.l.bf16 %v1481
        %v1514 = vunpack.c.l.bf16 %v1482
        %v1515 = vunpack.c.l.bf16 %v1483
        %v1516 = vunpack.c.l.bf16 %v1484
        %v1517 = vunpack.c.l.bf16 %v1485
        %v1518 = vunpack.c.l.bf16 %v1486
        %v1519 = vunpack.c.l.bf16 %v1487
        %v1520 = vadd.f32 %v1488, 1.0
        %v1521 = vadd.f32 %v1489, 1.0
        %v1522 = vadd.f32 %v1490, 1.0
        %v1523 = vadd.f32 %v1491, 1.0
        %v1524 = vadd.f32 %v1492, 1.0
        %v1525 = vadd.f32 %v1493, 1.0
        %v1526 = vadd.f32 %v1494, 1.0
        %v1527 = vadd.f32 %v1495, 1.0
        %v1528 = vadd.f32 %v1496, 1.0
        %v1529 = vadd.f32 %v1497, 1.0
        %v1530 = vadd.f32 %v1498, 1.0
        %v1531 = vadd.f32 %v1499, 1.0
        %v1532 = vadd.f32 %v1500, 1.0
        %v1533 = vadd.f32 %v1501, 1.0
        %v1534 = vadd.f32 %v1502, 1.0
        %v1535 = vadd.f32 %v1503, 1.0
        %v1536 = vadd.f32 %v1504, 1.0
        %v1537 = vadd.f32 %v1505, 1.0
        %v1538 = vadd.f32 %v1506, 1.0
        %v1539 = vadd.f32 %v1507, 1.0
        %v1540 = vadd.f32 %v1508, 1.0
        %v1541 = vadd.f32 %v1509, 1.0
        %v1542 = vadd.f32 %v1510, 1.0
        %v1543 = vadd.f32 %v1511, 1.0
        %v1544 = vadd.f32 %v1512, 1.0
        %v1545 = vadd.f32 %v1513, 1.0
        %v1546 = vadd.f32 %v1514, 1.0
        %v1547 = vadd.f32 %v1515, 1.0
        %v1548 = vadd.f32 %v1516, 1.0
        %v1549 = vadd.f32 %v1517, 1.0
        %v1550 = vadd.f32 %v1518, 1.0
        %v1551 = vadd.f32 %v1519, 1.0
        %v1552 = vpack.c.bf16 %v1520, %v1520
        %v1553 = vpack.c.bf16 %v1521, %v1521
        %v1554 = vpack.c.bf16 %v1522, %v1522
        %v1555 = vpack.c.bf16 %v1523, %v1523
        %v1556 = vpack.c.bf16 %v1524, %v1524
        %v1557 = vpack.c.bf16 %v1525, %v1525
        %v1558 = vpack.c.bf16 %v1526, %v1526
        %v1559 = vpack.c.bf16 %v1527, %v1527
        %v1560 = vpack.c.bf16 %v1528, %v1528
        %v1561 = vpack.c.bf16 %v1529, %v1529
        %v1562 = vpack.c.bf16 %v1530, %v1530
        %v1563 = vpack.c.bf16 %v1531, %v1531
        %v1564 = vpack.c.bf16 %v1532, %v1532
        %v1565 = vpack.c.bf16 %v1533, %v1533
        %v1566 = vpack.c.bf16 %v1534, %v1534
        %v1567 = vpack.c.bf16 %v1535, %v1535
        %v1568 = vpack.c.bf16 %v1536, %v1536
        %v1569 = vpack.c.bf16 %v1537, %v1537
        %v1570 = vpack.c.bf16 %v1538, %v1538
        %v1571 = vpack.c.bf16 %v1539, %v1539
        %v1572 = vpack.c.bf16 %v1540, %v1540
        %v1573 = vpack.c.bf16 %v1541, %v1541
        %v1574 = vpack.c.bf16 %v1542, %v1542
        %v1575 = vpack.c.bf16 %v1543, %v1543
        %v1576 = vpack.c.bf16 %v1544, %v1544
        %v1577 = vpack.c.bf16 %v1545, %v1545
        %v1578 = vpack.c.bf16 %v1546, %v1546
        %v1579 = vpack.c.bf16 %v1547, %v1547
        %v1580 = vpack.c.bf16 %v1548, %v1548
        %v1581 = vpack.c.bf16 %v1549, %v1549
        %v1582 = vpack.c.bf16 %v1550, %v1550
        %v1583 = vpack.c.bf16 %v1551, %v1551
        %v1584 = vunpack.c.l.bf16 %v912
        %v1585 = vunpack.c.l.bf16 %v913
        %v1586 = vunpack.c.l.bf16 %v914
        %v1587 = vunpack.c.l.bf16 %v915
        %v1588 = vunpack.c.l.bf16 %v916
        %v1589 = vunpack.c.l.bf16 %v917
        %v1590 = vunpack.c.l.bf16 %v918
        %v1591 = vunpack.c.l.bf16 %v919
        %v1592 = vunpack.c.l.bf16 %v920
        %v1593 = vunpack.c.l.bf16 %v921
        %v1594 = vunpack.c.l.bf16 %v922
        %v1595 = vunpack.c.l.bf16 %v923
        %v1596 = vunpack.c.l.bf16 %v924
        %v1597 = vunpack.c.l.bf16 %v925
        %v1598 = vunpack.c.l.bf16 %v926
        %v1599 = vunpack.c.l.bf16 %v927
        %v1600 = vunpack.c.l.bf16 %v928
        %v1601 = vunpack.c.l.bf16 %v929
        %v1602 = vunpack.c.l.bf16 %v930
        %v1603 = vunpack.c.l.bf16 %v931
        %v1604 = vunpack.c.l.bf16 %v932
        %v1605 = vunpack.c.l.bf16 %v933
        %v1606 = vunpack.c.l.bf16 %v934
        %v1607 = vunpack.c.l.bf16 %v935
        %v1608 = vunpack.c.l.bf16 %v936
        %v1609 = vunpack.c.l.bf16 %v937
        %v1610 = vunpack.c.l.bf16 %v938
        %v1611 = vunpack.c.l.bf16 %v939
        %v1612 = vunpack.c.l.bf16 %v940
        %v1613 = vunpack.c.l.bf16 %v941
        %v1614 = vunpack.c.l.bf16 %v942
        %v1615 = vunpack.c.l.bf16 %v943
        %v1616 = vunpack.c.l.bf16 %v1552
        %v1617 = vunpack.c.l.bf16 %v1553
        %v1618 = vunpack.c.l.bf16 %v1554
        %v1619 = vunpack.c.l.bf16 %v1555
        %v1620 = vunpack.c.l.bf16 %v1556
        %v1621 = vunpack.c.l.bf16 %v1557
        %v1622 = vunpack.c.l.bf16 %v1558
        %v1623 = vunpack.c.l.bf16 %v1559
        %v1624 = vunpack.c.l.bf16 %v1560
        %v1625 = vunpack.c.l.bf16 %v1561
        %v1626 = vunpack.c.l.bf16 %v1562
        %v1627 = vunpack.c.l.bf16 %v1563
        %v1628 = vunpack.c.l.bf16 %v1564
        %v1629 = vunpack.c.l.bf16 %v1565
        %v1630 = vunpack.c.l.bf16 %v1566
        %v1631 = vunpack.c.l.bf16 %v1567
        %v1632 = vunpack.c.l.bf16 %v1568
        %v1633 = vunpack.c.l.bf16 %v1569
        %v1634 = vunpack.c.l.bf16 %v1570
        %v1635 = vunpack.c.l.bf16 %v1571
        %v1636 = vunpack.c.l.bf16 %v1572
        %v1637 = vunpack.c.l.bf16 %v1573
        %v1638 = vunpack.c.l.bf16 %v1574
        %v1639 = vunpack.c.l.bf16 %v1575
        %v1640 = vunpack.c.l.bf16 %v1576
        %v1641 = vunpack.c.l.bf16 %v1577
        %v1642 = vunpack.c.l.bf16 %v1578
        %v1643 = vunpack.c.l.bf16 %v1579
        %v1644 = vunpack.c.l.bf16 %v1580
        %v1645 = vunpack.c.l.bf16 %v1581
        %v1646 = vunpack.c.l.bf16 %v1582
        %v1647 = vunpack.c.l.bf16 %v1583
        %v1648 = vmul.f32 %v1584, %v1616
        %v1649 = vmul.f32 %v1585, %v1617
        %v1650 = vmul.f32 %v1586, %v1618
        %v1651 = vmul.f32 %v1587, %v1619
        %v1652 = vmul.f32 %v1588, %v1620
        %v1653 = vmul.f32 %v1589, %v1621
        %v1654 = vmul.f32 %v1590, %v1622
        %v1655 = vmul.f32 %v1591, %v1623
        %v1656 = vmul.f32 %v1592, %v1624
        %v1657 = vmul.f32 %v1593, %v1625
        %v1658 = vmul.f32 %v1594, %v1626
        %v1659 = vmul.f32 %v1595, %v1627
        %v1660 = vmul.f32 %v1596, %v1628
        %v1661 = vmul.f32 %v1597, %v1629
        %v1662 = vmul.f32 %v1598, %v1630
        %v1663 = vmul.f32 %v1599, %v1631
        %v1664 = vmul.f32 %v1600, %v1632
        %v1665 = vmul.f32 %v1601, %v1633
        %v1666 = vmul.f32 %v1602, %v1634
        %v1667 = vmul.f32 %v1603, %v1635
        %v1668 = vmul.f32 %v1604, %v1636
        %v1669 = vmul.f32 %v1605, %v1637
        %v1670 = vmul.f32 %v1606, %v1638
        %v1671 = vmul.f32 %v1607, %v1639
        %v1672 = vmul.f32 %v1608, %v1640
        %v1673 = vmul.f32 %v1609, %v1641
        %v1674 = vmul.f32 %v1610, %v1642
        %v1675 = vmul.f32 %v1611, %v1643
        %v1676 = vmul.f32 %v1612, %v1644
        %v1677 = vmul.f32 %v1613, %v1645
        %v1678 = vmul.f32 %v1614, %v1646
        %v1679 = vmul.f32 %v1615, %v1647
        %v1680 = vpack.c.bf16 %v1648, %v1648
        %v1681 = vpack.c.bf16 %v1649, %v1649
        %v1682 = vpack.c.bf16 %v1650, %v1650
        %v1683 = vpack.c.bf16 %v1651, %v1651
        %v1684 = vpack.c.bf16 %v1652, %v1652
        %v1685 = vpack.c.bf16 %v1653, %v1653
        %v1686 = vpack.c.bf16 %v1654, %v1654
        %v1687 = vpack.c.bf16 %v1655, %v1655
        %v1688 = vpack.c.bf16 %v1656, %v1656
        %v1689 = vpack.c.bf16 %v1657, %v1657
        %v1690 = vpack.c.bf16 %v1658, %v1658
        %v1691 = vpack.c.bf16 %v1659, %v1659
        %v1692 = vpack.c.bf16 %v1660, %v1660
        %v1693 = vpack.c.bf16 %v1661, %v1661
        %v1694 = vpack.c.bf16 %v1662, %v1662
        %v1695 = vpack.c.bf16 %v1663, %v1663
        %v1696 = vpack.c.bf16 %v1664, %v1664
        %v1697 = vpack.c.bf16 %v1665, %v1665
        %v1698 = vpack.c.bf16 %v1666, %v1666
        %v1699 = vpack.c.bf16 %v1667, %v1667
        %v1700 = vpack.c.bf16 %v1668, %v1668
        %v1701 = vpack.c.bf16 %v1669, %v1669
        %v1702 = vpack.c.bf16 %v1670, %v1670
        %v1703 = vpack.c.bf16 %v1671, %v1671
        %v1704 = vpack.c.bf16 %v1672, %v1672
        %v1705 = vpack.c.bf16 %v1673, %v1673
        %v1706 = vpack.c.bf16 %v1674, %v1674
        %v1707 = vpack.c.bf16 %v1675, %v1675
        %v1708 = vpack.c.bf16 %v1676, %v1676
        %v1709 = vpack.c.bf16 %v1677, %v1677
        %v1710 = vpack.c.bf16 %v1678, %v1678
        %v1711 = vpack.c.bf16 %v1679, %v1679
        %v1712 = vld [vmem:[%s4] sm:$0xf]
        %v1713 = vld [vmem:[%s4 + $0x4] sm:$0xf]
        %v1714 = vld [vmem:[%s5] sm:$0xff]
        %v1715 = vld [vmem:[%s5 + $0x8] sm:$0xff]
        %1717 = vset.pattern.permute.xlu0 0
        %1718 = vperm.xlu0 %1717, %v1714
        %v1719 = vpop.permute.xlu0 %1718
        %1722 = vset.pattern.permute.xlu0 0
        %1723 = vperm.xlu0 %1722, %v1715
        %v1724 = vpop.permute.xlu0 %1723
        %v1728 = vunpack.c.l.b16 %v1712
        %v1729 = vunpack.c.l.b16 %v1713
        %v1730 = vpack.c.b16 %v1729, %v1728
        %v1748 = vunpack.c.l.b16 %v1680
        %v1749 = vunpack.c.l.b16 %v1681
        %v1750 = vunpack.c.l.b16 %v1682
        %v1751 = vunpack.c.l.b16 %v1683
        %v1752 = vunpack.c.l.b16 %v1684
        %v1753 = vunpack.c.l.b16 %v1685
        %v1754 = vunpack.c.l.b16 %v1686
        %v1755 = vunpack.c.l.b16 %v1687
        %v1756 = vunpack.c.l.b16 %v1688
        %v1757 = vunpack.c.l.b16 %v1689
        %v1758 = vunpack.c.l.b16 %v1690
        %v1759 = vunpack.c.l.b16 %v1691
        %v1760 = vunpack.c.l.b16 %v1692
        %v1761 = vunpack.c.l.b16 %v1693
        %v1762 = vunpack.c.l.b16 %v1694
        %v1763 = vunpack.c.l.b16 %v1695
        %v1764 = vpack.c.b16 %v1749, %v1748
        %v1765 = vpack.c.b16 %v1751, %v1750
        %v1766 = vpack.c.b16 %v1753, %v1752
        %v1767 = vpack.c.b16 %v1755, %v1754
        %v1768 = vpack.c.b16 %v1757, %v1756
        %v1769 = vpack.c.b16 %v1759, %v1758
        %v1770 = vpack.c.b16 %v1761, %v1760
        %v1771 = vpack.c.b16 %v1763, %v1762
        %1780 = vmatpush.bf16.msra.mxu0 %v1771
        %1781 = vmatpush.bf16.msra.mxu0 %v1770
        %1782 = vmatpush.bf16.msra.mxu0 %v1769
        %1783 = vmatpush.bf16.msra.mxu0 %v1768
        %1784 = vmatpush.bf16.msra.mxu0 %v1767
        %1785 = vmatpush.bf16.msra.mxu0 %v1766
        %1786 = vmatpush.bf16.msra.mxu0 %v1765
        %1787 = vmatpush.bf16.msra.mxu0 %v1764
        %1788 = vmatmul.bf16.gmra.mxu0 %v1730
        %v1789 = vpop.f32.mrf.mxu0
        %v1790 = vadd.f32 %v1719, %v1789
        %v1791 = vpop.f32.mrf.mxu0
        %v1792 = vadd.f32 %v1724, %v1791
        %1793 = vdwg.mxu0
        %v1810 = vunpack.c.l.b16 %v1696
        %v1811 = vunpack.c.l.b16 %v1697
        %v1812 = vunpack.c.l.b16 %v1698
        %v1813 = vunpack.c.l.b16 %v1699
        %v1814 = vunpack.c.l.b16 %v1700
        %v1815 = vunpack.c.l.b16 %v1701
        %v1816 = vunpack.c.l.b16 %v1702
        %v1817 = vunpack.c.l.b16 %v1703
        %v1818 = vunpack.c.l.b16 %v1704
        %v1819 = vunpack.c.l.b16 %v1705
        %v1820 = vunpack.c.l.b16 %v1706
        %v1821 = vunpack.c.l.b16 %v1707
        %v1822 = vunpack.c.l.b16 %v1708
        %v1823 = vunpack.c.l.b16 %v1709
        %v1824 = vunpack.c.l.b16 %v1710
        %v1825 = vunpack.c.l.b16 %v1711
        %v1826 = vpack.c.b16 %v1811, %v1810
        %v1827 = vpack.c.b16 %v1813, %v1812
        %v1828 = vpack.c.b16 %v1815, %v1814
        %v1829 = vpack.c.b16 %v1817, %v1816
        %v1830 = vpack.c.b16 %v1819, %v1818
        %v1831 = vpack.c.b16 %v1821, %v1820
        %v1832 = vpack.c.b16 %v1823, %v1822
        %v1833 = vpack.c.b16 %v1825, %v1824
        %1842 = vmatpush.bf16.msra.mxu0 %v1833
        %1843 = vmatpush.bf16.msra.mxu0 %v1832
        %1844 = vmatpush.bf16.msra.mxu0 %v1831
        %1845 = vmatpush.bf16.msra.mxu0 %v1830
        %1846 = vmatpush.bf16.msra.mxu0 %v1829
        %1847 = vmatpush.bf16.msra.mxu0 %v1828
        %1848 = vmatpush.bf16.msra.mxu0 %v1827
        %1849 = vmatpush.bf16.msra.mxu0 %v1826
        %1850 = vmatmul.bf16.gmra.mxu0 %v1730
        %v1851 = vpop.f32.mrf.mxu0
        %v1852 = vadd.f32 %v1719, %v1851
        %v1853 = vpop.f32.mrf.mxu0
        %v1854 = vadd.f32 %v1724, %v1853
        %1855 = vdwg.mxu0
        %v1856 = vadd.f32 %v517, %v1790
        %v1857 = vadd.f32 %v518, %v1792
        %v1858 = vadd.f32 %v519, %v1852
        %v1859 = vadd.f32 %v520, %v1854
        %1860 = vadd.xlane.f32.xlu0 %v1856
        %v1861 = vpop.xlane.xlu0 %1860
        %1862 = vadd.xlane.f32.xlu0 %v1857
        %v1863 = vpop.xlane.xlu0 %1862
        %1864 = vadd.xlane.f32.xlu0 %v1858
        %v1865 = vpop.xlane.xlu0 %1864
        %1866 = vadd.xlane.f32.xlu0 %v1859
        %v1867 = vpop.xlane.xlu0 %1866
        %v1868 = vrcp.pop 128.0
        %v1869 = vmul.f32 128.0, %v1868
        %v1870 = vsub.f32 1.0, %v1869
        %v1871 = vmul.f32 %v1868, %v1870
        %v1872 = vadd.f32 %v1868, %v1871
        %vm1873 = vweird.f32 %v1868
        %v1874 = vsel %vm1873, %v1868, %v1872
        %v1875 = vmul.f32 %v1861, %v1874
        %v1876 = vmul.f32 %v1863, %v1874
        %v1877 = vmul.f32 %v1865, %v1874
        %v1878 = vmul.f32 %v1867, %v1874
        %v1879 = vmul.f32 %v1856, %v1856
        %v1880 = vmul.f32 %v1857, %v1857
        %v1881 = vmul.f32 %v1858, %v1858
        %v1882 = vmul.f32 %v1859, %v1859
        %1883 = vadd.xlane.f32.xlu0 %v1879
        %v1884 = vpop.xlane.xlu0 %1883
        %1885 = vadd.xlane.f32.xlu0 %v1880
        %v1886 = vpop.xlane.xlu0 %1885
        %1887 = vadd.xlane.f32.xlu0 %v1881
        %v1888 = vpop.xlane.xlu0 %1887
        %1889 = vadd.xlane.f32.xlu0 %v1882
        %v1890 = vpop.xlane.xlu0 %1889
        %v1891 = vmul.f32 %v1884, %v1874
        %v1892 = vmul.f32 %v1886, %v1874
        %v1893 = vmul.f32 %v1888, %v1874
        %v1894 = vmul.f32 %v1890, %v1874
        %v1895 = vmul.f32 %v1875, %v1875
        %v1896 = vmul.f32 %v1876, %v1876
        %v1897 = vmul.f32 %v1877, %v1877
        %v1898 = vmul.f32 %v1878, %v1878
        %v1899 = vsub.f32 %v1891, %v1895
        %v1900 = vsub.f32 %v1892, %v1896
        %v1901 = vsub.f32 %v1893, %v1897
        %v1902 = vsub.f32 %v1894, %v1898
        %v1903 = vmax.f32 %v1899, 0.0
        %v1904 = vmax.f32 %v1900, 0.0
        %v1905 = vmax.f32 %v1901, 0.0
        %v1906 = vmax.f32 %v1902, 0.0
        %v1907 = vsub.f32 %v1856, %v1875
        %v1908 = vsub.f32 %v1857, %v1876
        %v1909 = vsub.f32 %v1858, %v1877
        %v1910 = vsub.f32 %v1859, %v1878
        %v1911 = vadd.f32 %v1903, 1e-05
        %v1912 = vadd.f32 %v1904, 1e-05
        %v1913 = vadd.f32 %v1905, 1e-05
        %v1914 = vadd.f32 %v1906, 1e-05
        %v1915 = vrsqrt.pop %v1911
        %v1916 = vmul.f32 %v1915, %v1911
        %v1917 = vmul.f32 %v1916, %v1915
        %v1918 = vmul.f32 0.5, %v1917
        %v1919 = vsub.f32 1.5, %v1918
        %v1920 = vmul.f32 %v1915, %v1919
        %vm1921 = vweird.f32 %v1911
        %vm1922 = vweird.f32 %v1915
        %vm1923 = vmor %vm1921, %vm1922
        %v1924 = vsel %vm1923, %v1915, %v1920
        %v1925 = vrsqrt.pop %v1912
        %v1926 = vmul.f32 %v1925, %v1912
        %v1927 = vmul.f32 %v1926, %v1925
        %v1928 = vmul.f32 0.5, %v1927
        %v1929 = vsub.f32 1.5, %v1928
        %v1930 = vmul.f32 %v1925, %v1929
        %vm1931 = vweird.f32 %v1912
        %vm1932 = vweird.f32 %v1925
        %vm1933 = vmor %vm1931, %vm1932
        %v1934 = vsel %vm1933, %v1925, %v1930
        %v1935 = vrsqrt.pop %v1913
        %v1936 = vmul.f32 %v1935, %v1913
        %v1937 = vmul.f32 %v1936, %v1935
        %v1938 = vmul.f32 0.5, %v1937
        %v1939 = vsub.f32 1.5, %v1938
        %v1940 = vmul.f32 %v1935, %v1939
        %vm1941 = vweird.f32 %v1913
        %vm1942 = vweird.f32 %v1935
        %vm1943 = vmor %vm1941, %vm1942
        %v1944 = vsel %vm1943, %v1935, %v1940
        %v1945 = vrsqrt.pop %v1914
        %v1946 = vmul.f32 %v1945, %v1914
        %v1947 = vmul.f32 %v1946, %v1945
        %v1948 = vmul.f32 0.5, %v1947
        %v1949 = vsub.f32 1.5, %v1948
        %v1950 = vmul.f32 %v1945, %v1949
        %vm1951 = vweird.f32 %v1914
        %vm1952 = vweird.f32 %v1945
        %vm1953 = vmor %vm1951, %vm1952
        %v1954 = vsel %vm1953, %v1945, %v1950
        %v1955 = vmul.f32 %v1907, %v1924
        %v1956 = vmul.f32 %v1908, %v1934
        %v1957 = vmul.f32 %v1909, %v1944
        %v1958 = vmul.f32 %v1910, %v1954
        %v1960 = vperm.slane %v521, 0
        %v1962 = vmul.f32 %v1955, %v1960
        %v1963 = vmul.f32 %v1956, %v1960
        %v1964 = vmul.f32 %v1957, %v1960
        %v1965 = vmul.f32 %v1958, %v1960
        %v1967 = vperm.slane %v522, 0
        %v1969 = vadd.f32 %v1962, %v1967
        %v1970 = vadd.f32 %v1963, %v1967
        %v1971 = vadd.f32 %v1964, %v1967
        %v1972 = vadd.f32 %v1965, %v1967
        %v1973 = vpack.c.bf16 %v1970, %v1969
        %v1974 = vpack.c.bf16 %v1972, %v1971
        %v1975 = vld [vmem:[%s8] sm:$0xff]
        %v1976 = vld [vmem:[%s8 + $0x8] sm:$0xff]
        %v1977 = vld [vmem:[%s8 + $0x10] sm:$0xff]
        %v1978 = vld [vmem:[%s8 + $0x18] sm:$0xff]
        %v1979 = vld [vmem:[%s8 + $0x20] sm:$0xff]
        %v1980 = vld [vmem:[%s8 + $0x28] sm:$0xff]
        %v1981 = vld [vmem:[%s8 + $0x30] sm:$0xff]
        %v1982 = vld [vmem:[%s8 + $0x38] sm:$0xff]
        %v1983 = vld [vmem:[%s8 + $0x40] sm:$0xff]
        %v1984 = vld [vmem:[%s8 + $0x48] sm:$0xff]
        %v1985 = vld [vmem:[%s8 + $0x50] sm:$0xff]
        %v1986 = vld [vmem:[%s8 + $0x58] sm:$0xff]
        %v1987 = vld [vmem:[%s8 + $0x60] sm:$0xff]
        %v1988 = vld [vmem:[%s8 + $0x68] sm:$0xff]
        %v1989 = vld [vmem:[%s8 + $0x70] sm:$0xff]
        %v1990 = vld [vmem:[%s8 + $0x78] sm:$0xff]
        %v1991 = vld [vmem:[%s9] sm:$0x3]
        %v1993 = vperm.slane %v1991, 0
        %v1994 = vperm.slane %v1991, 1
        %v2013 = vunpack.c.l.b16 %v1975
        %v2014 = vunpack.c.h.b16 %v1975
        %v2015 = vunpack.c.l.b16 %v1976
        %v2016 = vunpack.c.h.b16 %v1976
        %v2017 = vunpack.c.l.b16 %v1977
        %v2018 = vunpack.c.h.b16 %v1977
        %v2019 = vunpack.c.l.b16 %v1978
        %v2020 = vunpack.c.h.b16 %v1978
        %v2021 = vunpack.c.l.b16 %v1979
        %v2022 = vunpack.c.h.b16 %v1979
        %v2023 = vunpack.c.l.b16 %v1980
        %v2024 = vunpack.c.h.b16 %v1980
        %v2025 = vunpack.c.l.b16 %v1981
        %v2026 = vunpack.c.h.b16 %v1981
        %v2027 = vunpack.c.l.b16 %v1982
        %v2028 = vunpack.c.h.b16 %v1982
        %v2029 = vunpack.c.l.b16 %v1983
        %v2030 = vunpack.c.h.b16 %v1983
        %v2031 = vunpack.c.l.b16 %v1984
        %v2032 = vunpack.c.h.b16 %v1984
        %v2033 = vunpack.c.l.b16 %v1985
        %v2034 = vunpack.c.h.b16 %v1985
        %v2035 = vunpack.c.l.b16 %v1986
        %v2036 = vunpack.c.h.b16 %v1986
        %v2037 = vunpack.c.l.b16 %v1987
        %v2038 = vunpack.c.h.b16 %v1987
        %v2039 = vunpack.c.l.b16 %v1988
        %v2040 = vunpack.c.h.b16 %v1988
        %v2041 = vunpack.c.l.b16 %v1989
        %v2042 = vunpack.c.h.b16 %v1989
        %v2043 = vunpack.c.l.b16 %v1990
        %v2044 = vunpack.c.h.b16 %v1990
        %v2045 = vpack.c.b16 %v2015, %v2013
        %v2046 = vpack.c.b16 %v2016, %v2014
        %v2047 = vpack.c.b16 %v2019, %v2017
        %v2048 = vpack.c.b16 %v2020, %v2018
        %v2049 = vpack.c.b16 %v2023, %v2021
        %v2050 = vpack.c.b16 %v2024, %v2022
        %v2051 = vpack.c.b16 %v2027, %v2025
        %v2052 = vpack.c.b16 %v2028, %v2026
        %v2053 = vpack.c.b16 %v2031, %v2029
        %v2054 = vpack.c.b16 %v2032, %v2030
        %v2055 = vpack.c.b16 %v2035, %v2033
        %v2056 = vpack.c.b16 %v2036, %v2034
        %v2057 = vpack.c.b16 %v2039, %v2037
        %v2058 = vpack.c.b16 %v2040, %v2038
        %v2059 = vpack.c.b16 %v2043, %v2041
        %v2060 = vpack.c.b16 %v2044, %v2042
        %2077 = vmatpush.bf16.msra.mxu0 %v2059
        %2078 = vmatpush.bf16.msra.mxu0 %v2057
        %2079 = vmatpush.bf16.msra.mxu0 %v2055
        %2080 = vmatpush.bf16.msra.mxu0 %v2053
        %2081 = vmatpush.bf16.msra.mxu0 %v2051
        %2082 = vmatpush.bf16.msra.mxu0 %v2049
        %2083 = vmatpush.bf16.msra.mxu0 %v2047
        %2084 = vmatpush.bf16.msra.mxu0 %v2045
        %2085 = vmatmul.bf16.gmra.mxu0 %v1973
        %v2086 = vpop.f32.mrf.mxu0
        %v2087 = vadd.f32 %v1993, %v2086
        %v2088 = vpop.f32.mrf.mxu0
        %v2089 = vadd.f32 %v1993, %v2088
        %2090 = vmatmul.bf16.gmra.mxu0 %v1974
        %v2091 = vpop.f32.mrf.mxu0
        %v2092 = vadd.f32 %v1993, %v2091
        %v2093 = vpop.f32.mrf.mxu0
        %v2094 = vadd.f32 %v1993, %v2093
        %2095 = vdwg.mxu0
        %2096 = vmatpush.bf16.msra.mxu0 %v2060
        %2097 = vmatpush.bf16.msra.mxu0 %v2058
        %2098 = vmatpush.bf16.msra.mxu0 %v2056
        %2099 = vmatpush.bf16.msra.mxu0 %v2054
        %2100 = vmatpush.bf16.msra.mxu0 %v2052
        %2101 = vmatpush.bf16.msra.mxu0 %v2050
        %2102 = vmatpush.bf16.msra.mxu0 %v2048
        %2103 = vmatpush.bf16.msra.mxu0 %v2046
        %2104 = vmatmul.bf16.gmra.mxu0 %v1973
        %v2105 = vpop.f32.mrf.mxu0
        %v2106 = vadd.f32 %v1994, %v2105
        %v2107 = vpop.f32.mrf.mxu0
        %v2108 = vadd.f32 %v1994, %v2107
        %2109 = vmatmul.bf16.gmra.mxu0 %v1974
        %v2110 = vpop.f32.mrf.mxu0
        %v2111 = vadd.f32 %v1994, %v2110
        %v2112 = vpop.f32.mrf.mxu0
        %v2113 = vadd.f32 %v1994, %v2112
        %2114 = vdwg.mxu0
        %v2115 = vpack.c.bf16 %v2106, %v2087
        %v2116 = vpack.c.bf16 %v2108, %v2089
        %v2117 = vpack.c.bf16 %v2111, %v2092
        %v2118 = vpack.c.bf16 %v2113, %v2094
        %v2119 = vunpack.c.l.bf16 %v2115
        %v2120 = vunpack.c.h.bf16 %v2115
        %v2121 = vunpack.c.l.bf16 %v2116
        %v2122 = vunpack.c.h.bf16 %v2116
        %v2123 = vunpack.c.l.bf16 %v2117
        %v2124 = vunpack.c.h.bf16 %v2117
        %v2125 = vunpack.c.l.bf16 %v2118
        %v2126 = vunpack.c.h.bf16 %v2118
        %v2127 = vmax.f32 %v2119, 0.0
        %v2128 = vmax.f32 %v2120, 0.0
        %v2129 = vmax.f32 %v2121, 0.0
        %v2130 = vmax.f32 %v2122, 0.0
        %v2131 = vmax.f32 %v2123, 0.0
        %v2132 = vmax.f32 %v2124, 0.0
        %v2133 = vmax.f32 %v2125, 0.0
        %v2134 = vmax.f32 %v2126, 0.0
        %v2135 = vpack.c.bf16 %v2129, %v2127
        %v2136 = vpack.c.bf16 %v2130, %v2128
        %v2137 = vpack.c.bf16 %v2133, %v2131
        %v2138 = vpack.c.bf16 %v2134, %v2132
        %v2139 = vld [vmem:[%s10] sm:$0xf]
        %v2140 = vld [vmem:[%s10 + $0x4] sm:$0xf]
        %v2141 = vld [vmem:[%s10 + $0x8] sm:$0xf]
        %v2142 = vld [vmem:[%s10 + $0xc] sm:$0xf]
        %v2143 = vld [vmem:[%s10 + $0x10] sm:$0xf]
        %v2144 = vld [vmem:[%s10 + $0x14] sm:$0xf]
        %v2145 = vld [vmem:[%s10 + $0x18] sm:$0xf]
        %v2146 = vld [vmem:[%s10 + $0x1c] sm:$0xf]
        %v2147 = vld [vmem:[%s10 + $0x20] sm:$0xf]
        %v2148 = vld [vmem:[%s10 + $0x24] sm:$0xf]
        %v2149 = vld [vmem:[%s10 + $0x28] sm:$0xf]
        %v2150 = vld [vmem:[%s10 + $0x2c] sm:$0xf]
        %v2151 = vld [vmem:[%s10 + $0x30] sm:$0xf]
        %v2152 = vld [vmem:[%s10 + $0x34] sm:$0xf]
        %v2153 = vld [vmem:[%s10 + $0x38] sm:$0xf]
        %v2154 = vld [vmem:[%s10 + $0x3c] sm:$0xf]
        %v2155 = vld [vmem:[%s10 + $0x40] sm:$0xf]
        %v2156 = vld [vmem:[%s10 + $0x44] sm:$0xf]
        %v2157 = vld [vmem:[%s10 + $0x48] sm:$0xf]
        %v2158 = vld [vmem:[%s10 + $0x4c] sm:$0xf]
        %v2159 = vld [vmem:[%s10 + $0x50] sm:$0xf]
        %v2160 = vld [vmem:[%s10 + $0x54] sm:$0xf]
        %v2161 = vld [vmem:[%s10 + $0x58] sm:$0xf]
        %v2162 = vld [vmem:[%s10 + $0x5c] sm:$0xf]
        %v2163 = vld [vmem:[%s10 + $0x60] sm:$0xf]
        %v2164 = vld [vmem:[%s10 + $0x64] sm:$0xf]
        %v2165 = vld [vmem:[%s10 + $0x68] sm:$0xf]
        %v2166 = vld [vmem:[%s10 + $0x6c] sm:$0xf]
        %v2167 = vld [vmem:[%s10 + $0x70] sm:$0xf]
        %v2168 = vld [vmem:[%s10 + $0x74] sm:$0xf]
        %v2169 = vld [vmem:[%s10 + $0x78] sm:$0xf]
        %v2170 = vld [vmem:[%s10 + $0x7c] sm:$0xf]
        %v2171 = vld [vmem:[%s11] sm:$0x1]
        %v2173 = vperm.slane %v2171, 0
        %v2207 = vunpack.c.l.b16 %v2139
        %v2208 = vunpack.c.l.b16 %v2140
        %v2209 = vunpack.c.l.b16 %v2141
        %v2210 = vunpack.c.l.b16 %v2142
        %v2211 = vunpack.c.l.b16 %v2143
        %v2212 = vunpack.c.l.b16 %v2144
        %v2213 = vunpack.c.l.b16 %v2145
        %v2214 = vunpack.c.l.b16 %v2146
        %v2215 = vunpack.c.l.b16 %v2147
        %v2216 = vunpack.c.l.b16 %v2148
        %v2217 = vunpack.c.l.b16 %v2149
        %v2218 = vunpack.c.l.b16 %v2150
        %v2219 = vunpack.c.l.b16 %v2151
        %v2220 = vunpack.c.l.b16 %v2152
        %v2221 = vunpack.c.l.b16 %v2153
        %v2222 = vunpack.c.l.b16 %v2154
        %v2223 = vunpack.c.l.b16 %v2155
        %v2224 = vunpack.c.l.b16 %v2156
        %v2225 = vunpack.c.l.b16 %v2157
        %v2226 = vunpack.c.l.b16 %v2158
        %v2227 = vunpack.c.l.b16 %v2159
        %v2228 = vunpack.c.l.b16 %v2160
        %v2229 = vunpack.c.l.b16 %v2161
        %v2230 = vunpack.c.l.b16 %v2162
        %v2231 = vunpack.c.l.b16 %v2163
        %v2232 = vunpack.c.l.b16 %v2164
        %v2233 = vunpack.c.l.b16 %v2165
        %v2234 = vunpack.c.l.b16 %v2166
        %v2235 = vunpack.c.l.b16 %v2167
        %v2236 = vunpack.c.l.b16 %v2168
        %v2237 = vunpack.c.l.b16 %v2169
        %v2238 = vunpack.c.l.b16 %v2170
        %v2239 = vpack.c.b16 %v2208, %v2207
        %v2240 = vpack.c.b16 %v2210, %v2209
        %v2241 = vpack.c.b16 %v2212, %v2211
        %v2242 = vpack.c.b16 %v2214, %v2213
        %v2243 = vpack.c.b16 %v2216, %v2215
        %v2244 = vpack.c.b16 %v2218, %v2217
        %v2245 = vpack.c.b16 %v2220, %v2219
        %v2246 = vpack.c.b16 %v2222, %v2221
        %v2247 = vpack.c.b16 %v2224, %v2223
        %v2248 = vpack.c.b16 %v2226, %v2225
        %v2249 = vpack.c.b16 %v2228, %v2227
        %v2250 = vpack.c.b16 %v2230, %v2229
        %v2251 = vpack.c.b16 %v2232, %v2231
        %v2252 = vpack.c.b16 %v2234, %v2233
        %v2253 = vpack.c.b16 %v2236, %v2235
        %v2254 = vpack.c.b16 %v2238, %v2237
        %2271 = vmatpush.bf16.msra.mxu0 %v2246
        %2272 = vmatpush.bf16.msra.mxu0 %v2245
        %2273 = vmatpush.bf16.msra.mxu0 %v2244
        %2274 = vmatpush.bf16.msra.mxu0 %v2243
        %2275 = vmatpush.bf16.msra.mxu0 %v2242
        %2276 = vmatpush.bf16.msra.mxu0 %v2241
        %2277 = vmatpush.bf16.msra.mxu0 %v2240
        %2278 = vmatpush.bf16.msra.mxu0 %v2239
        %2279 = vmatmul.bf16.gmra.mxu0 %v2135
        %v2280 = vpop.f32.mrf.mxu0
        %v2281 = vadd.f32 %v2173, %v2280
        %v2282 = vpop.f32.mrf.mxu0
        %v2283 = vadd.f32 %v2173, %v2282
        %2284 = vmatmul.bf16.gmra.mxu0 %v2137
        %v2285 = vpop.f32.mrf.mxu0
        %v2286 = vadd.f32 %v2173, %v2285
        %v2287 = vpop.f32.mrf.mxu0
        %v2288 = vadd.f32 %v2173, %v2287
        %2289 = vdwg.mxu0
        %2290 = vmatpush.bf16.msra.mxu0 %v2254
        %2291 = vmatpush.bf16.msra.mxu0 %v2253
        %2292 = vmatpush.bf16.msra.mxu0 %v2252
        %2293 = vmatpush.bf16.msra.mxu0 %v2251
        %2294 = vmatpush.bf16.msra.mxu0 %v2250
        %2295 = vmatpush.bf16.msra.mxu0 %v2249
        %2296 = vmatpush.bf16.msra.mxu0 %v2248
        %2297 = vmatpush.bf16.msra.mxu0 %v2247
        %2298 = vmatmul.bf16.gmra.mxu0 %v2136
        %v2299 = vpop.f32.mrf.mxu0
        %v2300 = vadd.f32 %v2281, %v2299
        %v2301 = vpop.f32.mrf.mxu0
        %v2302 = vadd.f32 %v2283, %v2301
        %2303 = vmatmul.bf16.gmra.mxu0 %v2138
        %v2304 = vpop.f32.mrf.mxu0
        %v2305 = vadd.f32 %v2286, %v2304
        %v2306 = vpop.f32.mrf.mxu0
        %v2307 = vadd.f32 %v2288, %v2306
        %2308 = vdwg.mxu0
        %v2309 = vadd.f32 %v1969, %v2300
        %v2310 = vadd.f32 %v1970, %v2302
        %v2311 = vadd.f32 %v1971, %v2305
        %v2312 = vadd.f32 %v1972, %v2307
        %2313 = vadd.xlane.f32.xlu0 %v2309
        %v2314 = vpop.xlane.xlu0 %2313
        %2315 = vadd.xlane.f32.xlu0 %v2310
        %v2316 = vpop.xlane.xlu0 %2315
        %2317 = vadd.xlane.f32.xlu0 %v2311
        %v2318 = vpop.xlane.xlu0 %2317
        %2319 = vadd.xlane.f32.xlu0 %v2312
        %v2320 = vpop.xlane.xlu0 %2319
        %v2321 = vmul.f32 %v2314, %v1874
        %v2322 = vmul.f32 %v2316, %v1874
        %v2323 = vmul.f32 %v2318, %v1874
        %v2324 = vmul.f32 %v2320, %v1874
        %v2325 = vmul.f32 %v2309, %v2309
        %v2326 = vmul.f32 %v2310, %v2310
        %v2327 = vmul.f32 %v2311, %v2311
        %v2328 = vmul.f32 %v2312, %v2312
        %2329 = vadd.xlane.f32.xlu0 %v2325
        %v2330 = vpop.xlane.xlu0 %2329
        %2331 = vadd.xlane.f32.xlu0 %v2326
        %v2332 = vpop.xlane.xlu0 %2331
        %2333 = vadd.xlane.f32.xlu0 %v2327
        %v2334 = vpop.xlane.xlu0 %2333
        %2335 = vadd.xlane.f32.xlu0 %v2328
        %v2336 = vpop.xlane.xlu0 %2335
        %v2337 = vmul.f32 %v2330, %v1874
        %v2338 = vmul.f32 %v2332, %v1874
        %v2339 = vmul.f32 %v2334, %v1874
        %v2340 = vmul.f32 %v2336, %v1874
        %v2341 = vmul.f32 %v2321, %v2321
        %v2342 = vmul.f32 %v2322, %v2322
        %v2343 = vmul.f32 %v2323, %v2323
        %v2344 = vmul.f32 %v2324, %v2324
        %v2345 = vsub.f32 %v2337, %v2341
        %v2346 = vsub.f32 %v2338, %v2342
        %v2347 = vsub.f32 %v2339, %v2343
        %v2348 = vsub.f32 %v2340, %v2344
        %v2349 = vmax.f32 %v2345, 0.0
        %v2350 = vmax.f32 %v2346, 0.0
        %v2351 = vmax.f32 %v2347, 0.0
        %v2352 = vmax.f32 %v2348, 0.0
        %v2353 = vsub.f32 %v2309, %v2321
        %v2354 = vsub.f32 %v2310, %v2322
        %v2355 = vsub.f32 %v2311, %v2323
        %v2356 = vsub.f32 %v2312, %v2324
        %v2357 = vadd.f32 %v2349, 1e-05
        %v2358 = vadd.f32 %v2350, 1e-05
        %v2359 = vadd.f32 %v2351, 1e-05
        %v2360 = vadd.f32 %v2352, 1e-05
        %v2361 = vrsqrt.pop %v2357
        %v2362 = vmul.f32 %v2361, %v2357
        %v2363 = vmul.f32 %v2362, %v2361
        %v2364 = vmul.f32 0.5, %v2363
        %v2365 = vsub.f32 1.5, %v2364
        %v2366 = vmul.f32 %v2361, %v2365
        %vm2367 = vweird.f32 %v2357
        %vm2368 = vweird.f32 %v2361
        %vm2369 = vmor %vm2367, %vm2368
        %v2370 = vsel %vm2369, %v2361, %v2366
        %v2371 = vrsqrt.pop %v2358
        %v2372 = vmul.f32 %v2371, %v2358
        %v2373 = vmul.f32 %v2372, %v2371
        %v2374 = vmul.f32 0.5, %v2373
        %v2375 = vsub.f32 1.5, %v2374
        %v2376 = vmul.f32 %v2371, %v2375
        %vm2377 = vweird.f32 %v2358
        %vm2378 = vweird.f32 %v2371
        %vm2379 = vmor %vm2377, %vm2378
        %v2380 = vsel %vm2379, %v2371, %v2376
        %v2381 = vrsqrt.pop %v2359
        %v2382 = vmul.f32 %v2381, %v2359
        %v2383 = vmul.f32 %v2382, %v2381
        %v2384 = vmul.f32 0.5, %v2383
        %v2385 = vsub.f32 1.5, %v2384
        %v2386 = vmul.f32 %v2381, %v2385
        %vm2387 = vweird.f32 %v2359
        %vm2388 = vweird.f32 %v2381
        %vm2389 = vmor %vm2387, %vm2388
        %v2390 = vsel %vm2389, %v2381, %v2386
        %v2391 = vrsqrt.pop %v2360
        %v2392 = vmul.f32 %v2391, %v2360
        %v2393 = vmul.f32 %v2392, %v2391
        %v2394 = vmul.f32 0.5, %v2393
        %v2395 = vsub.f32 1.5, %v2394
        %v2396 = vmul.f32 %v2391, %v2395
        %vm2397 = vweird.f32 %v2360
        %vm2398 = vweird.f32 %v2391
        %vm2399 = vmor %vm2397, %vm2398
        %v2400 = vsel %vm2399, %v2391, %v2396
        %v2401 = vmul.f32 %v2353, %v2370
        %v2402 = vmul.f32 %v2354, %v2380
        %v2403 = vmul.f32 %v2355, %v2390
        %v2404 = vmul.f32 %v2356, %v2400
        %v2406 = vperm.slane %v523, 0
        %v2408 = vmul.f32 %v2401, %v2406
        %v2409 = vmul.f32 %v2402, %v2406
        %v2410 = vmul.f32 %v2403, %v2406
        %v2411 = vmul.f32 %v2404, %v2406
        %v2413 = vperm.slane %v524, 0
        %v2415 = vadd.f32 %v2408, %v2413
        %v2416 = vadd.f32 %v2409, %v2413
        %v2417 = vadd.f32 %v2410, %v2413
        %v2418 = vadd.f32 %v2411, %v2413
        %v2419 = vld [vmem:[%s513] sm:$0xff]
        %v2420 = vld [vmem:[%s513 + $0x8] sm:$0xff]
        %v2421 = vld [vmem:[%s513 + $0x10] sm:$0xff]
        %v2422 = vld [vmem:[%s513 + $0x18] sm:$0xff]
        %2424 = vset.pattern.permute.xlu0 0
        %2425 = vperm.xlu0 %2424, %v2419
        %v2426 = vpop.permute.xlu0 %2425
        %2429 = vset.pattern.permute.xlu0 0
        %2430 = vperm.xlu0 %2429, %v2420
        %v2431 = vpop.permute.xlu0 %2430
        %2434 = vset.pattern.permute.xlu0 0
        %2435 = vperm.xlu0 %2434, %v2421
        %v2436 = vpop.permute.xlu0 %2435
        %2439 = vset.pattern.permute.xlu0 0
        %2440 = vperm.xlu0 %2439, %v2422
        %v2441 = vpop.permute.xlu0 %2440
        %v2443 = vmul.f32 %v2415, %v2426
        %v2444 = vmul.f32 %v2416, %v2431
        %v2445 = vmul.f32 %v2417, %v2436
        %v2446 = vmul.f32 %v2418, %v2441
        %2447 = vst [vmem:[%s506] sm:$0xff] %v2443
        %2448 = vst [vmem:[%s506 + $0x8] sm:$0xff] %v2444
        %2449 = vst [vmem:[%s506 + $0x10] sm:$0xff] %v2445
        %2450 = vst [vmem:[%s506 + $0x18] sm:$0xff] %v2446
        %s2451 = sand.u32 %s343, 1
        %s2452 = scalar_lea.sflag [#allocation4], %s2451
        %s2453 = sand.u32 %s343, 1
        %s2454 = smul.addr %s2453, 32
        %s2455 = scalar_lea.vmem [#allocation5], %s2454
        // Predicated region
        $region81: #{tpu_custom_call.1} parent=75 // pred_check
          %p2456 = pneg %p353
        $region82: #{tpu_custom_call.1} parent=75 // pred_check_branch
          %2458 = sbr.rel (%p2456) target = $region84
        $region83: #{tpu_custom_call.1} parent=75 // pred_region
          %s2459 = smul.u32 2, %s31
          %2461 = vsyncadd %s2452, 0
          %s2462 = smul.addr %s2459, 2
          %s2463 = smul.addr %s2462, 8
          %s2464 = scalar_lea.hbm %s14, %s2463
          %s2465 = sshll.u32 %s2455, 4
          %s2466 = int_to_ptr.vmem [resolvable:$true] %s2465
          %s2467 = sshll.u32 %s2464, 4
          %s2468 = int_to_ptr.hbm [resolvable:$true] %s2467
          %2473 = dma.vmem_to_hbm [thread:$0]  %s2466, 512, %s2468, %s2452, 128, 128, 8
        $region84: #{tpu_custom_call.1} parent=75 // pred_fallthru
          _
      $region76: #{tpu_custom_call.1} parent=5 // pred_fallthru
        _
      %p2474 = scmp.le.s32.totalorder 2, %s26
      // Predicated region
      $region85: #{tpu_custom_call.1} parent=5 // pred_check
        %p2475 = pneg %p2474
      $region86: #{tpu_custom_call.1} parent=5 // pred_check_branch
        %2477 = sbr.rel (%p2475) target = $region88
      $region87: #{tpu_custom_call.1} parent=5 // pred_region
        %s2478 = ssub.s32 %s26, 2
        // Predicated region
        $region89: #{tpu_custom_call.1} parent=87 // pred_check
          %p2479 = pneg %p359
        $region90: #{tpu_custom_call.1} parent=87 // pred_check_branch
          %2481 = sbr.rel (%p2479) target = $region92
        $region91: #{tpu_custom_call.1} parent=87 // pred_region
          %s2482 = sand.u32 %s344, 1
          %s2483 = scalar_lea.sflag [#allocation4], %s2482
          %s2484 = sand.u32 %s344, 1
          %s2485 = smul.addr %s2484, 32
          %s2486 = scalar_lea.vmem [#allocation5], %s2485
          %2488 = dma.done %s2483, 512
        $region92: #{tpu_custom_call.1} parent=87 // pred_fallthru
          _
      $region88: #{tpu_custom_call.1} parent=5 // pred_fallthru
        _
    $region6: #{tpu_custom_call.1} parent=1 // loop_footer
      %s30 = sadd.s32 1, %s26
    $region7: #{tpu_custom_call.1} parent=1 // loop_footer_branch
      %25 = sbr.rel target = $region3
    $region8: #{tpu_custom_call.1} parent=1 // loop_exit
      _
    %2489 = vsyncpa [#allocation3], 1
    %s2490 = scalar_lea.sflag [#allocation3], 1
    %2491 = vsyncpa %s2490, 1
    %2492 = vsyncpa [#allocation4], 1
    %s2493 = scalar_lea.sflag [#allocation4], 1
    %2494 = vsyncpa %s2493, 1

</llo_original>
